<compile_context>
chip_gen: v6e
topology: v6e:2x2x1
jax: 0.10.0
libtpu: 0.0.40
codegen_flags: <defaults>
</compile_context>

<pallas_src>
import functools

import jax
import jax.numpy as jnp
from jax.experimental import pallas as pl
from jax.experimental.pallas import tpu as pltpu


def _round_up(x, m):
    return (x + m - 1) // m * m


_VMEM_LIMIT = 32 * 1024 * 1024  # safe on v5e / v6e / v7x


# ----------------------------------------------------------------------------
# Kernel 1: M-tiled matmul + bias (+ residual) (+ ReLU)
# Used for 1x1 convs, the category head and the (small) stride-2 im2col convs.
# ----------------------------------------------------------------------------
def _matmul_kernel(a_ref, b_ref, bias_ref, *rest, relu, has_res):
    if has_res:
        res_ref, o_ref = rest
    else:
        res_ref = None
        (o_ref,) = rest
    acc = jnp.dot(a_ref[...], b_ref[...], preferred_element_type=jnp.float32)
    acc = acc + bias_ref[...]
    if has_res:
        acc = acc + res_ref[...]
    if relu:
        acc = jnp.maximum(acc, 0.0)
    o_ref[...] = acc.astype(o_ref.dtype)


def pallas_matmul_bias(a, b, bias, relu=False, residual=None, tm=256):
    """a: (M, K), b: (K, N), bias: (N,), optional residual: (M, N) -> (M, N)."""
    M, K = a.shape
    K2, N = b.shape
    assert K == K2
    has_res = residual is not None

    a = a.astype(jnp.float32)
    b = b.astype(jnp.float32)
    bias2 = bias.reshape(1, N).astype(jnp.float32)

    # M tile (multiple of 8); K and N stay full-array blocks -> no zero padding
    # of K / N in HBM (small-Cin layers keep their true K).
    tm = min(tm, _round_up(M, 8))
    Mp = _round_up(M, tm)
    if Mp != M:
        a = jnp.pad(a, ((0, Mp - M), (0, 0)))
        if has_res:
            residual = jnp.pad(residual.astype(jnp.float32), ((0, Mp - M), (0, 0)))
    elif has_res:
        residual = residual.astype(jnp.float32)

    in_specs = [
        pl.BlockSpec((tm, K), lambda m: (m, 0)),
        pl.BlockSpec((K, N), lambda m: (0, 0)),
        pl.BlockSpec((1, N), lambda m: (0, 0)),
    ]
    args = [a, b, bias2]
    if has_res:
        in_specs.append(pl.BlockSpec((tm, N), lambda m: (m, 0)))
        args.append(residual)

    flops = 2 * Mp * K * N
    bytes_acc = 4 * (Mp * K + K * N + Mp * N * (2 if has_res else 1))

    out = pl.pallas_call(
        functools.partial(_matmul_kernel, relu=relu, has_res=has_res),
        out_shape=jax.ShapeDtypeStruct((Mp, N), jnp.float32),
        grid=(Mp // tm,),
        in_specs=in_specs,
        out_specs=pl.BlockSpec((tm, N), lambda m: (m, 0)),
        compiler_params=pltpu.CompilerParams(
            dimension_semantics=("parallel",),
            vmem_limit_bytes=_VMEM_LIMIT,
        ),
        cost_estimate=pl.CostEstimate(
            flops=flops, transcendentals=0, bytes_accessed=bytes_acc),
    )(*args)
    return out[:M] if Mp != M else out


# ----------------------------------------------------------------------------
# Kernel 2: direct stride-1 conv (im2col fused into the kernel)
# Grid = (batch, out_row, kh); kh is the reduction axis, kw taps are in-kernel
# static slices; bias / residual / ReLU applied on the last kh step.
# ----------------------------------------------------------------------------
def _conv_s1_kernel(x_ref, w_ref, bias_ref, *rest, kw, wout, relu, has_res):
    if has_res:
        res_ref, o_ref, acc_ref = rest
    else:
        res_ref = None
        o_ref, acc_ref = rest

    i = pl.program_id(2)

    @pl.when(i == 0)
    def _init():
        acc_ref[...] = jnp.zeros_like(acc_ref)

    x = x_ref[0, 0]            # (Wp, Cin) -- one padded input row
    acc = acc_ref[...]
    for j in range(kw):        # fused kw taps: static sublane slices
        a = x[j:j + wout, :]                        # (Wout, Cin)
        wj = w_ref[0, j]                            # (Cin, Cout)
        acc = acc + jnp.dot(a, wj, preferred_element_type=jnp.float32)
    acc_ref[...] = acc

    @pl.when(i == pl.num_programs(2) - 1)
    def _finalize():
        out = acc_ref[...] + bias_ref[...]
        if has_res:
            out = out + res_ref[0, 0]
        if relu:
            out = jnp.maximum(out, 0.0)
        o_ref[0, 0] = out.astype(o_ref.dtype)


def conv_s1_direct(x, w, b, padding=1, relu=False, residual=None):
    """Stride-1 conv. x: (B, H, W, Cin) NHWC; w: (Cout, Cin, kh, kw); b: (Cout,)."""
    B, H, W, Cin = x.shape
    Cout, _, kh, kw = w.shape
    Hp, Wp = H + 2 * padding, W + 2 * padding
    Hout, Wout = Hp - kh + 1, Wp - kw + 1
    has_res = residual is not None

    xp = jnp.pad(x.astype(jnp.float32),
                 ((0, 0), (padding, padding), (padding, padding), (0, 0)))
    wt = jnp.transpose(w, (2, 3, 1, 0)).astype(jnp.float32)   # (kh, kw, Cin, Cout)
    bias = b.reshape(1, Cout).astype(jnp.float32)

    in_specs = [
        pl.BlockSpec((1, 1, Wp, Cin), lambda bi, y, i: (bi, y + i, 0, 0)),
        pl.BlockSpec((1, kw, Cin, Cout), lambda bi, y, i: (i, 0, 0, 0)),
        pl.BlockSpec((1, Cout), lambda bi, y, i: (0, 0)),
    ]
    args = [xp, wt, bias]
    if has_res:
        in_specs.append(
            pl.BlockSpec((1, 1, Wout, Cout), lambda bi, y, i: (bi, y, 0, 0)))
        args.append(residual.astype(jnp.float32))

    flops = 2 * B * Hout * Wout * kh * kw * Cin * Cout
    bytes_acc = 4 * (B * Hp * Wp * Cin * kh + kh * kw * Cin * Cout
                     + B * Hout * Wout * Cout * (2 if has_res else 1))

    out = pl.pallas_call(
        functools.partial(_conv_s1_kernel, kw=kw, wout=Wout,
                          relu=relu, has_res=has_res),
        out_shape=jax.ShapeDtypeStruct((B, Hout, Wout, Cout), jnp.float32),
        grid=(B, Hout, kh),
        in_specs=in_specs,
        out_specs=pl.BlockSpec((1, 1, Wout, Cout), lambda bi, y, i: (bi, y, 0, 0)),
        scratch_shapes=[pltpu.VMEM((Wout, Cout), jnp.float32)],
        compiler_params=pltpu.CompilerParams(
            dimension_semantics=("parallel", "parallel", "arbitrary"),
            vmem_limit_bytes=_VMEM_LIMIT,
        ),
        cost_estimate=pl.CostEstimate(
            flops=flops, transcendentals=0, bytes_accessed=bytes_acc),
    )(*args)
    return out


# ----------------------------------------------------------------------------
# Conv dispatch: 1x1 -> matmul, stride-1 KxK -> direct kernel,
# stride>1 -> (small) im2col + tiled matmul.
# ----------------------------------------------------------------------------
def conv1x1(x, w, b, relu=False, residual=None):
    B, H, W, Cin = x.shape
    Cout = w.shape[0]
    wmat = jnp.transpose(w, (2, 3, 1, 0)).reshape(Cin, Cout)
    res2 = residual.reshape(B * H * W, Cout) if residual is not None else None
    out = pallas_matmul_bias(x.reshape(B * H * W, Cin), wmat, b,
                             relu=relu, residual=res2)
    return out.reshape(B, H, W, Cout)


def conv_im2col(x, w, b, stride, padding, relu=False):
    # TODO(synk): stride>1 layers keep a host-side im2col (their output spatial
    # size is 1/4, so the patch matrix stays small); the stride-1 hot path uses
    # the fused direct-conv kernel above.
    N, H, W, Cin = x.shape
    Cout, _, kh, kw = w.shape
    xp = jnp.pad(x, ((0, 0), (padding, padding), (padding, padding), (0, 0)))
    Hout = (H + 2 * padding - kh) // stride + 1
    Wout = (W + 2 * padding - kw) // stride + 1
    cols = []
    for i in range(kh):
        for j in range(kw):
            cols.append(
                xp[:, i:i + Hout * stride:stride, j:j + Wout * stride:stride, :])
    patches = jnp.concatenate(cols, axis=-1)          # (N, Hout, Wout, kh*kw*Cin)
    a = patches.reshape(N * Hout * Wout, kh * kw * Cin)
    wmat = jnp.transpose(w, (2, 3, 1, 0)).reshape(kh * kw * Cin, Cout)
    out = pallas_matmul_bias(a, wmat, b, relu=relu)
    return out.reshape(N, Hout, Wout, Cout)


def conv2d(x, w, b, stride=1, padding=1, relu=False, residual=None):
    kh = w.shape[2]
    if kh == 1 and stride == 1 and padding == 0:
        return conv1x1(x, w, b, relu=relu, residual=residual)
    if stride == 1:
        return conv_s1_direct(x, w, b, padding=padding, relu=relu,
                              residual=residual)
    assert residual is None
    return conv_im2col(x, w, b, stride=stride, padding=padding, relu=relu)


def nearest_up2(x):
    return jnp.repeat(jnp.repeat(x, 2, axis=1), 2, axis=2)


# ----------------------------------------------------------------------------
# Deterministic parameter construction
# ----------------------------------------------------------------------------
class ParamGen:
    def __init__(self, key):
        self.key = key

    def take(self, shape, scale):
        self.key, sub = jax.random.split(self.key)
        return jax.random.normal(sub, shape, jnp.float32) * scale


def conv_params(gen, cin, cout, k):
    fan_in = cin * k * k
    w = gen.take((cout, cin, k, k), (2.0 / fan_in) ** 0.5)
    b = jnp.zeros((cout,), jnp.float32)
    return w, b


def init_params(key, num_class=50):
    gen = ParamGen(key)
    p = {}
    # RGBDInput: conv over concat(rgb, depth) -> fused feature
    p["rgbd1"] = conv_params(gen, 4, 32, 3)
    p["rgbd2"] = conv_params(gen, 32, 32, 3)
    # backbone (mini resnet18-style: stem + residual stage + downsample stages)
    p["stem"] = conv_params(gen, 3, 16, 3)
    p["c2a"] = conv_params(gen, 16, 16, 3)
    p["c2b"] = conv_params(gen, 16, 16, 3)
    p["c3"] = conv_params(gen, 16, 32, 3)
    p["c4"] = conv_params(gen, 32, 64, 3)
    # FPN: 1x1 laterals + 3x3 smoothing, all at 32 channels
    p["lat2"] = conv_params(gen, 16, 32, 1)
    p["lat3"] = conv_params(gen, 32, 32, 1)
    p["lat4"] = conv_params(gen, 64, 32, 1)
    p["smooth2"] = conv_params(gen, 32, 32, 3)
    # Body heads: instance mask, point-cloud, category
    p["ins1"] = conv_params(gen, 64, 64, 3)
    p["ins2"] = conv_params(gen, 64, 16, 3)
    p["pcd1"] = conv_params(gen, 64, 3, 3)
    p["cate_w"] = gen.take((64, num_class), (1.0 / 64) ** 0.5)
    p["cate_b"] = jnp.zeros((num_class,), jnp.float32)
    return p


# ----------------------------------------------------------------------------
# FAMENet forward
# ----------------------------------------------------------------------------
def famenet_forward(params, img, depth):
    """img: (B, 3, H, W) NCHW; depth: (B, H, W). Returns scalar loss."""
    x = jnp.transpose(img, (0, 2, 3, 1))          # NHWC
    d = depth[..., None]                          # depth.unsqueeze(1) -> channel
    rgbd = jnp.concatenate([x, d], axis=-1)       # (B, H, W, 4)

    # RGBDInput
    rgbd_feat = conv2d(rgbd, *params["rgbd1"], stride=2, padding=1, relu=True)
    rgbd_feat = conv2d(rgbd_feat, *params["rgbd2"], stride=1, padding=1, relu=True)

    # backbone (resnet18-ish)
    c2 = conv2d(x, *params["stem"], stride=2, padding=1, relu=True)     # H/2, 16
    res = conv2d(c2, *params["c2a"], stride=1, padding=1, relu=True)
    # residual add + ReLU fused into the c2b conv epilogue: relu(c2b(res) + c2)
    c2 = conv2d(res, *params["c2b"], stride=1, padding=1, relu=True, residual=c2)
    c3 = conv2d(c2, *params["c3"], stride=2, padding=1, relu=True)      # H/4, 32
    c4 = conv2d(c3, *params["c4"], stride=2, padding=1, relu=True)      # H/8, 64

    # FPN top-down pathway (adds fused into the lateral 1x1 matmul epilogues)
    p4 = conv2d(c4, *params["lat4"], stride=1, padding=0, relu=False)
    p3 = conv2d(c3, *params["lat3"], stride=1, padding=0, relu=False,
                residual=nearest_up2(p4))
    p2 = conv2d(c2, *params["lat2"], stride=1, padding=0, relu=False,
                residual=nearest_up2(p3))
    p2 = conv2d(p2, *params["smooth2"], stride=1, padding=1, relu=True)

    # Body: fuse FPN feature with RGBD feature, predict ins / cate / pcd
    feat = jnp.concatenate([p2, rgbd_feat], axis=-1)                    # (B, H/2, W/2, 64)
    h = conv2d(feat, *params["ins1"], stride=1, padding=1, relu=True)
    # ins (16ch) + pcd (3ch) heads fused into one 19-channel conv
    w_head = jnp.concatenate([params["ins2"][0], params["pcd1"][0]], axis=0)
    b_head = jnp.concatenate([params["ins2"][1], params["pcd1"][1]], axis=0)
    head = conv2d(h, w_head, b_head, stride=1, padding=1, relu=False)
    ins_pred = head[..., :16]
    pcd_pred = head[..., 16:]
    pooled = jnp.mean(h, axis=(1, 2))                                   # (B, 64)
    cate_pred = pallas_matmul_bias(pooled, params["cate_w"], params["cate_b"])

    # TODO(synk): Body.loss (and the exact resnet18/FPN/Body/RGBDInput bodies)
    # are not included in the provided snippet; loss here is a synthetic L2
    # surrogate over the three prediction heads.
    loss = (
        jnp.mean(ins_pred ** 2)
        + jnp.mean(cate_pred ** 2)
        + jnp.mean(pcd_pred ** 2)
    )
    return loss


if __name__ == "__main__":
    key = jax.random.PRNGKey(0)
    k_img, k_depth, k_param = jax.random.split(key, 3)

    batch, channels, height, width = 2, 3, 16, 16
    img = jax.random.normal(k_img, (batch, channels, height, width), jnp.float32)
    depth = jax.random.normal(k_depth, (batch, height, width), jnp.float32)

    params = init_params(k_param, num_class=50)

    loss = jax.jit(famenet_forward)(params, img, depth)
    loss = jax.block_until_ready(loss)
    assert jnp.isfinite(loss)
    print("KERNEL_OK")
</pallas_src>

<mosaic_0001>
module attributes {stable_mosaic.version = 11 : i64} {
  func.func @_matmul_kernel(%arg0: i32, %arg1: memref<128x27xf32, #tpu.memory_space<vmem>>, %arg2: memref<27x16xf32, #tpu.memory_space<vmem>>, %arg3: memref<1x16xf32, #tpu.memory_space<vmem>>, %arg4: memref<128x16xf32, #tpu.memory_space<vmem>>) attributes {dimension_semantics = [#tpu.dimension_semantics<parallel>], iteration_bounds = array<i64: 1>, scalar_prefetch = 0 : i64, scratch_operands = 0 : i64, tpu.core_type = #tpu.core_type<tc>, window_params = [{transform_indices = @transform_0, window_bounds = array<i64: 128, 27>}, {pipeline_mode = #tpu.pipeline_mode<synchronous>, transform_indices = @transform_1, window_bounds = array<i64: 27, 16>}, {pipeline_mode = #tpu.pipeline_mode<synchronous>, transform_indices = @transform_2, window_bounds = array<i64: 1, 16>}, {transform_indices = @transform_3, window_bounds = array<i64: 128, 16>}]} {
    %c0 = arith.constant 0 : index
    %c0_0 = arith.constant 0 : index
    %0 = vector.load %arg1[%c0, %c0_0] : memref<128x27xf32, #tpu.memory_space<vmem>>, vector<128x27xf32>
    %c0_1 = arith.constant 0 : index
    %c0_2 = arith.constant 0 : index
    %1 = vector.load %arg2[%c0_1, %c0_2] : memref<27x16xf32, #tpu.memory_space<vmem>>, vector<27x16xf32>
    %cst = arith.constant dense<0.000000e+00> : vector<128x16xf32>
    %2 = tpu.matmul %0, %1, %cst {dimension_numbers = #tpu.dot_dimension_numbers<[1], [0], [0], [1], [0, 0, 1, 1], [], []>} : vector<128x27xf32>, vector<27x16xf32>, vector<128x16xf32> -> vector<128x16xf32>
    %c0_3 = arith.constant 0 : index
    %c0_4 = arith.constant 0 : index
    %3 = vector.load %arg3[%c0_3, %c0_4] : memref<1x16xf32, #tpu.memory_space<vmem>>, vector<1x16xf32>
    %4 = vector.broadcast %3 : vector<1x16xf32> to vector<128x16xf32>
    %5 = arith.addf %2, %4 : vector<128x16xf32>
    %cst_5 = arith.constant 0.000000e+00 : f32
    %6 = vector.broadcast %cst_5 : f32 to vector<128x16xf32>
    %7 = arith.maximumf %5, %6 : vector<128x16xf32>
    %c0_6 = arith.constant 0 : index
    %c0_7 = arith.constant 0 : index
    %8 = vector.load %arg4[%c0_6, %c0_7] : memref<128x16xf32, #tpu.memory_space<vmem>>, vector<128x16xf32>
    tpu.vector_store %arg4[%c0_6, %c0_7], %7 {strides = array<i32>} : memref<128x16xf32, #tpu.memory_space<vmem>>, vector<128x16xf32>,
    return
  }
  func.func @transform_0(%arg0: i32) -> (i32, i32) {
    %c0_i32 = arith.constant 0 : i32
    %c0_i32_0 = arith.constant 0 : i32
    return %arg0, %c0_i32 : i32, i32
  }
  func.func @transform_1(%arg0: i32) -> (i32, i32) {
    %c0_i32 = arith.constant 0 : i32
    %c0_i32_0 = arith.constant 0 : i32
    %c0_i32_1 = arith.constant 0 : i32
    return %c0_i32, %c0_i32_0 : i32, i32
  }
  func.func @transform_2(%arg0: i32) -> (i32, i32) {
    %c0_i32 = arith.constant 0 : i32
    %c0_i32_0 = arith.constant 0 : i32
    %c0_i32_1 = arith.constant 0 : i32
    return %c0_i32, %c0_i32_0 : i32, i32
  }
  func.func @transform_3(%arg0: i32) -> (i32, i32) {
    %c0_i32 = arith.constant 0 : i32
    %c0_i32_0 = arith.constant 0 : i32
    return %arg0, %c0_i32 : i32, i32
  }
}

module attributes {stable_mosaic.version = 11 : i64} {
  func.func @_conv_s1_kernel(%arg0: i32, %arg1: i32, %arg2: i32, %arg3: memref<1x1x10x16xf32, #tpu.memory_space<vmem>>, %arg4: memref<1x3x16x16xf32, #tpu.memory_space<vmem>>, %arg5: memref<1x16xf32, #tpu.memory_space<vmem>>, %arg6: memref<1x1x8x16xf32, #tpu.memory_space<vmem>>, %arg7: memref<8x16xf32, #tpu.memory_space<vmem>>) attributes {dimension_semantics = [#tpu.dimension_semantics<parallel>, #tpu.dimension_semantics<parallel>, #tpu.dimension_semantics<arbitrary>], iteration_bounds = array<i64: 2, 8, 3>, scalar_prefetch = 0 : i64, scratch_operands = 1 : i64, tpu.core_type = #tpu.core_type<tc>, window_params = [{transform_indices = @transform_0, window_bounds = array<i64: 1, 1, 10, 16>}, {transform_indices = @transform_1, window_bounds = array<i64: 1, 3, 16, 16>}, {pipeline_mode = #tpu.pipeline_mode<synchronous>, transform_indices = @transform_2, window_bounds = array<i64: 1, 16>}, {transform_indices = @transform_3, window_bounds = array<i64: 1, 1, 8, 16>}]} {
    %c0_i32 = arith.constant 0 : i32
    %0 = arith.cmpi eq, %arg2, %c0_i32 : i32
    %1 = arith.extui %0 : i1 to i32
    %c0_i32_0 = arith.constant 0 : i32
    %2 = arith.cmpi ne, %1, %c0_i32_0 : i32
    scf.if %2 {
      %cst_21 = arith.constant 0.000000e+00 : f32
      %25 = vector.broadcast %cst_21 : f32 to vector<8x16xf32>
      %c0_22 = arith.constant 0 : index
      %c0_23 = arith.constant 0 : index
      %26 = vector.load %arg7[%c0_22, %c0_23] : memref<8x16xf32, #tpu.memory_space<vmem>>, vector<8x16xf32>
      tpu.vector_store %arg7[%c0_22, %c0_23], %25 {strides = array<i32>} : memref<8x16xf32, #tpu.memory_space<vmem>>, vector<8x16xf32>,
    } else {
    }
    %c0 = arith.constant 0 : index
    %c0_1 = arith.constant 0 : index
    %c0_2 = arith.constant 0 : index
    %c0_3 = arith.constant 0 : index
    %3 = vector.load %arg3[%c0, %c0_1, %c0_2, %c0_3] : memref<1x1x10x16xf32, #tpu.memory_space<vmem>>, vector<1x1x10x16xf32>
    %4 = vector.shape_cast %3 : vector<1x1x10x16xf32> to vector<10x16xf32>
    %c0_4 = arith.constant 0 : index
    %c0_5 = arith.constant 0 : index
    %5 = vector.load %arg7[%c0_4, %c0_5] : memref<8x16xf32, #tpu.memory_space<vmem>>, vector<8x16xf32>
    %6 = vector.extract_strided_slice %4 {offsets = [0, 0], sizes = [8, 16], strides = [1, 1]} : vector<10x16xf32> to vector<8x16xf32>
    %c0_6 = arith.constant 0 : index
    %c0_7 = arith.constant 0 : index
    %c0_8 = arith.constant 0 : index
    %c0_9 = arith.constant 0 : index
    %7 = vector.load %arg4[%c0_6, %c0_7, %c0_8, %c0_9] : memref<1x3x16x16xf32, #tpu.memory_space<vmem>>, vector<1x1x16x16xf32>
    %8 = vector.shape_cast %7 : vector<1x1x16x16xf32> to vector<16x16xf32>
    %cst = arith.constant dense<0.000000e+00> : vector<8x16xf32>
    %9 = tpu.matmul %6, %8, %cst {dimension_numbers = #tpu.dot_dimension_numbers<[1], [0], [0], [1], [0, 0, 1, 1], [], []>} : vector<8x16xf32>, vector<16x16xf32>, vector<8x16xf32> -> vector<8x16xf32>
    %10 = arith.addf %5, %9 : vector<8x16xf32>
    %11 = vector.extract_strided_slice %4 {offsets = [1, 0], sizes = [8, 16], strides = [1, 1]} : vector<10x16xf32> to vector<8x16xf32>
    %c0_10 = arith.constant 0 : index
    %c1 = arith.constant 1 : index
    %c0_11 = arith.constant 0 : index
    %c0_12 = arith.constant 0 : index
    %12 = vector.load %arg4[%c0_10, %c1, %c0_11, %c0_12] : memref<1x3x16x16xf32, #tpu.memory_space<vmem>>, vector<1x1x16x16xf32>
    %13 = vector.shape_cast %12 : vector<1x1x16x16xf32> to vector<16x16xf32>
    %cst_13 = arith.constant dense<0.000000e+00> : vector<8x16xf32>
    %14 = tpu.matmul %11, %13, %cst_13 {dimension_numbers = #tpu.dot_dimension_numbers<[1], [0], [0], [1], [0, 0, 1, 1], [], []>} : vector<8x16xf32>, vector<16x16xf32>, vector<8x16xf32> -> vector<8x16xf32>
    %15 = arith.addf %10, %14 : vector<8x16xf32>
    %16 = vector.extract_strided_slice %4 {offsets = [2, 0], sizes = [8, 16], strides = [1, 1]} : vector<10x16xf32> to vector<8x16xf32>
    %c0_14 = arith.constant 0 : index
    %c2 = arith.constant 2 : index
    %c0_15 = arith.constant 0 : index
    %c0_16 = arith.constant 0 : index
    %17 = vector.load %arg4[%c0_14, %c2, %c0_15, %c0_16] : memref<1x3x16x16xf32, #tpu.memory_space<vmem>>, vector<1x1x16x16xf32>
    %18 = vector.shape_cast %17 : vector<1x1x16x16xf32> to vector<16x16xf32>
    %cst_17 = arith.constant dense<0.000000e+00> : vector<8x16xf32>
    %19 = tpu.matmul %16, %18, %cst_17 {dimension_numbers = #tpu.dot_dimension_numbers<[1], [0], [0], [1], [0, 0, 1, 1], [], []>} : vector<8x16xf32>, vector<16x16xf32>, vector<8x16xf32> -> vector<8x16xf32>
    %20 = arith.addf %15, %19 : vector<8x16xf32>
    %c0_18 = arith.constant 0 : index
    %c0_19 = arith.constant 0 : index
    %21 = vector.load %arg7[%c0_18, %c0_19] : memref<8x16xf32, #tpu.memory_space<vmem>>, vector<8x16xf32>
    tpu.vector_store %arg7[%c0_18, %c0_19], %20 {strides = array<i32>} : memref<8x16xf32, #tpu.memory_space<vmem>>, vector<8x16xf32>,
    %c2_i32 = arith.constant 2 : i32
    %22 = arith.cmpi eq, %arg2, %c2_i32 : i32
    %23 = arith.extui %22 : i1 to i32
    %c0_i32_20 = arith.constant 0 : i32
    %24 = arith.cmpi ne, %23, %c0_i32_20 : i32
    scf.if %24 {
      %c0_21 = arith.constant 0 : index
      %c0_22 = arith.constant 0 : index
      %25 = vector.load %arg7[%c0_21, %c0_22] : memref<8x16xf32, #tpu.memory_space<vmem>>, vector<8x16xf32>
      %c0_23 = arith.constant 0 : index
      %c0_24 = arith.constant 0 : index
      %26 = vector.load %arg5[%c0_23, %c0_24] : memref<1x16xf32, #tpu.memory_space<vmem>>, vector<1x16xf32>
      %27 = vector.broadcast %26 : vector<1x16xf32> to vector<8x16xf32>
      %28 = arith.addf %25, %27 : vector<8x16xf32>
      %cst_25 = arith.constant 0.000000e+00 : f32
      %29 = vector.broadcast %cst_25 : f32 to vector<8x16xf32>
      %30 = arith.maximumf %28, %29 : vector<8x16xf32>
      %c0_26 = arith.constant 0 : index
      %c0_27 = arith.constant 0 : index
      %c0_28 = arith.constant 0 : index
      %c0_29 = arith.constant 0 : index
      %31 = vector.load %arg6[%c0_26, %c0_27, %c0_28, %c0_29] : memref<1x1x8x16xf32, #tpu.memory_space<vmem>>, vector<1x1x8x16xf32>
      %32 = vector.shape_cast %31 : vector<1x1x8x16xf32> to vector<8x16xf32>
      %33 = vector.shape_cast %30 : vector<8x16xf32> to vector<1x1x8x16xf32>
      tpu.vector_store %arg6[%c0_26, %c0_27, %c0_28, %c0_29], %33 {strides = array<i32>} : memref<1x1x8x16xf32, #tpu.memory_space<vmem>>, vector<1x1x8x16xf32>,
    } else {
    }
    return
  }
  func.func @transform_0(%arg0: i32, %arg1: i32, %arg2: i32) -> (i32, i32, i32, i32) {
    %0 = arith.addi %arg1, %arg2 : i32
    %c0_i32 = arith.constant 0 : i32
    %c0_i32_0 = arith.constant 0 : i32
    %c0_i32_1 = arith.constant 0 : i32
    return %arg0, %0, %c0_i32, %c0_i32_0 : i32, i32, i32, i32
  }
  func.func @transform_1(%arg0: i32, %arg1: i32, %arg2: i32) -> (i32, i32, i32, i32) {
    %c0_i32 = arith.constant 0 : i32
    %c0_i32_0 = arith.constant 0 : i32
    %c0_i32_1 = arith.constant 0 : i32
    %c0_i32_2 = arith.constant 0 : i32
    return %arg2, %c0_i32, %c0_i32_0, %c0_i32_1 : i32, i32, i32, i32
  }
  func.func @transform_2(%arg0: i32, %arg1: i32, %arg2: i32) -> (i32, i32) {
    %c0_i32 = arith.constant 0 : i32
    %c0_i32_0 = arith.constant 0 : i32
    %c0_i32_1 = arith.constant 0 : i32
    return %c0_i32, %c0_i32_0 : i32, i32
  }
  func.func @transform_3(%arg0: i32, %arg1: i32, %arg2: i32) -> (i32, i32, i32, i32) {
    %c0_i32 = arith.constant 0 : i32
    %c0_i32_0 = arith.constant 0 : i32
    %c0_i32_1 = arith.constant 0 : i32
    return %arg0, %arg1, %c0_i32, %c0_i32_0 : i32, i32, i32, i32
  }
}

module attributes {stable_mosaic.version = 11 : i64} {
  func.func @_conv_s1_kernel(%arg0: i32, %arg1: i32, %arg2: i32, %arg3: memref<1x1x10x16xf32, #tpu.memory_space<vmem>>, %arg4: memref<1x3x16x16xf32, #tpu.memory_space<vmem>>, %arg5: memref<1x16xf32, #tpu.memory_space<vmem>>, %arg6: memref<1x1x8x16xf32, #tpu.memory_space<vmem>>, %arg7: memref<1x1x8x16xf32, #tpu.memory_space<vmem>>, %arg8: memref<8x16xf32, #tpu.memory_space<vmem>>) attributes {dimension_semantics = [#tpu.dimension_semantics<parallel>, #tpu.dimension_semantics<parallel>, #tpu.dimension_semantics<arbitrary>], iteration_bounds = array<i64: 2, 8, 3>, scalar_prefetch = 0 : i64, scratch_operands = 1 : i64, tpu.core_type = #tpu.core_type<tc>, window_params = [{transform_indices = @transform_0, window_bounds = array<i64: 1, 1, 10, 16>}, {transform_indices = @transform_1, window_bounds = array<i64: 1, 3, 16, 16>}, {pipeline_mode = #tpu.pipeline_mode<synchronous>, transform_indices = @transform_2, window_bounds = array<i64: 1, 16>}, {transform_indices = @transform_3, window_bounds = array<i64: 1, 1, 8, 16>}, {transform_indices = @transform_4, window_bounds = array<i64: 1, 1, 8, 16>}]} {
    %c0_i32 = arith.constant 0 : i32
    %0 = arith.cmpi eq, %arg2, %c0_i32 : i32
    %1 = arith.extui %0 : i1 to i32
    %c0_i32_0 = arith.constant 0 : i32
    %2 = arith.cmpi ne, %1, %c0_i32_0 : i32
    scf.if %2 {
      %cst_21 = arith.constant 0.000000e+00 : f32
      %25 = vector.broadcast %cst_21 : f32 to vector<8x16xf32>
      %c0_22 = arith.constant 0 : index
      %c0_23 = arith.constant 0 : index
      %26 = vector.load %arg8[%c0_22, %c0_23] : memref<8x16xf32, #tpu.memory_space<vmem>>, vector<8x16xf32>
      tpu.vector_store %arg8[%c0_22, %c0_23], %25 {strides = array<i32>} : memref<8x16xf32, #tpu.memory_space<vmem>>, vector<8x16xf32>,
    } else {
    }
    %c0 = arith.constant 0 : index
    %c0_1 = arith.constant 0 : index
    %c0_2 = arith.constant 0 : index
    %c0_3 = arith.constant 0 : index
    %3 = vector.load %arg3[%c0, %c0_1, %c0_2, %c0_3] : memref<1x1x10x16xf32, #tpu.memory_space<vmem>>, vector<1x1x10x16xf32>
    %4 = vector.shape_cast %3 : vector<1x1x10x16xf32> to vector<10x16xf32>
    %c0_4 = arith.constant 0 : index
    %c0_5 = arith.constant 0 : index
    %5 = vector.load %arg8[%c0_4, %c0_5] : memref<8x16xf32, #tpu.memory_space<vmem>>, vector<8x16xf32>
    %6 = vector.extract_strided_slice %4 {offsets = [0, 0], sizes = [8, 16], strides = [1, 1]} : vector<10x16xf32> to vector<8x16xf32>
    %c0_6 = arith.constant 0 : index
    %c0_7 = arith.constant 0 : index
    %c0_8 = arith.constant 0 : index
    %c0_9 = arith.constant 0 : index
    %7 = vector.load %arg4[%c0_6, %c0_7, %c0_8, %c0_9] : memref<1x3x16x16xf32, #tpu.memory_space<vmem>>, vector<1x1x16x16xf32>
    %8 = vector.shape_cast %7 : vector<1x1x16x16xf32> to vector<16x16xf32>
    %cst = arith.constant dense<0.000000e+00> : vector<8x16xf32>
    %9 = tpu.matmul %6, %8, %cst {dimension_numbers = #tpu.dot_dimension_numbers<[1], [0], [0], [1], [0, 0, 1, 1], [], []>} : vector<8x16xf32>, vector<16x16xf32>, vector<8x16xf32> -> vector<8x16xf32>
    %10 = arith.addf %5, %9 : vector<8x16xf32>
    %11 = vector.extract_strided_slice %4 {offsets = [1, 0], sizes = [8, 16], strides = [1, 1]} : vector<10x16xf32> to vector<8x16xf32>
    %c0_10 = arith.constant 0 : index
    %c1 = arith.constant 1 : index
    %c0_11 = arith.constant 0 : index
    %c0_12 = arith.constant 0 : index
    %12 = vector.load %arg4[%c0_10, %c1, %c0_11, %c0_12] : memref<1x3x16x16xf32, #tpu.memory_space<vmem>>, vector<1x1x16x16xf32>
    %13 = vector.shape_cast %12 : vector<1x1x16x16xf32> to vector<16x16xf32>
    %cst_13 = arith.constant dense<0.000000e+00> : vector<8x16xf32>
    %14 = tpu.matmul %11, %13, %cst_13 {dimension_numbers = #tpu.dot_dimension_numbers<[1], [0], [0], [1], [0, 0, 1, 1], [], []>} : vector<8x16xf32>, vector<16x16xf32>, vector<8x16xf32> -> vector<8x16xf32>
    %15 = arith.addf %10, %14 : vector<8x16xf32>
    %16 = vector.extract_strided_slice %4 {offsets = [2, 0], sizes = [8, 16], strides = [1, 1]} : vector<10x16xf32> to vector<8x16xf32>
    %c0_14 = arith.constant 0 : index
    %c2 = arith.constant 2 : index
    %c0_15 = arith.constant 0 : index
    %c0_16 = arith.constant 0 : index
    %17 = vector.load %arg4[%c0_14, %c2, %c0_15, %c0_16] : memref<1x3x16x16xf32, #tpu.memory_space<vmem>>, vector<1x1x16x16xf32>
    %18 = vector.shape_cast %17 : vector<1x1x16x16xf32> to vector<16x16xf32>
    %cst_17 = arith.constant dense<0.000000e+00> : vector<8x16xf32>
    %19 = tpu.matmul %16, %18, %cst_17 {dimension_numbers = #tpu.dot_dimension_numbers<[1], [0], [0], [1], [0, 0, 1, 1], [], []>} : vector<8x16xf32>, vector<16x16xf32>, vector<8x16xf32> -> vector<8x16xf32>
    %20 = arith.addf %15, %19 : vector<8x16xf32>
    %c0_18 = arith.constant 0 : index
    %c0_19 = arith.constant 0 : index
    %21 = vector.load %arg8[%c0_18, %c0_19] : memref<8x16xf32, #tpu.memory_space<vmem>>, vector<8x16xf32>
    tpu.vector_store %arg8[%c0_18, %c0_19], %20 {strides = array<i32>} : memref<8x16xf32, #tpu.memory_space<vmem>>, vector<8x16xf32>,
    %c2_i32 = arith.constant 2 : i32
    %22 = arith.cmpi eq, %arg2, %c2_i32 : i32
    %23 = arith.extui %22 : i1 to i32
    %c0_i32_20 = arith.constant 0 : i32
    %24 = arith.cmpi ne, %23, %c0_i32_20 : i32
    scf.if %24 {
      %c0_21 = arith.constant 0 : index
      %c0_22 = arith.constant 0 : index
      %25 = vector.load %arg8[%c0_21, %c0_22] : memref<8x16xf32, #tpu.memory_space<vmem>>, vector<8x16xf32>
      %c0_23 = arith.constant 0 : index
      %c0_24 = arith.constant 0 : index
      %26 = vector.load %arg5[%c0_23, %c0_24] : memref<1x16xf32, #tpu.memory_space<vmem>>, vector<1x16xf32>
      %27 = vector.broadcast %26 : vector<1x16xf32> to vector<8x16xf32>
      %28 = arith.addf %25, %27 : vector<8x16xf32>
      %c0_25 = arith.constant 0 : index
      %c0_26 = arith.constant 0 : index
      %c0_27 = arith.constant 0 : index
      %c0_28 = arith.constant 0 : index
      %29 = vector.load %arg6[%c0_25, %c0_26, %c0_27, %c0_28] : memref<1x1x8x16xf32, #tpu.memory_space<vmem>>, vector<1x1x8x16xf32>
      %30 = vector.shape_cast %29 : vector<1x1x8x16xf32> to vector<8x16xf32>
      %31 = arith.addf %28, %30 : vector<8x16xf32>
      %cst_29 = arith.constant 0.000000e+00 : f32
      %32 = vector.broadcast %cst_29 : f32 to vector<8x16xf32>
      %33 = arith.maximumf %31, %32 : vector<8x16xf32>
      %c0_30 = arith.constant 0 : index
      %c0_31 = arith.constant 0 : index
      %c0_32 = arith.constant 0 : index
      %c0_33 = arith.constant 0 : index
      %34 = vector.load %arg7[%c0_30, %c0_31, %c0_32, %c0_33] : memref<1x1x8x16xf32, #tpu.memory_space<vmem>>, vector<1x1x8x16xf32>
      %35 = vector.shape_cast %34 : vector<1x1x8x16xf32> to vector<8x16xf32>
      %36 = vector.shape_cast %33 : vector<8x16xf32> to vector<1x1x8x16xf32>
      tpu.vector_store %arg7[%c0_30, %c0_31, %c0_32, %c0_33], %36 {strides = array<i32>} : memref<1x1x8x16xf32, #tpu.memory_space<vmem>>, vector<1x1x8x16xf32>,
    } else {
    }
    return
  }
  func.func @transform_0(%arg0: i32, %arg1: i32, %arg2: i32) -> (i32, i32, i32, i32) {
    %0 = arith.addi %arg1, %arg2 : i32
    %c0_i32 = arith.constant 0 : i32
    %c0_i32_0 = arith.constant 0 : i32
    %c0_i32_1 = arith.constant 0 : i32
    return %arg0, %0, %c0_i32, %c0_i32_0 : i32, i32, i32, i32
  }
  func.func @transform_1(%arg0: i32, %arg1: i32, %arg2: i32) -> (i32, i32, i32, i32) {
    %c0_i32 = arith.constant 0 : i32
    %c0_i32_0 = arith.constant 0 : i32
    %c0_i32_1 = arith.constant 0 : i32
    %c0_i32_2 = arith.constant 0 : i32
    return %arg2, %c0_i32, %c0_i32_0, %c0_i32_1 : i32, i32, i32, i32
  }
  func.func @transform_2(%arg0: i32, %arg1: i32, %arg2: i32) -> (i32, i32) {
    %c0_i32 = arith.constant 0 : i32
    %c0_i32_0 = arith.constant 0 : i32
    %c0_i32_1 = arith.constant 0 : i32
    return %c0_i32, %c0_i32_0 : i32, i32
  }
  func.func @transform_3(%arg0: i32, %arg1: i32, %arg2: i32) -> (i32, i32, i32, i32) {
    %c0_i32 = arith.constant 0 : i32
    %c0_i32_0 = arith.constant 0 : i32
    %c0_i32_1 = arith.constant 0 : i32
    return %arg0, %arg1, %c0_i32, %c0_i32_0 : i32, i32, i32, i32
  }
  func.func @transform_4(%arg0: i32, %arg1: i32, %arg2: i32) -> (i32, i32, i32, i32) {
    %c0_i32 = arith.constant 0 : i32
    %c0_i32_0 = arith.constant 0 : i32
    %c0_i32_1 = arith.constant 0 : i32
    return %arg0, %arg1, %c0_i32, %c0_i32_0 : i32, i32, i32, i32
  }
}

module attributes {stable_mosaic.version = 11 : i64} {
  func.func @_matmul_kernel(%arg0: i32, %arg1: memref<32x144xf32, #tpu.memory_space<vmem>>, %arg2: memref<144x32xf32, #tpu.memory_space<vmem>>, %arg3: memref<1x32xf32, #tpu.memory_space<vmem>>, %arg4: memref<32x32xf32, #tpu.memory_space<vmem>>) attributes {dimension_semantics = [#tpu.dimension_semantics<parallel>], iteration_bounds = array<i64: 1>, scalar_prefetch = 0 : i64, scratch_operands = 0 : i64, tpu.core_type = #tpu.core_type<tc>, window_params = [{transform_indices = @transform_0, window_bounds = array<i64: 32, 144>}, {pipeline_mode = #tpu.pipeline_mode<synchronous>, transform_indices = @transform_1, window_bounds = array<i64: 144, 32>}, {pipeline_mode = #tpu.pipeline_mode<synchronous>, transform_indices = @transform_2, window_bounds = array<i64: 1, 32>}, {transform_indices = @transform_3, window_bounds = array<i64: 32, 32>}]} {
    %c0 = arith.constant 0 : index
    %c0_0 = arith.constant 0 : index
    %0 = vector.load %arg1[%c0, %c0_0] : memref<32x144xf32, #tpu.memory_space<vmem>>, vector<32x144xf32>
    %c0_1 = arith.constant 0 : index
    %c0_2 = arith.constant 0 : index
    %1 = vector.load %arg2[%c0_1, %c0_2] : memref<144x32xf32, #tpu.memory_space<vmem>>, vector<144x32xf32>
    %cst = arith.constant dense<0.000000e+00> : vector<32x32xf32>
    %2 = tpu.matmul %0, %1, %cst {dimension_numbers = #tpu.dot_dimension_numbers<[1], [0], [0], [1], [0, 0, 1, 1], [], []>} : vector<32x144xf32>, vector<144x32xf32>, vector<32x32xf32> -> vector<32x32xf32>
    %c0_3 = arith.constant 0 : index
    %c0_4 = arith.constant 0 : index
    %3 = vector.load %arg3[%c0_3, %c0_4] : memref<1x32xf32, #tpu.memory_space<vmem>>, vector<1x32xf32>
    %4 = vector.broadcast %3 : vector<1x32xf32> to vector<32x32xf32>
    %5 = arith.addf %2, %4 : vector<32x32xf32>
    %cst_5 = arith.constant 0.000000e+00 : f32
    %6 = vector.broadcast %cst_5 : f32 to vector<32x32xf32>
    %7 = arith.maximumf %5, %6 : vector<32x32xf32>
    %c0_6 = arith.constant 0 : index
    %c0_7 = arith.constant 0 : index
    %8 = vector.load %arg4[%c0_6, %c0_7] : memref<32x32xf32, #tpu.memory_space<vmem>>, vector<32x32xf32>
    tpu.vector_store %arg4[%c0_6, %c0_7], %7 {strides = array<i32>} : memref<32x32xf32, #tpu.memory_space<vmem>>, vector<32x32xf32>,
    return
  }
  func.func @transform_0(%arg0: i32) -> (i32, i32) {
    %c0_i32 = arith.constant 0 : i32
    %c0_i32_0 = arith.constant 0 : i32
    return %arg0, %c0_i32 : i32, i32
  }
  func.func @transform_1(%arg0: i32) -> (i32, i32) {
    %c0_i32 = arith.constant 0 : i32
    %c0_i32_0 = arith.constant 0 : i32
    %c0_i32_1 = arith.constant 0 : i32
    return %c0_i32, %c0_i32_0 : i32, i32
  }
  func.func @transform_2(%arg0: i32) -> (i32, i32) {
    %c0_i32 = arith.constant 0 : i32
    %c0_i32_0 = arith.constant 0 : i32
    %c0_i32_1 = arith.constant 0 : i32
    return %c0_i32, %c0_i32_0 : i32, i32
  }
  func.func @transform_3(%arg0: i32) -> (i32, i32) {
    %c0_i32 = arith.constant 0 : i32
    %c0_i32_0 = arith.constant 0 : i32
    return %arg0, %c0_i32 : i32, i32
  }
}

module attributes {stable_mosaic.version = 11 : i64} {
  func.func @_matmul_kernel(%arg0: i32, %arg1: memref<8x288xf32, #tpu.memory_space<vmem>>, %arg2: memref<288x64xf32, #tpu.memory_space<vmem>>, %arg3: memref<1x64xf32, #tpu.memory_space<vmem>>, %arg4: memref<8x64xf32, #tpu.memory_space<vmem>>) attributes {dimension_semantics = [#tpu.dimension_semantics<parallel>], iteration_bounds = array<i64: 1>, scalar_prefetch = 0 : i64, scratch_operands = 0 : i64, tpu.core_type = #tpu.core_type<tc>, window_params = [{transform_indices = @transform_0, window_bounds = array<i64: 8, 288>}, {pipeline_mode = #tpu.pipeline_mode<synchronous>, transform_indices = @transform_1, window_bounds = array<i64: 288, 64>}, {pipeline_mode = #tpu.pipeline_mode<synchronous>, transform_indices = @transform_2, window_bounds = array<i64: 1, 64>}, {transform_indices = @transform_3, window_bounds = array<i64: 8, 64>}]} {
    %c0 = arith.constant 0 : index
    %c0_0 = arith.constant 0 : index
    %0 = vector.load %arg1[%c0, %c0_0] : memref<8x288xf32, #tpu.memory_space<vmem>>, vector<8x288xf32>
    %c0_1 = arith.constant 0 : index
    %c0_2 = arith.constant 0 : index
    %1 = vector.load %arg2[%c0_1, %c0_2] : memref<288x64xf32, #tpu.memory_space<vmem>>, vector<288x64xf32>
    %cst = arith.constant dense<0.000000e+00> : vector<8x64xf32>
    %2 = tpu.matmul %0, %1, %cst {dimension_numbers = #tpu.dot_dimension_numbers<[1], [0], [0], [1], [0, 0, 1, 1], [], []>} : vector<8x288xf32>, vector<288x64xf32>, vector<8x64xf32> -> vector<8x64xf32>
    %c0_3 = arith.constant 0 : index
    %c0_4 = arith.constant 0 : index
    %3 = vector.load %arg3[%c0_3, %c0_4] : memref<1x64xf32, #tpu.memory_space<vmem>>, vector<1x64xf32>
    %4 = vector.broadcast %3 : vector<1x64xf32> to vector<8x64xf32>
    %5 = arith.addf %2, %4 : vector<8x64xf32>
    %cst_5 = arith.constant 0.000000e+00 : f32
    %6 = vector.broadcast %cst_5 : f32 to vector<8x64xf32>
    %7 = arith.maximumf %5, %6 : vector<8x64xf32>
    %c0_6 = arith.constant 0 : index
    %c0_7 = arith.constant 0 : index
    %8 = vector.load %arg4[%c0_6, %c0_7] : memref<8x64xf32, #tpu.memory_space<vmem>>, vector<8x64xf32>
    tpu.vector_store %arg4[%c0_6, %c0_7], %7 {strides = array<i32>} : memref<8x64xf32, #tpu.memory_space<vmem>>, vector<8x64xf32>,
    return
  }
  func.func @transform_0(%arg0: i32) -> (i32, i32) {
    %c0_i32 = arith.constant 0 : i32
    %c0_i32_0 = arith.constant 0 : i32
    return %arg0, %c0_i32 : i32, i32
  }
  func.func @transform_1(%arg0: i32) -> (i32, i32) {
    %c0_i32 = arith.constant 0 : i32
    %c0_i32_0 = arith.constant 0 : i32
    %c0_i32_1 = arith.constant 0 : i32
    return %c0_i32, %c0_i32_0 : i32, i32
  }
  func.func @transform_2(%arg0: i32) -> (i32, i32) {
    %c0_i32 = arith.constant 0 : i32
    %c0_i32_0 = arith.constant 0 : i32
    %c0_i32_1 = arith.constant 0 : i32
    return %c0_i32, %c0_i32_0 : i32, i32
  }
  func.func @transform_3(%arg0: i32) -> (i32, i32) {
    %c0_i32 = arith.constant 0 : i32
    %c0_i32_0 = arith.constant 0 : i32
    return %arg0, %c0_i32 : i32, i32
  }
}

module attributes {stable_mosaic.version = 11 : i64} {
  func.func @_matmul_kernel(%arg0: i32, %arg1: memref<8x64xf32, #tpu.memory_space<vmem>>, %arg2: memref<64x32xf32, #tpu.memory_space<vmem>>, %arg3: memref<1x32xf32, #tpu.memory_space<vmem>>, %arg4: memref<8x32xf32, #tpu.memory_space<vmem>>) attributes {dimension_semantics = [#tpu.dimension_semantics<parallel>], iteration_bounds = array<i64: 1>, scalar_prefetch = 0 : i64, scratch_operands = 0 : i64, tpu.core_type = #tpu.core_type<tc>, window_params = [{transform_indices = @transform_0, window_bounds = array<i64: 8, 64>}, {pipeline_mode = #tpu.pipeline_mode<synchronous>, transform_indices = @transform_1, window_bounds = array<i64: 64, 32>}, {pipeline_mode = #tpu.pipeline_mode<synchronous>, transform_indices = @transform_2, window_bounds = array<i64: 1, 32>}, {transform_indices = @transform_3, window_bounds = array<i64: 8, 32>}]} {
    %c0 = arith.constant 0 : index
    %c0_0 = arith.constant 0 : index
    %0 = vector.load %arg1[%c0, %c0_0] : memref<8x64xf32, #tpu.memory_space<vmem>>, vector<8x64xf32>
    %c0_1 = arith.constant 0 : index
    %c0_2 = arith.constant 0 : index
    %1 = vector.load %arg2[%c0_1, %c0_2] : memref<64x32xf32, #tpu.memory_space<vmem>>, vector<64x32xf32>
    %cst = arith.constant dense<0.000000e+00> : vector<8x32xf32>
    %2 = tpu.matmul %0, %1, %cst {dimension_numbers = #tpu.dot_dimension_numbers<[1], [0], [0], [1], [0, 0, 1, 1], [], []>} : vector<8x64xf32>, vector<64x32xf32>, vector<8x32xf32> -> vector<8x32xf32>
    %c0_3 = arith.constant 0 : index
    %c0_4 = arith.constant 0 : index
    %3 = vector.load %arg3[%c0_3, %c0_4] : memref<1x32xf32, #tpu.memory_space<vmem>>, vector<1x32xf32>
    %4 = vector.broadcast %3 : vector<1x32xf32> to vector<8x32xf32>
    %5 = arith.addf %2, %4 : vector<8x32xf32>
    %c0_5 = arith.constant 0 : index
    %c0_6 = arith.constant 0 : index
    %6 = vector.load %arg4[%c0_5, %c0_6] : memref<8x32xf32, #tpu.memory_space<vmem>>, vector<8x32xf32>
    tpu.vector_store %arg4[%c0_5, %c0_6], %5 {strides = array<i32>} : memref<8x32xf32, #tpu.memory_space<vmem>>, vector<8x32xf32>,
    return
  }
  func.func @transform_0(%arg0: i32) -> (i32, i32) {
    %c0_i32 = arith.constant 0 : i32
    %c0_i32_0 = arith.constant 0 : i32
    return %arg0, %c0_i32 : i32, i32
  }
  func.func @transform_1(%arg0: i32) -> (i32, i32) {
    %c0_i32 = arith.constant 0 : i32
    %c0_i32_0 = arith.constant 0 : i32
    %c0_i32_1 = arith.constant 0 : i32
    return %c0_i32, %c0_i32_0 : i32, i32
  }
  func.func @transform_2(%arg0: i32) -> (i32, i32) {
    %c0_i32 = arith.constant 0 : i32
    %c0_i32_0 = arith.constant 0 : i32
    %c0_i32_1 = arith.constant 0 : i32
    return %c0_i32, %c0_i32_0 : i32, i32
  }
  func.func @transform_3(%arg0: i32) -> (i32, i32) {
    %c0_i32 = arith.constant 0 : i32
    %c0_i32_0 = arith.constant 0 : i32
    return %arg0, %c0_i32 : i32, i32
  }
}

module attributes {stable_mosaic.version = 11 : i64} {
  func.func @_matmul_kernel(%arg0: i32, %arg1: memref<32x32xf32, #tpu.memory_space<vmem>>, %arg2: memref<32x32xf32, #tpu.memory_space<vmem>>, %arg3: memref<1x32xf32, #tpu.memory_space<vmem>>, %arg4: memref<32x32xf32, #tpu.memory_space<vmem>>, %arg5: memref<32x32xf32, #tpu.memory_space<vmem>>) attributes {dimension_semantics = [#tpu.dimension_semantics<parallel>], iteration_bounds = array<i64: 1>, scalar_prefetch = 0 : i64, scratch_operands = 0 : i64, tpu.core_type = #tpu.core_type<tc>, window_params = [{transform_indices = @transform_0, window_bounds = array<i64: 32, 32>}, {pipeline_mode = #tpu.pipeline_mode<synchronous>, transform_indices = @transform_1, window_bounds = array<i64: 32, 32>}, {pipeline_mode = #tpu.pipeline_mode<synchronous>, transform_indices = @transform_2, window_bounds = array<i64: 1, 32>}, {transform_indices = @transform_3, window_bounds = array<i64: 32, 32>}, {transform_indices = @transform_4, window_bounds = array<i64: 32, 32>}]} {
    %c0 = arith.constant 0 : index
    %c0_0 = arith.constant 0 : index
    %0 = vector.load %arg1[%c0, %c0_0] : memref<32x32xf32, #tpu.memory_space<vmem>>, vector<32x32xf32>
    %c0_1 = arith.constant 0 : index
    %c0_2 = arith.constant 0 : index
    %1 = vector.load %arg2[%c0_1, %c0_2] : memref<32x32xf32, #tpu.memory_space<vmem>>, vector<32x32xf32>
    %cst = arith.constant dense<0.000000e+00> : vector<32x32xf32>
    %2 = tpu.matmul %0, %1, %cst {dimension_numbers = #tpu.dot_dimension_numbers<[1], [0], [0], [1], [0, 0, 1, 1], [], []>} : vector<32x32xf32>, vector<32x32xf32>, vector<32x32xf32> -> vector<32x32xf32>
    %c0_3 = arith.constant 0 : index
    %c0_4 = arith.constant 0 : index
    %3 = vector.load %arg3[%c0_3, %c0_4] : memref<1x32xf32, #tpu.memory_space<vmem>>, vector<1x32xf32>
    %4 = vector.broadcast %3 : vector<1x32xf32> to vector<32x32xf32>
    %5 = arith.addf %2, %4 : vector<32x32xf32>
    %c0_5 = arith.constant 0 : index
    %c0_6 = arith.constant 0 : index
    %6 = vector.load %arg4[%c0_5, %c0_6] : memref<32x32xf32, #tpu.memory_space<vmem>>, vector<32x32xf32>
    %7 = arith.addf %5, %6 : vector<32x32xf32>
    %c0_7 = arith.constant 0 : index
    %c0_8 = arith.constant 0 : index
    %8 = vector.load %arg5[%c0_7, %c0_8] : memref<32x32xf32, #tpu.memory_space<vmem>>, vector<32x32xf32>
    tpu.vector_store %arg5[%c0_7, %c0_8], %7 {strides = array<i32>} : memref<32x32xf32, #tpu.memory_space<vmem>>, vector<32x32xf32>,
    return
  }
  func.func @transform_0(%arg0: i32) -> (i32, i32) {
    %c0_i32 = arith.constant 0 : i32
    %c0_i32_0 = arith.constant 0 : i32
    return %arg0, %c0_i32 : i32, i32
  }
  func.func @transform_1(%arg0: i32) -> (i32, i32) {
    %c0_i32 = arith.constant 0 : i32
    %c0_i32_0 = arith.constant 0 : i32
    %c0_i32_1 = arith.constant 0 : i32
    return %c0_i32, %c0_i32_0 : i32, i32
  }
  func.func @transform_2(%arg0: i32) -> (i32, i32) {
    %c0_i32 = arith.constant 0 : i32
    %c0_i32_0 = arith.constant 0 : i32
    %c0_i32_1 = arith.constant 0 : i32
    return %c0_i32, %c0_i32_0 : i32, i32
  }
  func.func @transform_3(%arg0: i32) -> (i32, i32) {
    %c0_i32 = arith.constant 0 : i32
    %c0_i32_0 = arith.constant 0 : i32
    return %arg0, %c0_i32 : i32, i32
  }
  func.func @transform_4(%arg0: i32) -> (i32, i32) {
    %c0_i32 = arith.constant 0 : i32
    %c0_i32_0 = arith.constant 0 : i32
    return %arg0, %c0_i32 : i32, i32
  }
}

module attributes {stable_mosaic.version = 11 : i64} {
  func.func @_matmul_kernel(%arg0: i32, %arg1: memref<128x16xf32, #tpu.memory_space<vmem>>, %arg2: memref<16x32xf32, #tpu.memory_space<vmem>>, %arg3: memref<1x32xf32, #tpu.memory_space<vmem>>, %arg4: memref<128x32xf32, #tpu.memory_space<vmem>>, %arg5: memref<128x32xf32, #tpu.memory_space<vmem>>) attributes {dimension_semantics = [#tpu.dimension_semantics<parallel>], iteration_bounds = array<i64: 1>, scalar_prefetch = 0 : i64, scratch_operands = 0 : i64, tpu.core_type = #tpu.core_type<tc>, window_params = [{transform_indices = @transform_0, window_bounds = array<i64: 128, 16>}, {pipeline_mode = #tpu.pipeline_mode<synchronous>, transform_indices = @transform_1, window_bounds = array<i64: 16, 32>}, {pipeline_mode = #tpu.pipeline_mode<synchronous>, transform_indices = @transform_2, window_bounds = array<i64: 1, 32>}, {transform_indices = @transform_3, window_bounds = array<i64: 128, 32>}, {transform_indices = @transform_4, window_bounds = array<i64: 128, 32>}]} {
    %c0 = arith.constant 0 : index
    %c0_0 = arith.constant 0 : index
    %0 = vector.load %arg1[%c0, %c0_0] : memref<128x16xf32, #tpu.memory_space<vmem>>, vector<128x16xf32>
    %c0_1 = arith.constant 0 : index
    %c0_2 = arith.constant 0 : index
    %1 = vector.load %arg2[%c0_1, %c0_2] : memref<16x32xf32, #tpu.memory_space<vmem>>, vector<16x32xf32>
    %cst = arith.constant dense<0.000000e+00> : vector<128x32xf32>
    %2 = tpu.matmul %0, %1, %cst {dimension_numbers = #tpu.dot_dimension_numbers<[1], [0], [0], [1], [0, 0, 1, 1], [], []>} : vector<128x16xf32>, vector<16x32xf32>, vector<128x32xf32> -> vector<128x32xf32>
    %c0_3 = arith.constant 0 : index
    %c0_4 = arith.constant 0 : index
    %3 = vector.load %arg3[%c0_3, %c0_4] : memref<1x32xf32, #tpu.memory_space<vmem>>, vector<1x32xf32>
    %4 = vector.broadcast %3 : vector<1x32xf32> to vector<128x32xf32>
    %5 = arith.addf %2, %4 : vector<128x32xf32>
    %c0_5 = arith.constant 0 : index
    %c0_6 = arith.constant 0 : index
    %6 = vector.load %arg4[%c0_5, %c0_6] : memref<128x32xf32, #tpu.memory_space<vmem>>, vector<128x32xf32>
    %7 = arith.addf %5, %6 : vector<128x32xf32>
    %c0_7 = arith.constant 0 : index
    %c0_8 = arith.constant 0 : index
    %8 = vector.load %arg5[%c0_7, %c0_8] : memref<128x32xf32, #tpu.memory_space<vmem>>, vector<128x32xf32>
    tpu.vector_store %arg5[%c0_7, %c0_8], %7 {strides = array<i32>} : memref<128x32xf32, #tpu.memory_space<vmem>>, vector<128x32xf32>,
    return
  }
  func.func @transform_0(%arg0: i32) -> (i32, i32) {
    %c0_i32 = arith.constant 0 : i32
    %c0_i32_0 = arith.constant 0 : i32
    return %arg0, %c0_i32 : i32, i32
  }
  func.func @transform_1(%arg0: i32) -> (i32, i32) {
    %c0_i32 = arith.constant 0 : i32
    %c0_i32_0 = arith.constant 0 : i32
    %c0_i32_1 = arith.constant 0 : i32
    return %c0_i32, %c0_i32_0 : i32, i32
  }
  func.func @transform_2(%arg0: i32) -> (i32, i32) {
    %c0_i32 = arith.constant 0 : i32
    %c0_i32_0 = arith.constant 0 : i32
    %c0_i32_1 = arith.constant 0 : i32
    return %c0_i32, %c0_i32_0 : i32, i32
  }
  func.func @transform_3(%arg0: i32) -> (i32, i32) {
    %c0_i32 = arith.constant 0 : i32
    %c0_i32_0 = arith.constant 0 : i32
    return %arg0, %c0_i32 : i32, i32
  }
  func.func @transform_4(%arg0: i32) -> (i32, i32) {
    %c0_i32 = arith.constant 0 : i32
    %c0_i32_0 = arith.constant 0 : i32
    return %arg0, %c0_i32 : i32, i32
  }
}

module attributes {stable_mosaic.version = 11 : i64} {
  func.func @_conv_s1_kernel(%arg0: i32, %arg1: i32, %arg2: i32, %arg3: memref<1x1x10x32xf32, #tpu.memory_space<vmem>>, %arg4: memref<1x3x32x32xf32, #tpu.memory_space<vmem>>, %arg5: memref<1x32xf32, #tpu.memory_space<vmem>>, %arg6: memref<1x1x8x32xf32, #tpu.memory_space<vmem>>, %arg7: memref<8x32xf32, #tpu.memory_space<vmem>>) attributes {dimension_semantics = [#tpu.dimension_semantics<parallel>, #tpu.dimension_semantics<parallel>, #tpu.dimension_semantics<arbitrary>], iteration_bounds = array<i64: 2, 8, 3>, scalar_prefetch = 0 : i64, scratch_operands = 1 : i64, tpu.core_type = #tpu.core_type<tc>, window_params = [{transform_indices = @transform_0, window_bounds = array<i64: 1, 1, 10, 32>}, {transform_indices = @transform_1, window_bounds = array<i64: 1, 3, 32, 32>}, {pipeline_mode = #tpu.pipeline_mode<synchronous>, transform_indices = @transform_2, window_bounds = array<i64: 1, 32>}, {transform_indices = @transform_3, window_bounds = array<i64: 1, 1, 8, 32>}]} {
    %c0_i32 = arith.constant 0 : i32
    %0 = arith.cmpi eq, %arg2, %c0_i32 : i32
    %1 = arith.extui %0 : i1 to i32
    %c0_i32_0 = arith.constant 0 : i32
    %2 = arith.cmpi ne, %1, %c0_i32_0 : i32
    scf.if %2 {
      %cst_21 = arith.constant 0.000000e+00 : f32
      %25 = vector.broadcast %cst_21 : f32 to vector<8x32xf32>
      %c0_22 = arith.constant 0 : index
      %c0_23 = arith.constant 0 : index
      %26 = vector.load %arg7[%c0_22, %c0_23] : memref<8x32xf32, #tpu.memory_space<vmem>>, vector<8x32xf32>
      tpu.vector_store %arg7[%c0_22, %c0_23], %25 {strides = array<i32>} : memref<8x32xf32, #tpu.memory_space<vmem>>, vector<8x32xf32>,
    } else {
    }
    %c0 = arith.constant 0 : index
    %c0_1 = arith.constant 0 : index
    %c0_2 = arith.constant 0 : index
    %c0_3 = arith.constant 0 : index
    %3 = vector.load %arg3[%c0, %c0_1, %c0_2, %c0_3] : memref<1x1x10x32xf32, #tpu.memory_space<vmem>>, vector<1x1x10x32xf32>
    %4 = vector.shape_cast %3 : vector<1x1x10x32xf32> to vector<10x32xf32>
    %c0_4 = arith.constant 0 : index
    %c0_5 = arith.constant 0 : index
    %5 = vector.load %arg7[%c0_4, %c0_5] : memref<8x32xf32, #tpu.memory_space<vmem>>, vector<8x32xf32>
    %6 = vector.extract_strided_slice %4 {offsets = [0, 0], sizes = [8, 32], strides = [1, 1]} : vector<10x32xf32> to vector<8x32xf32>
    %c0_6 = arith.constant 0 : index
    %c0_7 = arith.constant 0 : index
    %c0_8 = arith.constant 0 : index
    %c0_9 = arith.constant 0 : index
    %7 = vector.load %arg4[%c0_6, %c0_7, %c0_8, %c0_9] : memref<1x3x32x32xf32, #tpu.memory_space<vmem>>, vector<1x1x32x32xf32>
    %8 = vector.shape_cast %7 : vector<1x1x32x32xf32> to vector<32x32xf32>
    %cst = arith.constant dense<0.000000e+00> : vector<8x32xf32>
    %9 = tpu.matmul %6, %8, %cst {dimension_numbers = #tpu.dot_dimension_numbers<[1], [0], [0], [1], [0, 0, 1, 1], [], []>} : vector<8x32xf32>, vector<32x32xf32>, vector<8x32xf32> -> vector<8x32xf32>
    %10 = arith.addf %5, %9 : vector<8x32xf32>
    %11 = vector.extract_strided_slice %4 {offsets = [1, 0], sizes = [8, 32], strides = [1, 1]} : vector<10x32xf32> to vector<8x32xf32>
    %c0_10 = arith.constant 0 : index
    %c1 = arith.constant 1 : index
    %c0_11 = arith.constant 0 : index
    %c0_12 = arith.constant 0 : index
    %12 = vector.load %arg4[%c0_10, %c1, %c0_11, %c0_12] : memref<1x3x32x32xf32, #tpu.memory_space<vmem>>, vector<1x1x32x32xf32>
    %13 = vector.shape_cast %12 : vector<1x1x32x32xf32> to vector<32x32xf32>
    %cst_13 = arith.constant dense<0.000000e+00> : vector<8x32xf32>
    %14 = tpu.matmul %11, %13, %cst_13 {dimension_numbers = #tpu.dot_dimension_numbers<[1], [0], [0], [1], [0, 0, 1, 1], [], []>} : vector<8x32xf32>, vector<32x32xf32>, vector<8x32xf32> -> vector<8x32xf32>
    %15 = arith.addf %10, %14 : vector<8x32xf32>
    %16 = vector.extract_strided_slice %4 {offsets = [2, 0], sizes = [8, 32], strides = [1, 1]} : vector<10x32xf32> to vector<8x32xf32>
    %c0_14 = arith.constant 0 : index
    %c2 = arith.constant 2 : index
    %c0_15 = arith.constant 0 : index
    %c0_16 = arith.constant 0 : index
    %17 = vector.load %arg4[%c0_14, %c2, %c0_15, %c0_16] : memref<1x3x32x32xf32, #tpu.memory_space<vmem>>, vector<1x1x32x32xf32>
    %18 = vector.shape_cast %17 : vector<1x1x32x32xf32> to vector<32x32xf32>
    %cst_17 = arith.constant dense<0.000000e+00> : vector<8x32xf32>
    %19 = tpu.matmul %16, %18, %cst_17 {dimension_numbers = #tpu.dot_dimension_numbers<[1], [0], [0], [1], [0, 0, 1, 1], [], []>} : vector<8x32xf32>, vector<32x32xf32>, vector<8x32xf32> -> vector<8x32xf32>
    %20 = arith.addf %15, %19 : vector<8x32xf32>
    %c0_18 = arith.constant 0 : index
    %c0_19 = arith.constant 0 : index
    %21 = vector.load %arg7[%c0_18, %c0_19] : memref<8x32xf32, #tpu.memory_space<vmem>>, vector<8x32xf32>
    tpu.vector_store %arg7[%c0_18, %c0_19], %20 {strides = array<i32>} : memref<8x32xf32, #tpu.memory_space<vmem>>, vector<8x32xf32>,
    %c2_i32 = arith.constant 2 : i32
    %22 = arith.cmpi eq, %arg2, %c2_i32 : i32
    %23 = arith.extui %22 : i1 to i32
    %c0_i32_20 = arith.constant 0 : i32
    %24 = arith.cmpi ne, %23, %c0_i32_20 : i32
    scf.if %24 {
      %c0_21 = arith.constant 0 : index
      %c0_22 = arith.constant 0 : index
      %25 = vector.load %arg7[%c0_21, %c0_22] : memref<8x32xf32, #tpu.memory_space<vmem>>, vector<8x32xf32>
      %c0_23 = arith.constant 0 : index
      %c0_24 = arith.constant 0 : index
      %26 = vector.load %arg5[%c0_23, %c0_24] : memref<1x32xf32, #tpu.memory_space<vmem>>, vector<1x32xf32>
      %27 = vector.broadcast %26 : vector<1x32xf32> to vector<8x32xf32>
      %28 = arith.addf %25, %27 : vector<8x32xf32>
      %cst_25 = arith.constant 0.000000e+00 : f32
      %29 = vector.broadcast %cst_25 : f32 to vector<8x32xf32>
      %30 = arith.maximumf %28, %29 : vector<8x32xf32>
      %c0_26 = arith.constant 0 : index
      %c0_27 = arith.constant 0 : index
      %c0_28 = arith.constant 0 : index
      %c0_29 = arith.constant 0 : index
      %31 = vector.load %arg6[%c0_26, %c0_27, %c0_28, %c0_29] : memref<1x1x8x32xf32, #tpu.memory_space<vmem>>, vector<1x1x8x32xf32>
      %32 = vector.shape_cast %31 : vector<1x1x8x32xf32> to vector<8x32xf32>
      %33 = vector.shape_cast %30 : vector<8x32xf32> to vector<1x1x8x32xf32>
      tpu.vector_store %arg6[%c0_26, %c0_27, %c0_28, %c0_29], %33 {strides = array<i32>} : memref<1x1x8x32xf32, #tpu.memory_space<vmem>>, vector<1x1x8x32xf32>,
    } else {
    }
    return
  }
  func.func @transform_0(%arg0: i32, %arg1: i32, %arg2: i32) -> (i32, i32, i32, i32) {
    %0 = arith.addi %arg1, %arg2 : i32
    %c0_i32 = arith.constant 0 : i32
    %c0_i32_0 = arith.constant 0 : i32
    %c0_i32_1 = arith.constant 0 : i32
    return %arg0, %0, %c0_i32, %c0_i32_0 : i32, i32, i32, i32
  }
  func.func @transform_1(%arg0: i32, %arg1: i32, %arg2: i32) -> (i32, i32, i32, i32) {
    %c0_i32 = arith.constant 0 : i32
    %c0_i32_0 = arith.constant 0 : i32
    %c0_i32_1 = arith.constant 0 : i32
    %c0_i32_2 = arith.constant 0 : i32
    return %arg2, %c0_i32, %c0_i32_0, %c0_i32_1 : i32, i32, i32, i32
  }
  func.func @transform_2(%arg0: i32, %arg1: i32, %arg2: i32) -> (i32, i32) {
    %c0_i32 = arith.constant 0 : i32
    %c0_i32_0 = arith.constant 0 : i32
    %c0_i32_1 = arith.constant 0 : i32
    return %c0_i32, %c0_i32_0 : i32, i32
  }
  func.func @transform_3(%arg0: i32, %arg1: i32, %arg2: i32) -> (i32, i32, i32, i32) {
    %c0_i32 = arith.constant 0 : i32
    %c0_i32_0 = arith.constant 0 : i32
    %c0_i32_1 = arith.constant 0 : i32
    return %arg0, %arg1, %c0_i32, %c0_i32_0 : i32, i32, i32, i32
  }
}

module attributes {stable_mosaic.version = 11 : i64} {
  func.func @_matmul_kernel(%arg0: i32, %arg1: memref<128x36xf32, #tpu.memory_space<vmem>>, %arg2: memref<36x32xf32, #tpu.memory_space<vmem>>, %arg3: memref<1x32xf32, #tpu.memory_space<vmem>>, %arg4: memref<128x32xf32, #tpu.memory_space<vmem>>) attributes {dimension_semantics = [#tpu.dimension_semantics<parallel>], iteration_bounds = array<i64: 1>, scalar_prefetch = 0 : i64, scratch_operands = 0 : i64, tpu.core_type = #tpu.core_type<tc>, window_params = [{transform_indices = @transform_0, window_bounds = array<i64: 128, 36>}, {pipeline_mode = #tpu.pipeline_mode<synchronous>, transform_indices = @transform_1, window_bounds = array<i64: 36, 32>}, {pipeline_mode = #tpu.pipeline_mode<synchronous>, transform_indices = @transform_2, window_bounds = array<i64: 1, 32>}, {transform_indices = @transform_3, window_bounds = array<i64: 128, 32>}]} {
    %c0 = arith.constant 0 : index
    %c0_0 = arith.constant 0 : index
    %0 = vector.load %arg1[%c0, %c0_0] : memref<128x36xf32, #tpu.memory_space<vmem>>, vector<128x36xf32>
    %c0_1 = arith.constant 0 : index
    %c0_2 = arith.constant 0 : index
    %1 = vector.load %arg2[%c0_1, %c0_2] : memref<36x32xf32, #tpu.memory_space<vmem>>, vector<36x32xf32>
    %cst = arith.constant dense<0.000000e+00> : vector<128x32xf32>
    %2 = tpu.matmul %0, %1, %cst {dimension_numbers = #tpu.dot_dimension_numbers<[1], [0], [0], [1], [0, 0, 1, 1], [], []>} : vector<128x36xf32>, vector<36x32xf32>, vector<128x32xf32> -> vector<128x32xf32>
    %c0_3 = arith.constant 0 : index
    %c0_4 = arith.constant 0 : index
    %3 = vector.load %arg3[%c0_3, %c0_4] : memref<1x32xf32, #tpu.memory_space<vmem>>, vector<1x32xf32>
    %4 = vector.broadcast %3 : vector<1x32xf32> to vector<128x32xf32>
    %5 = arith.addf %2, %4 : vector<128x32xf32>
    %cst_5 = arith.constant 0.000000e+00 : f32
    %6 = vector.broadcast %cst_5 : f32 to vector<128x32xf32>
    %7 = arith.maximumf %5, %6 : vector<128x32xf32>
    %c0_6 = arith.constant 0 : index
    %c0_7 = arith.constant 0 : index
    %8 = vector.load %arg4[%c0_6, %c0_7] : memref<128x32xf32, #tpu.memory_space<vmem>>, vector<128x32xf32>
    tpu.vector_store %arg4[%c0_6, %c0_7], %7 {strides = array<i32>} : memref<128x32xf32, #tpu.memory_space<vmem>>, vector<128x32xf32>,
    return
  }
  func.func @transform_0(%arg0: i32) -> (i32, i32) {
    %c0_i32 = arith.constant 0 : i32
    %c0_i32_0 = arith.constant 0 : i32
    return %arg0, %c0_i32 : i32, i32
  }
  func.func @transform_1(%arg0: i32) -> (i32, i32) {
    %c0_i32 = arith.constant 0 : i32
    %c0_i32_0 = arith.constant 0 : i32
    %c0_i32_1 = arith.constant 0 : i32
    return %c0_i32, %c0_i32_0 : i32, i32
  }
  func.func @transform_2(%arg0: i32) -> (i32, i32) {
    %c0_i32 = arith.constant 0 : i32
    %c0_i32_0 = arith.constant 0 : i32
    %c0_i32_1 = arith.constant 0 : i32
    return %c0_i32, %c0_i32_0 : i32, i32
  }
  func.func @transform_3(%arg0: i32) -> (i32, i32) {
    %c0_i32 = arith.constant 0 : i32
    %c0_i32_0 = arith.constant 0 : i32
    return %arg0, %c0_i32 : i32, i32
  }
}

module attributes {stable_mosaic.version = 11 : i64} {
  func.func @_conv_s1_kernel(%arg0: i32, %arg1: i32, %arg2: i32, %arg3: memref<1x1x10x64xf32, #tpu.memory_space<vmem>>, %arg4: memref<1x3x64x64xf32, #tpu.memory_space<vmem>>, %arg5: memref<1x64xf32, #tpu.memory_space<vmem>>, %arg6: memref<1x1x8x64xf32, #tpu.memory_space<vmem>>, %arg7: memref<8x64xf32, #tpu.memory_space<vmem>>) attributes {dimension_semantics = [#tpu.dimension_semantics<parallel>, #tpu.dimension_semantics<parallel>, #tpu.dimension_semantics<arbitrary>], iteration_bounds = array<i64: 2, 8, 3>, scalar_prefetch = 0 : i64, scratch_operands = 1 : i64, tpu.core_type = #tpu.core_type<tc>, window_params = [{transform_indices = @transform_0, window_bounds = array<i64: 1, 1, 10, 64>}, {transform_indices = @transform_1, window_bounds = array<i64: 1, 3, 64, 64>}, {pipeline_mode = #tpu.pipeline_mode<synchronous>, transform_indices = @transform_2, window_bounds = array<i64: 1, 64>}, {transform_indices = @transform_3, window_bounds = array<i64: 1, 1, 8, 64>}]} {
    %c0_i32 = arith.constant 0 : i32
    %0 = arith.cmpi eq, %arg2, %c0_i32 : i32
    %1 = arith.extui %0 : i1 to i32
    %c0_i32_0 = arith.constant 0 : i32
    %2 = arith.cmpi ne, %1, %c0_i32_0 : i32
    scf.if %2 {
      %cst_21 = arith.constant 0.000000e+00 : f32
      %25 = vector.broadcast %cst_21 : f32 to vector<8x64xf32>
      %c0_22 = arith.constant 0 : index
      %c0_23 = arith.constant 0 : index
      %26 = vector.load %arg7[%c0_22, %c0_23] : memref<8x64xf32, #tpu.memory_space<vmem>>, vector<8x64xf32>
      tpu.vector_store %arg7[%c0_22, %c0_23], %25 {strides = array<i32>} : memref<8x64xf32, #tpu.memory_space<vmem>>, vector<8x64xf32>,
    } else {
    }
    %c0 = arith.constant 0 : index
    %c0_1 = arith.constant 0 : index
    %c0_2 = arith.constant 0 : index
    %c0_3 = arith.constant 0 : index
    %3 = vector.load %arg3[%c0, %c0_1, %c0_2, %c0_3] : memref<1x1x10x64xf32, #tpu.memory_space<vmem>>, vector<1x1x10x64xf32>
    %4 = vector.shape_cast %3 : vector<1x1x10x64xf32> to vector<10x64xf32>
    %c0_4 = arith.constant 0 : index
    %c0_5 = arith.constant 0 : index
    %5 = vector.load %arg7[%c0_4, %c0_5] : memref<8x64xf32, #tpu.memory_space<vmem>>, vector<8x64xf32>
    %6 = vector.extract_strided_slice %4 {offsets = [0, 0], sizes = [8, 64], strides = [1, 1]} : vector<10x64xf32> to vector<8x64xf32>
    %c0_6 = arith.constant 0 : index
    %c0_7 = arith.constant 0 : index
    %c0_8 = arith.constant 0 : index
    %c0_9 = arith.constant 0 : index
    %7 = vector.load %arg4[%c0_6, %c0_7, %c0_8, %c0_9] : memref<1x3x64x64xf32, #tpu.memory_space<vmem>>, vector<1x1x64x64xf32>
    %8 = vector.shape_cast %7 : vector<1x1x64x64xf32> to vector<64x64xf32>
    %cst = arith.constant dense<0.000000e+00> : vector<8x64xf32>
    %9 = tpu.matmul %6, %8, %cst {dimension_numbers = #tpu.dot_dimension_numbers<[1], [0], [0], [1], [0, 0, 1, 1], [], []>} : vector<8x64xf32>, vector<64x64xf32>, vector<8x64xf32> -> vector<8x64xf32>
    %10 = arith.addf %5, %9 : vector<8x64xf32>
    %11 = vector.extract_strided_slice %4 {offsets = [1, 0], sizes = [8, 64], strides = [1, 1]} : vector<10x64xf32> to vector<8x64xf32>
    %c0_10 = arith.constant 0 : index
    %c1 = arith.constant 1 : index
    %c0_11 = arith.constant 0 : index
    %c0_12 = arith.constant 0 : index
    %12 = vector.load %arg4[%c0_10, %c1, %c0_11, %c0_12] : memref<1x3x64x64xf32, #tpu.memory_space<vmem>>, vector<1x1x64x64xf32>
    %13 = vector.shape_cast %12 : vector<1x1x64x64xf32> to vector<64x64xf32>
    %cst_13 = arith.constant dense<0.000000e+00> : vector<8x64xf32>
    %14 = tpu.matmul %11, %13, %cst_13 {dimension_numbers = #tpu.dot_dimension_numbers<[1], [0], [0], [1], [0, 0, 1, 1], [], []>} : vector<8x64xf32>, vector<64x64xf32>, vector<8x64xf32> -> vector<8x64xf32>
    %15 = arith.addf %10, %14 : vector<8x64xf32>
    %16 = vector.extract_strided_slice %4 {offsets = [2, 0], sizes = [8, 64], strides = [1, 1]} : vector<10x64xf32> to vector<8x64xf32>
    %c0_14 = arith.constant 0 : index
    %c2 = arith.constant 2 : index
    %c0_15 = arith.constant 0 : index
    %c0_16 = arith.constant 0 : index
    %17 = vector.load %arg4[%c0_14, %c2, %c0_15, %c0_16] : memref<1x3x64x64xf32, #tpu.memory_space<vmem>>, vector<1x1x64x64xf32>
    %18 = vector.shape_cast %17 : vector<1x1x64x64xf32> to vector<64x64xf32>
    %cst_17 = arith.constant dense<0.000000e+00> : vector<8x64xf32>
    %19 = tpu.matmul %16, %18, %cst_17 {dimension_numbers = #tpu.dot_dimension_numbers<[1], [0], [0], [1], [0, 0, 1, 1], [], []>} : vector<8x64xf32>, vector<64x64xf32>, vector<8x64xf32> -> vector<8x64xf32>
    %20 = arith.addf %15, %19 : vector<8x64xf32>
    %c0_18 = arith.constant 0 : index
    %c0_19 = arith.constant 0 : index
    %21 = vector.load %arg7[%c0_18, %c0_19] : memref<8x64xf32, #tpu.memory_space<vmem>>, vector<8x64xf32>
    tpu.vector_store %arg7[%c0_18, %c0_19], %20 {strides = array<i32>} : memref<8x64xf32, #tpu.memory_space<vmem>>, vector<8x64xf32>,
    %c2_i32 = arith.constant 2 : i32
    %22 = arith.cmpi eq, %arg2, %c2_i32 : i32
    %23 = arith.extui %22 : i1 to i32
    %c0_i32_20 = arith.constant 0 : i32
    %24 = arith.cmpi ne, %23, %c0_i32_20 : i32
    scf.if %24 {
      %c0_21 = arith.constant 0 : index
      %c0_22 = arith.constant 0 : index
      %25 = vector.load %arg7[%c0_21, %c0_22] : memref<8x64xf32, #tpu.memory_space<vmem>>, vector<8x64xf32>
      %c0_23 = arith.constant 0 : index
      %c0_24 = arith.constant 0 : index
      %26 = vector.load %arg5[%c0_23, %c0_24] : memref<1x64xf32, #tpu.memory_space<vmem>>, vector<1x64xf32>
      %27 = vector.broadcast %26 : vector<1x64xf32> to vector<8x64xf32>
      %28 = arith.addf %25, %27 : vector<8x64xf32>
      %cst_25 = arith.constant 0.000000e+00 : f32
      %29 = vector.broadcast %cst_25 : f32 to vector<8x64xf32>
      %30 = arith.maximumf %28, %29 : vector<8x64xf32>
      %c0_26 = arith.constant 0 : index
      %c0_27 = arith.constant 0 : index
      %c0_28 = arith.constant 0 : index
      %c0_29 = arith.constant 0 : index
      %31 = vector.load %arg6[%c0_26, %c0_27, %c0_28, %c0_29] : memref<1x1x8x64xf32, #tpu.memory_space<vmem>>, vector<1x1x8x64xf32>
      %32 = vector.shape_cast %31 : vector<1x1x8x64xf32> to vector<8x64xf32>
      %33 = vector.shape_cast %30 : vector<8x64xf32> to vector<1x1x8x64xf32>
      tpu.vector_store %arg6[%c0_26, %c0_27, %c0_28, %c0_29], %33 {strides = array<i32>} : memref<1x1x8x64xf32, #tpu.memory_space<vmem>>, vector<1x1x8x64xf32>,
    } else {
    }
    return
  }
  func.func @transform_0(%arg0: i32, %arg1: i32, %arg2: i32) -> (i32, i32, i32, i32) {
    %0 = arith.addi %arg1, %arg2 : i32
    %c0_i32 = arith.constant 0 : i32
    %c0_i32_0 = arith.constant 0 : i32
    %c0_i32_1 = arith.constant 0 : i32
    return %arg0, %0, %c0_i32, %c0_i32_0 : i32, i32, i32, i32
  }
  func.func @transform_1(%arg0: i32, %arg1: i32, %arg2: i32) -> (i32, i32, i32, i32) {
    %c0_i32 = arith.constant 0 : i32
    %c0_i32_0 = arith.constant 0 : i32
    %c0_i32_1 = arith.constant 0 : i32
    %c0_i32_2 = arith.constant 0 : i32
    return %arg2, %c0_i32, %c0_i32_0, %c0_i32_1 : i32, i32, i32, i32
  }
  func.func @transform_2(%arg0: i32, %arg1: i32, %arg2: i32) -> (i32, i32) {
    %c0_i32 = arith.constant 0 : i32
    %c0_i32_0 = arith.constant 0 : i32
    %c0_i32_1 = arith.constant 0 : i32
    return %c0_i32, %c0_i32_0 : i32, i32
  }
  func.func @transform_3(%arg0: i32, %arg1: i32, %arg2: i32) -> (i32, i32, i32, i32) {
    %c0_i32 = arith.constant 0 : i32
    %c0_i32_0 = arith.constant 0 : i32
    %c0_i32_1 = arith.constant 0 : i32
    return %arg0, %arg1, %c0_i32, %c0_i32_0 : i32, i32, i32, i32
  }
}

module attributes {stable_mosaic.version = 11 : i64} {
  func.func @_conv_s1_kernel(%arg0: i32, %arg1: i32, %arg2: i32, %arg3: memref<1x1x10x64xf32, #tpu.memory_space<vmem>>, %arg4: memref<1x3x64x19xf32, #tpu.memory_space<vmem>>, %arg5: memref<1x19xf32, #tpu.memory_space<vmem>>, %arg6: memref<1x1x8x19xf32, #tpu.memory_space<vmem>>, %arg7: memref<8x19xf32, #tpu.memory_space<vmem>>) attributes {dimension_semantics = [#tpu.dimension_semantics<parallel>, #tpu.dimension_semantics<parallel>, #tpu.dimension_semantics<arbitrary>], iteration_bounds = array<i64: 2, 8, 3>, scalar_prefetch = 0 : i64, scratch_operands = 1 : i64, tpu.core_type = #tpu.core_type<tc>, window_params = [{transform_indices = @transform_0, window_bounds = array<i64: 1, 1, 10, 64>}, {transform_indices = @transform_1, window_bounds = array<i64: 1, 3, 64, 19>}, {pipeline_mode = #tpu.pipeline_mode<synchronous>, transform_indices = @transform_2, window_bounds = array<i64: 1, 19>}, {transform_indices = @transform_3, window_bounds = array<i64: 1, 1, 8, 19>}]} {
    %c0_i32 = arith.constant 0 : i32
    %0 = arith.cmpi eq, %arg2, %c0_i32 : i32
    %1 = arith.extui %0 : i1 to i32
    %c0_i32_0 = arith.constant 0 : i32
    %2 = arith.cmpi ne, %1, %c0_i32_0 : i32
    scf.if %2 {
      %cst_21 = arith.constant 0.000000e+00 : f32
      %25 = vector.broadcast %cst_21 : f32 to vector<8x19xf32>
      %c0_22 = arith.constant 0 : index
      %c0_23 = arith.constant 0 : index
      %26 = vector.load %arg7[%c0_22, %c0_23] : memref<8x19xf32, #tpu.memory_space<vmem>>, vector<8x19xf32>
      tpu.vector_store %arg7[%c0_22, %c0_23], %25 {strides = array<i32>} : memref<8x19xf32, #tpu.memory_space<vmem>>, vector<8x19xf32>,
    } else {
    }
    %c0 = arith.constant 0 : index
    %c0_1 = arith.constant 0 : index
    %c0_2 = arith.constant 0 : index
    %c0_3 = arith.constant 0 : index
    %3 = vector.load %arg3[%c0, %c0_1, %c0_2, %c0_3] : memref<1x1x10x64xf32, #tpu.memory_space<vmem>>, vector<1x1x10x64xf32>
    %4 = vector.shape_cast %3 : vector<1x1x10x64xf32> to vector<10x64xf32>
    %c0_4 = arith.constant 0 : index
    %c0_5 = arith.constant 0 : index
    %5 = vector.load %arg7[%c0_4, %c0_5] : memref<8x19xf32, #tpu.memory_space<vmem>>, vector<8x19xf32>
    %6 = vector.extract_strided_slice %4 {offsets = [0, 0], sizes = [8, 64], strides = [1, 1]} : vector<10x64xf32> to vector<8x64xf32>
    %c0_6 = arith.constant 0 : index
    %c0_7 = arith.constant 0 : index
    %c0_8 = arith.constant 0 : index
    %c0_9 = arith.constant 0 : index
    %7 = vector.load %arg4[%c0_6, %c0_7, %c0_8, %c0_9] : memref<1x3x64x19xf32, #tpu.memory_space<vmem>>, vector<1x1x64x19xf32>
    %8 = vector.shape_cast %7 : vector<1x1x64x19xf32> to vector<64x19xf32>
    %cst = arith.constant dense<0.000000e+00> : vector<8x19xf32>
    %9 = tpu.matmul %6, %8, %cst {dimension_numbers = #tpu.dot_dimension_numbers<[1], [0], [0], [1], [0, 0, 1, 1], [], []>} : vector<8x64xf32>, vector<64x19xf32>, vector<8x19xf32> -> vector<8x19xf32>
    %10 = arith.addf %5, %9 : vector<8x19xf32>
    %11 = vector.extract_strided_slice %4 {offsets = [1, 0], sizes = [8, 64], strides = [1, 1]} : vector<10x64xf32> to vector<8x64xf32>
    %c0_10 = arith.constant 0 : index
    %c1 = arith.constant 1 : index
    %c0_11 = arith.constant 0 : index
    %c0_12 = arith.constant 0 : index
    %12 = vector.load %arg4[%c0_10, %c1, %c0_11, %c0_12] : memref<1x3x64x19xf32, #tpu.memory_space<vmem>>, vector<1x1x64x19xf32>
    %13 = vector.shape_cast %12 : vector<1x1x64x19xf32> to vector<64x19xf32>
    %cst_13 = arith.constant dense<0.000000e+00> : vector<8x19xf32>
    %14 = tpu.matmul %11, %13, %cst_13 {dimension_numbers = #tpu.dot_dimension_numbers<[1], [0], [0], [1], [0, 0, 1, 1], [], []>} : vector<8x64xf32>, vector<64x19xf32>, vector<8x19xf32> -> vector<8x19xf32>
    %15 = arith.addf %10, %14 : vector<8x19xf32>
    %16 = vector.extract_strided_slice %4 {offsets = [2, 0], sizes = [8, 64], strides = [1, 1]} : vector<10x64xf32> to vector<8x64xf32>
    %c0_14 = arith.constant 0 : index
    %c2 = arith.constant 2 : index
    %c0_15 = arith.constant 0 : index
    %c0_16 = arith.constant 0 : index
    %17 = vector.load %arg4[%c0_14, %c2, %c0_15, %c0_16] : memref<1x3x64x19xf32, #tpu.memory_space<vmem>>, vector<1x1x64x19xf32>
    %18 = vector.shape_cast %17 : vector<1x1x64x19xf32> to vector<64x19xf32>
    %cst_17 = arith.constant dense<0.000000e+00> : vector<8x19xf32>
    %19 = tpu.matmul %16, %18, %cst_17 {dimension_numbers = #tpu.dot_dimension_numbers<[1], [0], [0], [1], [0, 0, 1, 1], [], []>} : vector<8x64xf32>, vector<64x19xf32>, vector<8x19xf32> -> vector<8x19xf32>
    %20 = arith.addf %15, %19 : vector<8x19xf32>
    %c0_18 = arith.constant 0 : index
    %c0_19 = arith.constant 0 : index
    %21 = vector.load %arg7[%c0_18, %c0_19] : memref<8x19xf32, #tpu.memory_space<vmem>>, vector<8x19xf32>
    tpu.vector_store %arg7[%c0_18, %c0_19], %20 {strides = array<i32>} : memref<8x19xf32, #tpu.memory_space<vmem>>, vector<8x19xf32>,
    %c2_i32 = arith.constant 2 : i32
    %22 = arith.cmpi eq, %arg2, %c2_i32 : i32
    %23 = arith.extui %22 : i1 to i32
    %c0_i32_20 = arith.constant 0 : i32
    %24 = arith.cmpi ne, %23, %c0_i32_20 : i32
    scf.if %24 {
      %c0_21 = arith.constant 0 : index
      %c0_22 = arith.constant 0 : index
      %25 = vector.load %arg7[%c0_21, %c0_22] : memref<8x19xf32, #tpu.memory_space<vmem>>, vector<8x19xf32>
      %c0_23 = arith.constant 0 : index
      %c0_24 = arith.constant 0 : index
      %26 = vector.load %arg5[%c0_23, %c0_24] : memref<1x19xf32, #tpu.memory_space<vmem>>, vector<1x19xf32>
      %27 = vector.broadcast %26 : vector<1x19xf32> to vector<8x19xf32>
      %28 = arith.addf %25, %27 : vector<8x19xf32>
      %c0_25 = arith.constant 0 : index
      %c0_26 = arith.constant 0 : index
      %c0_27 = arith.constant 0 : index
      %c0_28 = arith.constant 0 : index
      %29 = vector.load %arg6[%c0_25, %c0_26, %c0_27, %c0_28] : memref<1x1x8x19xf32, #tpu.memory_space<vmem>>, vector<1x1x8x19xf32>
      %30 = vector.shape_cast %29 : vector<1x1x8x19xf32> to vector<8x19xf32>
      %31 = vector.shape_cast %28 : vector<8x19xf32> to vector<1x1x8x19xf32>
      tpu.vector_store %arg6[%c0_25, %c0_26, %c0_27, %c0_28], %31 {strides = array<i32>} : memref<1x1x8x19xf32, #tpu.memory_space<vmem>>, vector<1x1x8x19xf32>,
    } else {
    }
    return
  }
  func.func @transform_0(%arg0: i32, %arg1: i32, %arg2: i32) -> (i32, i32, i32, i32) {
    %0 = arith.addi %arg1, %arg2 : i32
    %c0_i32 = arith.constant 0 : i32
    %c0_i32_0 = arith.constant 0 : i32
    %c0_i32_1 = arith.constant 0 : i32
    return %arg0, %0, %c0_i32, %c0_i32_0 : i32, i32, i32, i32
  }
  func.func @transform_1(%arg0: i32, %arg1: i32, %arg2: i32) -> (i32, i32, i32, i32) {
    %c0_i32 = arith.constant 0 : i32
    %c0_i32_0 = arith.constant 0 : i32
    %c0_i32_1 = arith.constant 0 : i32
    %c0_i32_2 = arith.constant 0 : i32
    return %arg2, %c0_i32, %c0_i32_0, %c0_i32_1 : i32, i32, i32, i32
  }
  func.func @transform_2(%arg0: i32, %arg1: i32, %arg2: i32) -> (i32, i32) {
    %c0_i32 = arith.constant 0 : i32
    %c0_i32_0 = arith.constant 0 : i32
    %c0_i32_1 = arith.constant 0 : i32
    return %c0_i32, %c0_i32_0 : i32, i32
  }
  func.func @transform_3(%arg0: i32, %arg1: i32, %arg2: i32) -> (i32, i32, i32, i32) {
    %c0_i32 = arith.constant 0 : i32
    %c0_i32_0 = arith.constant 0 : i32
    %c0_i32_1 = arith.constant 0 : i32
    return %arg0, %arg1, %c0_i32, %c0_i32_0 : i32, i32, i32, i32
  }
}

module attributes {stable_mosaic.version = 11 : i64} {
  func.func @_matmul_kernel(%arg0: i32, %arg1: memref<8x64xf32, #tpu.memory_space<vmem>>, %arg2: memref<64x50xf32, #tpu.memory_space<vmem>>, %arg3: memref<1x50xf32, #tpu.memory_space<vmem>>, %arg4: memref<8x50xf32, #tpu.memory_space<vmem>>) attributes {dimension_semantics = [#tpu.dimension_semantics<parallel>], iteration_bounds = array<i64: 1>, scalar_prefetch = 0 : i64, scratch_operands = 0 : i64, tpu.core_type = #tpu.core_type<tc>, window_params = [{transform_indices = @transform_0, window_bounds = array<i64: 8, 64>}, {pipeline_mode = #tpu.pipeline_mode<synchronous>, transform_indices = @transform_1, window_bounds = array<i64: 64, 50>}, {pipeline_mode = #tpu.pipeline_mode<synchronous>, transform_indices = @transform_2, window_bounds = array<i64: 1, 50>}, {transform_indices = @transform_3, window_bounds = array<i64: 8, 50>}]} {
    %c0 = arith.constant 0 : index
    %c0_0 = arith.constant 0 : index
    %0 = vector.load %arg1[%c0, %c0_0] : memref<8x64xf32, #tpu.memory_space<vmem>>, vector<8x64xf32>
    %c0_1 = arith.constant 0 : index
    %c0_2 = arith.constant 0 : index
    %1 = vector.load %arg2[%c0_1, %c0_2] : memref<64x50xf32, #tpu.memory_space<vmem>>, vector<64x50xf32>
    %cst = arith.constant dense<0.000000e+00> : vector<8x50xf32>
    %2 = tpu.matmul %0, %1, %cst {dimension_numbers = #tpu.dot_dimension_numbers<[1], [0], [0], [1], [0, 0, 1, 1], [], []>} : vector<8x64xf32>, vector<64x50xf32>, vector<8x50xf32> -> vector<8x50xf32>
    %c0_3 = arith.constant 0 : index
    %c0_4 = arith.constant 0 : index
    %3 = vector.load %arg3[%c0_3, %c0_4] : memref<1x50xf32, #tpu.memory_space<vmem>>, vector<1x50xf32>
    %4 = vector.broadcast %3 : vector<1x50xf32> to vector<8x50xf32>
    %5 = arith.addf %2, %4 : vector<8x50xf32>
    %c0_5 = arith.constant 0 : index
    %c0_6 = arith.constant 0 : index
    %6 = vector.load %arg4[%c0_5, %c0_6] : memref<8x50xf32, #tpu.memory_space<vmem>>, vector<8x50xf32>
    tpu.vector_store %arg4[%c0_5, %c0_6], %5 {strides = array<i32>} : memref<8x50xf32, #tpu.memory_space<vmem>>, vector<8x50xf32>,
    return
  }
  func.func @transform_0(%arg0: i32) -> (i32, i32) {
    %c0_i32 = arith.constant 0 : i32
    %c0_i32_0 = arith.constant 0 : i32
    return %arg0, %c0_i32 : i32, i32
  }
  func.func @transform_1(%arg0: i32) -> (i32, i32) {
    %c0_i32 = arith.constant 0 : i32
    %c0_i32_0 = arith.constant 0 : i32
    %c0_i32_1 = arith.constant 0 : i32
    return %c0_i32, %c0_i32_0 : i32, i32
  }
  func.func @transform_2(%arg0: i32) -> (i32, i32) {
    %c0_i32 = arith.constant 0 : i32
    %c0_i32_0 = arith.constant 0 : i32
    %c0_i32_1 = arith.constant 0 : i32
    return %c0_i32, %c0_i32_0 : i32, i32
  }
  func.func @transform_3(%arg0: i32) -> (i32, i32) {
    %c0_i32 = arith.constant 0 : i32
    %c0_i32_0 = arith.constant 0 : i32
    return %arg0, %c0_i32 : i32, i32
  }
}

</mosaic_0001>

<llo_original>
// kernel: famenet_forward.17
$region0: #{famenet_forward.17}
  #allocation0 [shape = 'u32[]', space=smem, size = 0x4, offset = 0x4, fixed_abs, tag = 'smem constant byte address 0x4 - core index']
  #allocation1 [shape = 'u32[144,128]{1,0:T(1,128)}', space=vmem, size = 0x12000, scoped, tag = 'internal scratch']
  #allocation2 [shape = 'f32[8,16]{1,0:T(8,128)}', space=vmem, size = 0x1000, scoped, tag = 'scratch operand']
  %s0 = inlined_call_operand.vmem [shape: f32[2,10,10,16], index: 0, kind: input, shape index: {}]
  %s1 = inlined_call_operand.vmem [shape: f32[3,3,16,16], index: 1, kind: input, shape index: {}]
  %s2 = inlined_call_operand.vmem [shape: f32[1,16], index: 2, kind: input, shape index: {}]
  %s3 = inlined_call_operand.vmem [shape: f32[2,8,8,16], index: 3, kind: output, shape index: {}]
  %s4 = sld [smem:[#allocation0]]
  $region53: #{famenet_forward.17} parent=0
    _
  %s6 = ssub.s32 1, %s4
  %s7 = scalar_select 0, %s6, %s4
  loop: start=0, step=1, limit=50
  $region2: #{famenet_forward.17} parent=0 // loop_pre_header
    _
  $region3: #{famenet_forward.17} parent=0 // loop_header
    %s9 = sphi 0, %s13
    %p10 = scmp.ge.s32.totalorder %s9, 50
    %s16 = sphi 0, %s35
    %s17 = sphi 0, %s31
    %s18 = sphi 0, %s27
    %s19 = sphi 0, %s16
    %s20 = sphi 0, %s17
    %s21 = sphi 0, %s18
    %s22 = sphi 0, %s19
    %s23 = sphi 0, %s20
    %s24 = sphi 0, %s21
    %s42 = sphi 0, %s44
    %s45 = sphi 0, %s42
    %s46 = sphi 0, %s45
    %s62 = sphi 0, %s46
    %s68 = sphi 0, %s70
    %s71 = sphi 0, %s68
    %s72 = sphi 0, %s71
    %s88 = sphi 0, %s72
    %s92 = sphi 0, %s92
    %s94 = sphi 0, %s92
    %s95 = sphi 0, %s94
    %s109 = sphi 0, %s95
    %s117 = sphi 0, %s119
    %s120 = sphi 0, %s117
    %s121 = sphi 0, %s120
    %s137 = sphi 0, %s121
  $region4: #{famenet_forward.17} parent=0 // loop_header_branch
    %12 = sbr.rel (%p10) target = $region8
  $region5: #{famenet_forward.17} parent=0 // loop_body
    %s14 = ssub.s32 %s9, 1
    %s15 = ssub.s32 %s9, 2
    %s25 = sadd.s32 1, %s18
    %p26 = scmp.ge.s32.totalorder %s25, 3
    %s27 = scalar_select %p26, 0, %s25
    %s28 = sadd.s32 1, %s17
    %s29 = scalar_select %p26, %s28, %s17
    %p30 = scmp.ge.s32.totalorder %s29, 8
    %s31 = scalar_select %p30, 0, %s29
    %s32 = sadd.s32 1, %s16
    %s33 = scalar_select %p30, %s32, %s16
    %p34 = scmp.ge.s32.totalorder %s33, 2
    %s35 = scalar_select %p34, 0, %s33
    %s36 = sadd.s32 %s17, %s18
    %s37 = sadd.s32 %s31, %s27
    %s38 = ssub.s32 %s16, %s35
    %s39 = ssub.s32 %s36, %s37
    %s40 = sor.u32 %s38, %s39
    %p41 = scmp.eq.s32.totalorder %s40, 0
    %s43 = sadd.s32 %s42, 1
    %s44 = scalar_select %p41, %s42, %s43
    %p47 = pneg %p41
    %p48 = scmp.eq.s32.totalorder %s9, 47
    %p49 = por %p47, %p48
    %p50 = scmp.ne.s32.totalorder %s42, %s45
    %p51 = scmp.eq.s32.totalorder %s9, 0
    %p52 = por %p50, %p51
    %p53 = scmp.ne.s32.totalorder %s42, %s45
    %p54 = scmp.eq.s32.totalorder %s14, 47
    %p55 = por %p53, %p54
    %p56 = scmp.ne.s32.totalorder %s45, %s46
    %p57 = scmp.eq.s32.totalorder %s14, 0
    %p58 = por %p56, %p57
    %p59 = scmp.ne.s32.totalorder %s45, %s46
    %p60 = scmp.eq.s32.totalorder %s15, 47
    %p61 = por %p59, %p60
    %p63 = scmp.ne.s32.totalorder %s46, %s62
    %p64 = scmp.eq.s32.totalorder %s15, 0
    %p65 = por %p63, %p64
    %s66 = ssub.s32 %s18, %s27
    %p67 = scmp.eq.s32.totalorder %s66, 0
    %s69 = sadd.s32 %s68, 1
    %s70 = scalar_select %p67, %s68, %s69
    %p73 = pneg %p67
    %p74 = scmp.eq.s32.totalorder %s9, 47
    %p75 = por %p73, %p74
    %p76 = scmp.ne.s32.totalorder %s68, %s71
    %p77 = scmp.eq.s32.totalorder %s9, 0
    %p78 = por %p76, %p77
    %p79 = scmp.ne.s32.totalorder %s68, %s71
    %p80 = scmp.eq.s32.totalorder %s14, 47
    %p81 = por %p79, %p80
    %p82 = scmp.ne.s32.totalorder %s71, %s72
    %p83 = scmp.eq.s32.totalorder %s14, 0
    %p84 = por %p82, %p83
    %p85 = scmp.ne.s32.totalorder %s71, %s72
    %p86 = scmp.eq.s32.totalorder %s15, 47
    %p87 = por %p85, %p86
    %p89 = scmp.ne.s32.totalorder %s72, %s88
    %p90 = scmp.eq.s32.totalorder %s15, 0
    %p91 = por %p89, %p90
    %s93 = sadd.s32 %s92, 1
    %p96 = scmp.eq.s32.totalorder %s9, 47
    %p97 = scmp.ne.s32.totalorder %s92, %s94
    %p98 = scmp.eq.s32.totalorder %s9, 0
    %p99 = por %p97, %p98
    %p100 = scmp.ne.s32.totalorder %s92, %s94
    %p101 = scmp.eq.s32.totalorder %s14, 47
    %p102 = por %p100, %p101
    %p103 = scmp.ne.s32.totalorder %s94, %s95
    %p104 = scmp.eq.s32.totalorder %s14, 0
    %p105 = por %p103, %p104
    %p106 = scmp.ne.s32.totalorder %s94, %s95
    %p107 = scmp.eq.s32.totalorder %s15, 47
    %p108 = por %p106, %p107
    %p110 = scmp.ne.s32.totalorder %s95, %s109
    %p111 = scmp.eq.s32.totalorder %s15, 0
    %p112 = por %p110, %p111
    %s113 = ssub.s32 %s16, %s35
    %s114 = ssub.s32 %s17, %s31
    %s115 = sor.u32 %s113, %s114
    %p116 = scmp.eq.s32.totalorder %s115, 0
    %s118 = sadd.s32 %s117, 1
    %s119 = scalar_select %p116, %s117, %s118
    %p122 = pneg %p116
    %p123 = scmp.eq.s32.totalorder %s9, 47
    %p124 = por %p122, %p123
    %p125 = scmp.ne.s32.totalorder %s117, %s120
    %p126 = scmp.eq.s32.totalorder %s9, 0
    %p127 = por %p125, %p126
    %p128 = scmp.ne.s32.totalorder %s117, %s120
    %p129 = scmp.eq.s32.totalorder %s14, 47
    %p130 = por %p128, %p129
    %p131 = scmp.ne.s32.totalorder %s120, %s121
    %p132 = scmp.eq.s32.totalorder %s14, 0
    %p133 = por %p131, %p132
    %p134 = scmp.ne.s32.totalorder %s120, %s121
    %p135 = scmp.eq.s32.totalorder %s15, 47
    %p136 = por %p134, %p135
    %p138 = scmp.ne.s32.totalorder %s121, %s137
    %p139 = scmp.eq.s32.totalorder %s15, 0
    %p140 = por %p138, %p139
    %p141 = scmp.le.s32.totalorder 1, %s9
    %p142 = scmp.lt.s32.totalorder %s9, 49
    %p143 = pnand %p141, %p142
    %p144 = pneg %p143
    // Predicated region
    $region9: #{famenet_forward.17} parent=5 // pred_check
      _
    $region10: #{famenet_forward.17} parent=5 // pred_check_branch
      %146 = sbr.rel (%p143) target = $region12
    $region11: #{famenet_forward.17} parent=5 // pred_region
      %s147 = ssub.s32 %s9, 1
      // Predicated region
      $region13: #{famenet_forward.17} parent=11 // pred_check
        %p148 = pneg %p105
      $region14: #{famenet_forward.17} parent=11 // pred_check_branch
        %150 = sbr.rel (%p148) target = $region16
      $region15: #{famenet_forward.17} parent=11 // pred_region
        _
      $region16: #{famenet_forward.17} parent=11 // pred_fallthru
        _
    $region12: #{famenet_forward.17} parent=5 // pred_fallthru
      _
    %p151 = scmp.lt.s32.totalorder %s9, 48
    // Predicated region
    $region17: #{famenet_forward.17} parent=5 // pred_check
      %p152 = pneg %p151
    $region18: #{famenet_forward.17} parent=5 // pred_check_branch
      %154 = sbr.rel (%p152) target = $region20
    $region19: #{famenet_forward.17} parent=5 // pred_region
      // Predicated region
      $region21: #{famenet_forward.17} parent=19 // pred_check
        %p155 = pneg %p52
      $region22: #{famenet_forward.17} parent=19 // pred_check_branch
        %157 = sbr.rel (%p155) target = $region24
      $region23: #{famenet_forward.17} parent=19 // pred_region
        %s158 = sadd.s32 %s17, %s18
        %p159 = scmp.lt.s32.totalorder %s16, 1
        %s160 = scalar_select %p159, %s16, 1
        %p161 = scmp.lt.s32.totalorder %s158, 9
        %s162 = scalar_select %p161, %s158, 9
        %s163 = smul.addr %s162, 2
        %s164 = smul.addr %s160, 20
        %s165 = sadd.s32 %s163, %s164
        %s166 = smul.addr %s165, 8
        %s167 = scalar_lea.vmem %s0, %s166
        %s168 = sadd.s32 %s17, %s18
      $region24: #{famenet_forward.17} parent=19 // pred_fallthru
        _
      // Predicated region
      $region25: #{famenet_forward.17} parent=19 // pred_check
        %p169 = pneg %p78
      $region26: #{famenet_forward.17} parent=19 // pred_check_branch
        %171 = sbr.rel (%p169) target = $region28
      $region27: #{famenet_forward.17} parent=19 // pred_region
        %p172 = scmp.lt.s32.totalorder %s18, 2
        %s173 = scalar_select %p172, %s18, 2
        %s174 = smul.addr %s173, 6
        %s175 = smul.addr %s174, 8
        %s176 = scalar_lea.vmem %s1, %s175
      $region28: #{famenet_forward.17} parent=19 // pred_fallthru
        _
    $region20: #{famenet_forward.17} parent=5 // pred_fallthru
      _
    %p177 = scmp.le.s32.totalorder 1, %s9
    %p178 = scmp.lt.s32.totalorder %s9, 49
    %p179 = pnand %p177, %p178
    %p180 = pneg %p179
    // Predicated region
    $region29: #{famenet_forward.17} parent=5 // pred_check
      _
    $region30: #{famenet_forward.17} parent=5 // pred_check_branch
      %182 = sbr.rel (%p179) target = $region32
    $region31: #{famenet_forward.17} parent=5 // pred_region
      %s183 = ssub.s32 %s9, 1
      %s184 = sadd.s32 %s20, %s21
      %p185 = scmp.lt.s32.totalorder %s19, 1
      %s186 = scalar_select %p185, %s19, 1
      %p187 = scmp.lt.s32.totalorder %s184, 9
      %s188 = scalar_select %p187, %s184, 9
      %s189 = smul.addr %s188, 2
      %s190 = smul.addr %s186, 20
      %s191 = sadd.s32 %s189, %s190
      %s192 = smul.addr %s191, 8
      %s193 = scalar_lea.vmem %s0, %s192
      %p194 = pneg %p58
      %p195 = pneg %p55
      %p196 = scmp.lt.s32.totalorder %s21, 2
      %s197 = scalar_select %p196, %s21, 2
      %s198 = smul.addr %s197, 6
      %s199 = smul.addr %s198, 8
      %s200 = scalar_lea.vmem %s1, %s199
      %p201 = pneg %p84
      %p202 = pneg %p81
      %p203 = pneg %p105
      %p204 = pneg %p102
      %p205 = pneg %p133
      %p206 = pneg %p130
      %p207 = scmp.lt.s32.totalorder %s19, 1
      %s208 = scalar_select %p207, %s19, 1
      %p209 = scmp.lt.s32.totalorder %s20, 7
      %s210 = scalar_select %p209, %s20, 7
      %s211 = smul.addr %s208, 8
      %s212 = sadd.s32 %s210, %s211
      %s213 = smul.addr %s212, 8
      %s214 = scalar_lea.vmem %s3, %s213
      %s215 = sadd.s32 %s20, %s21
      %p216 = scmp.lt.s32.totalorder %s19, 1
      %s217 = scalar_select %p216, %s19, 1
      %p218 = scmp.lt.s32.totalorder %s215, 9
      %s219 = scalar_select %p218, %s215, 9
      %s220 = smul.addr %s219, 2
      %s221 = smul.addr %s217, 20
      %s222 = sadd.s32 %s220, %s221
      %s223 = smul.addr %s222, 8
      %s224 = scalar_lea.vmem %s0, %s223
      %s225 = sadd.s32 %s20, %s21
      %p226 = scmp.lt.s32.totalorder %s21, 2
      %s227 = scalar_select %p226, %s21, 2
      %s228 = smul.addr %s227, 6
      %s229 = smul.addr %s228, 8
      %s230 = scalar_lea.vmem %s1, %s229
      %p231 = scmp.lt.s32.totalorder %s19, 1
      %s232 = scalar_select %p231, %s19, 1
      %p233 = scmp.lt.s32.totalorder %s20, 7
      %s234 = scalar_select %p233, %s20, 7
      %s235 = smul.addr %s232, 8
      %s236 = sadd.s32 %s234, %s235
      %s237 = smul.addr %s236, 8
      %s238 = scalar_lea.vmem %s3, %s237
      %p239 = scmp.eq.s32.totalorder %s21, 0
      // Predicated region
      $region33: #{famenet_forward.17} parent=31 // pred_check
        %p240 = pneg %p239
      $region34: #{famenet_forward.17} parent=31 // pred_check_branch
        %242 = sbr.rel (%p240) target = $region36
      $region35: #{famenet_forward.17} parent=31 // pred_region
        %vm243 = vcmask 130048
        %244 = vst.msk [vmem:[#allocation2] sm:$0xff] %vm243, 0.0
      $region36: #{famenet_forward.17} parent=31 // pred_fallthru
        _
      %v245 = vld [vmem:[%s224] sm:$0xff]
      %v246 = vld [vmem:[%s224 + $0x8] sm:$0x3]
      %v247 = vld [vmem:[#allocation2] sm:$0xff]
      %v248 = vld [vmem:[%s230] sm:$0xff]
      %v249 = vld [vmem:[%s230 + $0x8] sm:$0xff]
      %vm250 = vcmask 130048
      %v252 = vsel %vm250, %v245, 0
      %254 = vmatprep.subr.mxu0 0.0
      %255 = vmatpush1.msra.mxu0 0.0
      %256 = vmatprep.subr.mxu0 0.0
      %257 = vmatpush1.msra.mxu0 0.0
      %258 = vmatprep.subr.mxu0 0.0
      %259 = vmatpush1.msra.mxu0 0.0
      %260 = vmatprep.subr.mxu0 0.0
      %261 = vmatpush1.msra.mxu0 0.0
      %262 = vmatprep.subr.mxu0 0.0
      %263 = vmatpush1.msra.mxu0 0.0
      %264 = vmatprep.subr.mxu0 0.0
      %265 = vmatpush1.msra.mxu0 0.0
      %266 = vmatprep.subr.mxu0 0.0
      %267 = vmatpush1.msra.mxu0 0.0
      %268 = vmatprep.subr.mxu0 0.0
      %269 = vmatpush1.msra.mxu0 0.0
      %270 = vmatprep.subr.mxu0 0.0
      %271 = vmatpush1.msra.mxu0 0.0
      %272 = vmatprep.subr.mxu0 0.0
      %273 = vmatpush1.msra.mxu0 0.0
      %274 = vmatprep.subr.mxu0 0.0
      %275 = vmatpush1.msra.mxu0 0.0
      %276 = vmatprep.subr.mxu0 0.0
      %277 = vmatpush1.msra.mxu0 0.0
      %278 = vmatprep.subr.mxu0 0.0
      %279 = vmatpush1.msra.mxu0 0.0
      %280 = vmatprep.subr.mxu0 0.0
      %281 = vmatpush1.msra.mxu0 0.0
      %282 = vmatprep.subr.mxu0 0.0
      %283 = vmatpush1.msra.mxu0 %v249
      %284 = vmatprep.subr.mxu0 0.0
      %285 = vmatpush1.msra.mxu0 %v248
      %286 = vmatprep.subr.mxu0 0.0
      %287 = vmatpush2.msra.mxu0 0.0
      %288 = vmatprep.subr.mxu0 0.0
      %289 = vmatpush2.msra.mxu0 0.0
      %290 = vmatprep.subr.mxu0 0.0
      %291 = vmatpush2.msra.mxu0 0.0
      %292 = vmatprep.subr.mxu0 0.0
      %293 = vmatpush2.msra.mxu0 0.0
      %294 = vmatprep.subr.mxu0 0.0
      %295 = vmatpush2.msra.mxu0 0.0
      %296 = vmatprep.subr.mxu0 0.0
      %297 = vmatpush2.msra.mxu0 0.0
      %298 = vmatprep.subr.mxu0 0.0
      %299 = vmatpush2.msra.mxu0 0.0
      %300 = vmatprep.subr.mxu0 0.0
      %301 = vmatpush2.msra.mxu0 0.0
      %302 = vmatprep.subr.mxu0 0.0
      %303 = vmatpush2.msra.mxu0 0.0
      %304 = vmatprep.subr.mxu0 0.0
      %305 = vmatpush2.msra.mxu0 0.0
      %306 = vmatprep.subr.mxu0 0.0
      %307 = vmatpush2.msra.mxu0 0.0
      %308 = vmatprep.subr.mxu0 0.0
      %309 = vmatpush2.msra.mxu0 0.0
      %310 = vmatprep.subr.mxu0 0.0
      %311 = vmatpush2.msra.mxu0 0.0
      %312 = vmatprep.subr.mxu0 0.0
      %313 = vmatpush2.msra.mxu0 0.0
      %314 = vmatprep.subr.mxu0 0.0
      %315 = vmatpush2.msra.mxu0 0.0
      %316 = vmatprep.subr.mxu0 0.0
      %317 = vmatpush2.msra.mxu0 0.0
      %318 = vmatprep.mubr.f32.mxu0 0.0
      %319 = vmatmul.mubr.f32.gmra.mxu0 %v252
      %v320 = vpop.f32.mrf.mxu0
      %v321 = vadd.f32 0.0, %v320
      %v322 = vpop.f32.mrf.mxu0
      %323 = vdwg.mxu0
      %v324 = vadd.f32 %v247, %v321
      %s325 = scalar_lea.vmem %s230, 16
      %v326 = vld [vmem:[%s325] sm:$0xff]
      %v327 = vld [vmem:[%s325 + $0x8] sm:$0xff]
      %vm329 = vcmask 1046528
      %v330 = vrot.slane %v245, 1
      %v331 = vrot.slane %v246, 1
      %v332 = vsel %vm329, %v330, %v331
      %v333 = vsel %vm250, %v332, 0
      %335 = vmatprep.subr.mxu0 0.0
      %336 = vmatpush1.msra.mxu0 0.0
      %337 = vmatprep.subr.mxu0 0.0
      %338 = vmatpush1.msra.mxu0 0.0
      %339 = vmatprep.subr.mxu0 0.0
      %340 = vmatpush1.msra.mxu0 0.0
      %341 = vmatprep.subr.mxu0 0.0
      %342 = vmatpush1.msra.mxu0 0.0
      %343 = vmatprep.subr.mxu0 0.0
      %344 = vmatpush1.msra.mxu0 0.0
      %345 = vmatprep.subr.mxu0 0.0
      %346 = vmatpush1.msra.mxu0 0.0
      %347 = vmatprep.subr.mxu0 0.0
      %348 = vmatpush1.msra.mxu0 0.0
      %349 = vmatprep.subr.mxu0 0.0
      %350 = vmatpush1.msra.mxu0 0.0
      %351 = vmatprep.subr.mxu0 0.0
      %352 = vmatpush1.msra.mxu0 0.0
      %353 = vmatprep.subr.mxu0 0.0
      %354 = vmatpush1.msra.mxu0 0.0
      %355 = vmatprep.subr.mxu0 0.0
      %356 = vmatpush1.msra.mxu0 0.0
      %357 = vmatprep.subr.mxu0 0.0
      %358 = vmatpush1.msra.mxu0 0.0
      %359 = vmatprep.subr.mxu0 0.0
      %360 = vmatpush1.msra.mxu0 0.0
      %361 = vmatprep.subr.mxu0 0.0
      %362 = vmatpush1.msra.mxu0 0.0
      %363 = vmatprep.subr.mxu0 0.0
      %364 = vmatpush1.msra.mxu0 %v327
      %365 = vmatprep.subr.mxu0 0.0
      %366 = vmatpush1.msra.mxu0 %v326
      %367 = vmatprep.subr.mxu0 0.0
      %368 = vmatpush2.msra.mxu0 0.0
      %369 = vmatprep.subr.mxu0 0.0
      %370 = vmatpush2.msra.mxu0 0.0
      %371 = vmatprep.subr.mxu0 0.0
      %372 = vmatpush2.msra.mxu0 0.0
      %373 = vmatprep.subr.mxu0 0.0
      %374 = vmatpush2.msra.mxu0 0.0
      %375 = vmatprep.subr.mxu0 0.0
      %376 = vmatpush2.msra.mxu0 0.0
      %377 = vmatprep.subr.mxu0 0.0
      %378 = vmatpush2.msra.mxu0 0.0
      %379 = vmatprep.subr.mxu0 0.0
      %380 = vmatpush2.msra.mxu0 0.0
      %381 = vmatprep.subr.mxu0 0.0
      %382 = vmatpush2.msra.mxu0 0.0
      %383 = vmatprep.subr.mxu0 0.0
      %384 = vmatpush2.msra.mxu0 0.0
      %385 = vmatprep.subr.mxu0 0.0
      %386 = vmatpush2.msra.mxu0 0.0
      %387 = vmatprep.subr.mxu0 0.0
      %388 = vmatpush2.msra.mxu0 0.0
      %389 = vmatprep.subr.mxu0 0.0
      %390 = vmatpush2.msra.mxu0 0.0
      %391 = vmatprep.subr.mxu0 0.0
      %392 = vmatpush2.msra.mxu0 0.0
      %393 = vmatprep.subr.mxu0 0.0
      %394 = vmatpush2.msra.mxu0 0.0
      %395 = vmatprep.subr.mxu0 0.0
      %396 = vmatpush2.msra.mxu0 0.0
      %397 = vmatprep.subr.mxu0 0.0
      %398 = vmatpush2.msra.mxu0 0.0
      %399 = vmatprep.mubr.f32.mxu0 0.0
      %400 = vmatmul.mubr.f32.gmra.mxu0 %v333
      %v401 = vpop.f32.mrf.mxu0
      %v402 = vadd.f32 0.0, %v401
      %v403 = vpop.f32.mrf.mxu0
      %404 = vdwg.mxu0
      %v405 = vadd.f32 %v324, %v402
      %s406 = scalar_lea.vmem %s230, 32
      %v407 = vld [vmem:[%s406] sm:$0xff]
      %v408 = vld [vmem:[%s406 + $0x8] sm:$0xff]
      %vm409 = vcmask 1045504
      %v410 = vrot.slane %v245, 2
      %v411 = vrot.slane %v246, 2
      %v412 = vsel %vm409, %v410, %v411
      %v413 = vsel %vm250, %v412, 0
      %415 = vmatprep.subr.mxu0 0.0
      %416 = vmatpush1.msra.mxu0 0.0
      %417 = vmatprep.subr.mxu0 0.0
      %418 = vmatpush1.msra.mxu0 0.0
      %419 = vmatprep.subr.mxu0 0.0
      %420 = vmatpush1.msra.mxu0 0.0
      %421 = vmatprep.subr.mxu0 0.0
      %422 = vmatpush1.msra.mxu0 0.0
      %423 = vmatprep.subr.mxu0 0.0
      %424 = vmatpush1.msra.mxu0 0.0
      %425 = vmatprep.subr.mxu0 0.0
      %426 = vmatpush1.msra.mxu0 0.0
      %427 = vmatprep.subr.mxu0 0.0
      %428 = vmatpush1.msra.mxu0 0.0
      %429 = vmatprep.subr.mxu0 0.0
      %430 = vmatpush1.msra.mxu0 0.0
      %431 = vmatprep.subr.mxu0 0.0
      %432 = vmatpush1.msra.mxu0 0.0
      %433 = vmatprep.subr.mxu0 0.0
      %434 = vmatpush1.msra.mxu0 0.0
      %435 = vmatprep.subr.mxu0 0.0
      %436 = vmatpush1.msra.mxu0 0.0
      %437 = vmatprep.subr.mxu0 0.0
      %438 = vmatpush1.msra.mxu0 0.0
      %439 = vmatprep.subr.mxu0 0.0
      %440 = vmatpush1.msra.mxu0 0.0
      %441 = vmatprep.subr.mxu0 0.0
      %442 = vmatpush1.msra.mxu0 0.0
      %443 = vmatprep.subr.mxu0 0.0
      %444 = vmatpush1.msra.mxu0 %v408
      %445 = vmatprep.subr.mxu0 0.0
      %446 = vmatpush1.msra.mxu0 %v407
      %447 = vmatprep.subr.mxu0 0.0
      %448 = vmatpush2.msra.mxu0 0.0
      %449 = vmatprep.subr.mxu0 0.0
      %450 = vmatpush2.msra.mxu0 0.0
      %451 = vmatprep.subr.mxu0 0.0
      %452 = vmatpush2.msra.mxu0 0.0
      %453 = vmatprep.subr.mxu0 0.0
      %454 = vmatpush2.msra.mxu0 0.0
      %455 = vmatprep.subr.mxu0 0.0
      %456 = vmatpush2.msra.mxu0 0.0
      %457 = vmatprep.subr.mxu0 0.0
      %458 = vmatpush2.msra.mxu0 0.0
      %459 = vmatprep.subr.mxu0 0.0
      %460 = vmatpush2.msra.mxu0 0.0
      %461 = vmatprep.subr.mxu0 0.0
      %462 = vmatpush2.msra.mxu0 0.0
      %463 = vmatprep.subr.mxu0 0.0
      %464 = vmatpush2.msra.mxu0 0.0
      %465 = vmatprep.subr.mxu0 0.0
      %466 = vmatpush2.msra.mxu0 0.0
      %467 = vmatprep.subr.mxu0 0.0
      %468 = vmatpush2.msra.mxu0 0.0
      %469 = vmatprep.subr.mxu0 0.0
      %470 = vmatpush2.msra.mxu0 0.0
      %471 = vmatprep.subr.mxu0 0.0
      %472 = vmatpush2.msra.mxu0 0.0
      %473 = vmatprep.subr.mxu0 0.0
      %474 = vmatpush2.msra.mxu0 0.0
      %475 = vmatprep.subr.mxu0 0.0
      %476 = vmatpush2.msra.mxu0 0.0
      %477 = vmatprep.subr.mxu0 0.0
      %478 = vmatpush2.msra.mxu0 0.0
      %479 = vmatprep.mubr.f32.mxu0 0.0
      %480 = vmatmul.mubr.f32.gmra.mxu0 %v413
      %v481 = vpop.f32.mrf.mxu0
      %v482 = vadd.f32 0.0, %v481
      %v483 = vpop.f32.mrf.mxu0
      %484 = vdwg.mxu0
      %v485 = vadd.f32 %v405, %v482
      %486 = vst.msk [vmem:[#allocation2] sm:$0xff] %vm250, %v485
      %p487 = scmp.eq.s32.totalorder %s21, 2
      // Predicated region
      $region37: #{famenet_forward.17} parent=31 // pred_check
        %p488 = pneg %p487
      $region38: #{famenet_forward.17} parent=31 // pred_check_branch
        %490 = sbr.rel (%p488) target = $region40
      $region39: #{famenet_forward.17} parent=31 // pred_region
        %v491 = vld [vmem:[#allocation2] sm:$0xff]
        %v492 = vld [vmem:[%s2] sm:$0x1]
        %v494 = vlaneseq
        %v495 = vshrl.u32 %v494, 7
        %v496 = vsub.s32 0, %v495
        %v497 = vrot.slane %v492, %v496
        %v499 = vadd.f32 %v491, %v497
        %v500 = vmax.f32 %v499, 0.0
        %501 = vst.msk [vmem:[%s238] sm:$0xff] %vm250, %v500
      $region40: #{famenet_forward.17} parent=31 // pred_fallthru
        _
      %p502 = scmp.lt.s32.totalorder %s19, 1
      %s503 = scalar_select %p502, %s19, 1
      %p504 = scmp.lt.s32.totalorder %s20, 7
      %s505 = scalar_select %p504, %s20, 7
      %s506 = smul.addr %s503, 8
      %s507 = sadd.s32 %s505, %s506
      %s508 = smul.addr %s507, 8
      %s509 = scalar_lea.vmem %s3, %s508
      // Predicated region
      $region41: #{famenet_forward.17} parent=31 // pred_check
        %p510 = pneg %p130
      $region42: #{famenet_forward.17} parent=31 // pred_check_branch
        %512 = sbr.rel (%p510) target = $region44
      $region43: #{famenet_forward.17} parent=31 // pred_region
        _
      $region44: #{famenet_forward.17} parent=31 // pred_fallthru
        _
    $region32: #{famenet_forward.17} parent=5 // pred_fallthru
      _
    %p513 = scmp.le.s32.totalorder 2, %s9
    // Predicated region
    $region45: #{famenet_forward.17} parent=5 // pred_check
      %p514 = pneg %p513
    $region46: #{famenet_forward.17} parent=5 // pred_check_branch
      %516 = sbr.rel (%p514) target = $region48
    $region47: #{famenet_forward.17} parent=5 // pred_region
      %s517 = ssub.s32 %s9, 2
      // Predicated region
      $region49: #{famenet_forward.17} parent=47 // pred_check
        %p518 = pneg %p136
      $region50: #{famenet_forward.17} parent=47 // pred_check_branch
        %520 = sbr.rel (%p518) target = $region52
      $region51: #{famenet_forward.17} parent=47 // pred_region
        %p521 = scmp.lt.s32.totalorder %s22, 1
        %s522 = scalar_select %p521, %s22, 1
        %p523 = scmp.lt.s32.totalorder %s23, 7
        %s524 = scalar_select %p523, %s23, 7
        %s525 = smul.addr %s522, 8
        %s526 = sadd.s32 %s524, %s525
        %s527 = smul.addr %s526, 8
        %s528 = scalar_lea.vmem %s3, %s527
      $region52: #{famenet_forward.17} parent=47 // pred_fallthru
        _
    $region48: #{famenet_forward.17} parent=5 // pred_fallthru
      _
  $region6: #{famenet_forward.17} parent=0 // loop_footer
    %s13 = sadd.s32 1, %s9
  $region7: #{famenet_forward.17} parent=0 // loop_footer_branch
    %8 = sbr.rel target = $region3
  $region8: #{famenet_forward.17} parent=0 // loop_exit
    _

// kernel: famenet_forward.16
$region0: #{famenet_forward.16}
  #allocation0 [shape = 'u32[]', space=smem, size = 0x4, offset = 0x4, fixed_abs, tag = 'smem constant byte address 0x4 - core index']
  #allocation1 [shape = 'u32[144,128]{1,0:T(1,128)}', space=vmem, size = 0x12000, scoped, tag = 'internal scratch']
  %s0 = inlined_call_operand.vmem [shape: f32[128,27], index: 0, kind: input, shape index: {}]
  %s1 = inlined_call_operand.vmem [shape: f32[27,16], index: 1, kind: input, shape index: {}]
  %s2 = inlined_call_operand.vmem [shape: f32[1,16], index: 2, kind: input, shape index: {}]
  %s3 = inlined_call_operand.vmem [shape: f32[128,16], index: 3, kind: output, shape index: {}]
  %s4 = sld [smem:[#allocation0]]
  $region22: #{famenet_forward.16} parent=0
    _
  %s6 = ssub.s32 1, %s4
  %s7 = scalar_select 0, %s6, %s4
  // Predicated region
  $region2: #{famenet_forward.16} parent=0 // pred_check
    _
  $region3: #{famenet_forward.16} parent=0 // pred_check_branch
    %9 = sbr.rel (0) target = $region5
  $region4: #{famenet_forward.16} parent=0 // pred_region
    _
  $region5: #{famenet_forward.16} parent=0 // pred_fallthru
    _
  // Predicated region
  $region6: #{famenet_forward.16} parent=0 // pred_check
    _
  $region7: #{famenet_forward.16} parent=0 // pred_check_branch
    %11 = sbr.rel (0) target = $region9
  $region8: #{famenet_forward.16} parent=0 // pred_region
    _
  $region9: #{famenet_forward.16} parent=0 // pred_fallthru
    _
  // Predicated region
  $region10: #{famenet_forward.16} parent=0 // pred_check
    _
  $region11: #{famenet_forward.16} parent=0 // pred_check_branch
    %13 = sbr.rel (0) target = $region13
  $region12: #{famenet_forward.16} parent=0 // pred_region
    _
  $region13: #{famenet_forward.16} parent=0 // pred_fallthru
    _
  %v14 = vld [vmem:[%s0] sm:$0xff]
  %v15 = vld [vmem:[%s0 + $0x8] sm:$0xff]
  %v16 = vld [vmem:[%s0 + $0x10] sm:$0xff]
  %v17 = vld [vmem:[%s0 + $0x18] sm:$0xff]
  %v18 = vld [vmem:[%s0 + $0x20] sm:$0xff]
  %v19 = vld [vmem:[%s0 + $0x28] sm:$0xff]
  %v20 = vld [vmem:[%s0 + $0x30] sm:$0xff]
  %v21 = vld [vmem:[%s0 + $0x38] sm:$0xff]
  %v22 = vld [vmem:[%s0 + $0x40] sm:$0xff]
  %v23 = vld [vmem:[%s0 + $0x48] sm:$0xff]
  %v24 = vld [vmem:[%s0 + $0x50] sm:$0xff]
  %v25 = vld [vmem:[%s0 + $0x58] sm:$0xff]
  %v26 = vld [vmem:[%s0 + $0x60] sm:$0xff]
  %v27 = vld [vmem:[%s0 + $0x68] sm:$0xff]
  %v28 = vld [vmem:[%s0 + $0x70] sm:$0xff]
  %v29 = vld [vmem:[%s0 + $0x78] sm:$0xff]
  %v30 = vld [vmem:[%s1] sm:$0xff]
  %v31 = vld [vmem:[%s1 + $0x8] sm:$0xff]
  %v32 = vld [vmem:[%s1 + $0x10] sm:$0xff]
  %v33 = vld [vmem:[%s1 + $0x18] sm:$0x7]
  %v34 = vld [vmem:[%s2] sm:$0x1]
  %v36 = vlaneseq
  %v37 = vshrl.u32 %v36, 7
  %v38 = vsub.s32 0, %v37
  %v39 = vrot.slane %v34, %v38
  %vm41 = vcmask 220160
  %v43 = vsel %vm41, %v14, 0
  %v46 = vsel %vm41, %v15, 0
  %v49 = vsel %vm41, %v16, 0
  %v52 = vsel %vm41, %v17, 0
  %v55 = vsel %vm41, %v18, 0
  %v58 = vsel %vm41, %v19, 0
  %v61 = vsel %vm41, %v20, 0
  %v64 = vsel %vm41, %v21, 0
  %v67 = vsel %vm41, %v22, 0
  %v70 = vsel %vm41, %v23, 0
  %v73 = vsel %vm41, %v24, 0
  %v76 = vsel %vm41, %v25, 0
  %v79 = vsel %vm41, %v26, 0
  %v82 = vsel %vm41, %v27, 0
  %v85 = vsel %vm41, %v28, 0
  %v88 = vsel %vm41, %v29, 0
  %vm90 = vcmask 1042432
  %v92 = vsel %vm90, %v33, 0
  %94 = vmatprep.subr.mxu0 0.0
  %95 = vmatpush1.msra.mxu0 0.0
  %96 = vmatprep.subr.mxu0 0.0
  %97 = vmatpush1.msra.mxu0 0.0
  %98 = vmatprep.subr.mxu0 0.0
  %99 = vmatpush1.msra.mxu0 0.0
  %100 = vmatprep.subr.mxu0 0.0
  %101 = vmatpush1.msra.mxu0 0.0
  %102 = vmatprep.subr.mxu0 0.0
  %103 = vmatpush1.msra.mxu0 0.0
  %104 = vmatprep.subr.mxu0 0.0
  %105 = vmatpush1.msra.mxu0 0.0
  %106 = vmatprep.subr.mxu0 0.0
  %107 = vmatpush1.msra.mxu0 0.0
  %108 = vmatprep.subr.mxu0 0.0
  %109 = vmatpush1.msra.mxu0 0.0
  %110 = vmatprep.subr.mxu0 0.0
  %111 = vmatpush1.msra.mxu0 0.0
  %112 = vmatprep.subr.mxu0 0.0
  %113 = vmatpush1.msra.mxu0 0.0
  %114 = vmatprep.subr.mxu0 0.0
  %115 = vmatpush1.msra.mxu0 0.0
  %116 = vmatprep.subr.mxu0 0.0
  %117 = vmatpush1.msra.mxu0 0.0
  %118 = vmatprep.subr.mxu0 0.0
  %119 = vmatpush1.msra.mxu0 %v92
  %120 = vmatprep.subr.mxu0 0.0
  %121 = vmatpush1.msra.mxu0 %v32
  %122 = vmatprep.subr.mxu0 0.0
  %123 = vmatpush1.msra.mxu0 %v31
  %124 = vmatprep.subr.mxu0 0.0
  %125 = vmatpush1.msra.mxu0 %v30
  %126 = vmatprep.subr.mxu0 0.0
  %127 = vmatpush2.msra.mxu0 0.0
  %128 = vmatprep.subr.mxu0 0.0
  %129 = vmatpush2.msra.mxu0 0.0
  %130 = vmatprep.subr.mxu0 0.0
  %131 = vmatpush2.msra.mxu0 0.0
  %132 = vmatprep.subr.mxu0 0.0
  %133 = vmatpush2.msra.mxu0 0.0
  %134 = vmatprep.subr.mxu0 0.0
  %135 = vmatpush2.msra.mxu0 0.0
  %136 = vmatprep.subr.mxu0 0.0
  %137 = vmatpush2.msra.mxu0 0.0
  %138 = vmatprep.subr.mxu0 0.0
  %139 = vmatpush2.msra.mxu0 0.0
  %140 = vmatprep.subr.mxu0 0.0
  %141 = vmatpush2.msra.mxu0 0.0
  %142 = vmatprep.subr.mxu0 0.0
  %143 = vmatpush2.msra.mxu0 0.0
  %144 = vmatprep.subr.mxu0 0.0
  %145 = vmatpush2.msra.mxu0 0.0
  %146 = vmatprep.subr.mxu0 0.0
  %147 = vmatpush2.msra.mxu0 0.0
  %148 = vmatprep.subr.mxu0 0.0
  %149 = vmatpush2.msra.mxu0 0.0
  %150 = vmatprep.subr.mxu0 0.0
  %151 = vmatpush2.msra.mxu0 0.0
  %152 = vmatprep.subr.mxu0 0.0
  %153 = vmatpush2.msra.mxu0 0.0
  %154 = vmatprep.subr.mxu0 0.0
  %155 = vmatpush2.msra.mxu0 0.0
  %156 = vmatprep.subr.mxu0 0.0
  %157 = vmatpush2.msra.mxu0 0.0
  %158 = vmatprep.mubr.f32.mxu0 0.0
  %159 = vmatmul.mubr.f32.gmra.mxu0 %v43
  %v160 = vpop.f32.mrf.mxu0
  %v161 = vadd.f32 %v39, %v160
  %v162 = vpop.f32.mrf.mxu0
  %163 = vmatprep.mubr.f32.mxu0 0.0
  %164 = vmatmul.mubr.f32.gmra.mxu0 %v46
  %v165 = vpop.f32.mrf.mxu0
  %v166 = vadd.f32 %v39, %v165
  %v167 = vpop.f32.mrf.mxu0
  %168 = vmatprep.mubr.f32.mxu0 0.0
  %169 = vmatmul.mubr.f32.gmra.mxu0 %v49
  %v170 = vpop.f32.mrf.mxu0
  %v171 = vadd.f32 %v39, %v170
  %v172 = vpop.f32.mrf.mxu0
  %173 = vmatprep.mubr.f32.mxu0 0.0
  %174 = vmatmul.mubr.f32.gmra.mxu0 %v52
  %v175 = vpop.f32.mrf.mxu0
  %v176 = vadd.f32 %v39, %v175
  %v177 = vpop.f32.mrf.mxu0
  %178 = vmatprep.mubr.f32.mxu0 0.0
  %179 = vmatmul.mubr.f32.gmra.mxu0 %v55
  %v180 = vpop.f32.mrf.mxu0
  %v181 = vadd.f32 %v39, %v180
  %v182 = vpop.f32.mrf.mxu0
  %183 = vmatprep.mubr.f32.mxu0 0.0
  %184 = vmatmul.mubr.f32.gmra.mxu0 %v58
  %v185 = vpop.f32.mrf.mxu0
  %v186 = vadd.f32 %v39, %v185
  %v187 = vpop.f32.mrf.mxu0
  %188 = vmatprep.mubr.f32.mxu0 0.0
  %189 = vmatmul.mubr.f32.gmra.mxu0 %v61
  %v190 = vpop.f32.mrf.mxu0
  %v191 = vadd.f32 %v39, %v190
  %v192 = vpop.f32.mrf.mxu0
  %193 = vmatprep.mubr.f32.mxu0 0.0
  %194 = vmatmul.mubr.f32.gmra.mxu0 %v64
  %v195 = vpop.f32.mrf.mxu0
  %v196 = vadd.f32 %v39, %v195
  %v197 = vpop.f32.mrf.mxu0
  %198 = vmatprep.mubr.f32.mxu0 0.0
  %199 = vmatmul.mubr.f32.gmra.mxu0 %v67
  %v200 = vpop.f32.mrf.mxu0
  %v201 = vadd.f32 %v39, %v200
  %v202 = vpop.f32.mrf.mxu0
  %203 = vmatprep.mubr.f32.mxu0 0.0
  %204 = vmatmul.mubr.f32.gmra.mxu0 %v70
  %v205 = vpop.f32.mrf.mxu0
  %v206 = vadd.f32 %v39, %v205
  %v207 = vpop.f32.mrf.mxu0
  %208 = vmatprep.mubr.f32.mxu0 0.0
  %209 = vmatmul.mubr.f32.gmra.mxu0 %v73
  %v210 = vpop.f32.mrf.mxu0
  %v211 = vadd.f32 %v39, %v210
  %v212 = vpop.f32.mrf.mxu0
  %213 = vmatprep.mubr.f32.mxu0 0.0
  %214 = vmatmul.mubr.f32.gmra.mxu0 %v76
  %v215 = vpop.f32.mrf.mxu0
  %v216 = vadd.f32 %v39, %v215
  %v217 = vpop.f32.mrf.mxu0
  %218 = vmatprep.mubr.f32.mxu0 0.0
  %219 = vmatmul.mubr.f32.gmra.mxu0 %v79
  %v220 = vpop.f32.mrf.mxu0
  %v221 = vadd.f32 %v39, %v220
  %v222 = vpop.f32.mrf.mxu0
  %223 = vmatprep.mubr.f32.mxu0 0.0
  %224 = vmatmul.mubr.f32.gmra.mxu0 %v82
  %v225 = vpop.f32.mrf.mxu0
  %v226 = vadd.f32 %v39, %v225
  %v227 = vpop.f32.mrf.mxu0
  %228 = vmatprep.mubr.f32.mxu0 0.0
  %229 = vmatmul.mubr.f32.gmra.mxu0 %v85
  %v230 = vpop.f32.mrf.mxu0
  %v231 = vadd.f32 %v39, %v230
  %v232 = vpop.f32.mrf.mxu0
  %233 = vmatprep.mubr.f32.mxu0 0.0
  %234 = vmatmul.mubr.f32.gmra.mxu0 %v88
  %v235 = vpop.f32.mrf.mxu0
  %v236 = vadd.f32 %v39, %v235
  %v237 = vpop.f32.mrf.mxu0
  %238 = vdwg.mxu0
  %v239 = vmax.f32 %v161, 0.0
  %v240 = vmax.f32 %v166, 0.0
  %v241 = vmax.f32 %v171, 0.0
  %v242 = vmax.f32 %v176, 0.0
  %v243 = vmax.f32 %v181, 0.0
  %v244 = vmax.f32 %v186, 0.0
  %v245 = vmax.f32 %v191, 0.0
  %v246 = vmax.f32 %v196, 0.0
  %v247 = vmax.f32 %v201, 0.0
  %v248 = vmax.f32 %v206, 0.0
  %v249 = vmax.f32 %v211, 0.0
  %v250 = vmax.f32 %v216, 0.0
  %v251 = vmax.f32 %v221, 0.0
  %v252 = vmax.f32 %v226, 0.0
  %v253 = vmax.f32 %v231, 0.0
  %v254 = vmax.f32 %v236, 0.0
  %vm255 = vcmask 130048
  %256 = vst.msk [vmem:[%s3] sm:$0xff] %vm255, %v239
  %257 = vst.msk [vmem:[%s3 + $0x8] sm:$0xff] %vm255, %v240
  %258 = vst.msk [vmem:[%s3 + $0x10] sm:$0xff] %vm255, %v241
  %259 = vst.msk [vmem:[%s3 + $0x18] sm:$0xff] %vm255, %v242
  %260 = vst.msk [vmem:[%s3 + $0x20] sm:$0xff] %vm255, %v243
  %261 = vst.msk [vmem:[%s3 + $0x28] sm:$0xff] %vm255, %v244
  %262 = vst.msk [vmem:[%s3 + $0x30] sm:$0xff] %vm255, %v245
  %263 = vst.msk [vmem:[%s3 + $0x38] sm:$0xff] %vm255, %v246
  %264 = vst.msk [vmem:[%s3 + $0x40] sm:$0xff] %vm255, %v247
  %265 = vst.msk [vmem:[%s3 + $0x48] sm:$0xff] %vm255, %v248
  %266 = vst.msk [vmem:[%s3 + $0x50] sm:$0xff] %vm255, %v249
  %267 = vst.msk [vmem:[%s3 + $0x58] sm:$0xff] %vm255, %v250
  %268 = vst.msk [vmem:[%s3 + $0x60] sm:$0xff] %vm255, %v251
  %269 = vst.msk [vmem:[%s3 + $0x68] sm:$0xff] %vm255, %v252
  %270 = vst.msk [vmem:[%s3 + $0x70] sm:$0xff] %vm255, %v253
  %271 = vst.msk [vmem:[%s3 + $0x78] sm:$0xff] %vm255, %v254
  // Predicated region
  $region14: #{famenet_forward.16} parent=0 // pred_check
    _
  $region15: #{famenet_forward.16} parent=0 // pred_check_branch
    %273 = sbr.rel (0) target = $region17
  $region16: #{famenet_forward.16} parent=0 // pred_region
    _
  $region17: #{famenet_forward.16} parent=0 // pred_fallthru
    _
  // Predicated region
  $region18: #{famenet_forward.16} parent=0 // pred_check
    _
  $region19: #{famenet_forward.16} parent=0 // pred_check_branch
    %275 = sbr.rel (0) target = $region21
  $region20: #{famenet_forward.16} parent=0 // pred_region
    _
  $region21: #{famenet_forward.16} parent=0 // pred_fallthru
    _

// kernel: famenet_forward.18
$region0: #{famenet_forward.18}
  #allocation0 [shape = 'u32[]', space=smem, size = 0x4, offset = 0x4, fixed_abs, tag = 'smem constant byte address 0x4 - core index']
  #allocation1 [shape = 'u32[144,128]{1,0:T(1,128)}', space=vmem, size = 0x12000, scoped, tag = 'internal scratch']
  #allocation2 [shape = 'f32[8,16]{1,0:T(8,128)}', space=vmem, size = 0x1000, scoped, tag = 'scratch operand']
  %s0 = inlined_call_operand.vmem [shape: f32[2,10,10,16], index: 0, kind: input, shape index: {}]
  %s1 = inlined_call_operand.vmem [shape: f32[3,3,16,16], index: 1, kind: input, shape index: {}]
  %s2 = inlined_call_operand.vmem [shape: f32[1,16], index: 2, kind: input, shape index: {}]
  %s3 = inlined_call_operand.vmem [shape: f32[2,8,8,16], index: 3, kind: input, shape index: {}]
  %s4 = inlined_call_operand.vmem [shape: f32[2,8,8,16], index: 4, kind: output, shape index: {}]
  %s5 = sld [smem:[#allocation0]]
  $region57: #{famenet_forward.18} parent=0
    _
  %s7 = ssub.s32 1, %s5
  %s8 = scalar_select 0, %s7, %s5
  loop: start=0, step=1, limit=50
  $region2: #{famenet_forward.18} parent=0 // loop_pre_header
    _
  $region3: #{famenet_forward.18} parent=0 // loop_header
    %s10 = sphi 0, %s14
    %p11 = scmp.ge.s32.totalorder %s10, 50
    %s17 = sphi 0, %s36
    %s18 = sphi 0, %s32
    %s19 = sphi 0, %s28
    %s20 = sphi 0, %s17
    %s21 = sphi 0, %s18
    %s22 = sphi 0, %s19
    %s23 = sphi 0, %s20
    %s24 = sphi 0, %s21
    %s25 = sphi 0, %s22
    %s43 = sphi 0, %s45
    %s46 = sphi 0, %s43
    %s47 = sphi 0, %s46
    %s63 = sphi 0, %s47
    %s69 = sphi 0, %s71
    %s72 = sphi 0, %s69
    %s73 = sphi 0, %s72
    %s89 = sphi 0, %s73
    %s93 = sphi 0, %s93
    %s95 = sphi 0, %s93
    %s96 = sphi 0, %s95
    %s110 = sphi 0, %s96
    %s118 = sphi 0, %s120
    %s121 = sphi 0, %s118
    %s122 = sphi 0, %s121
    %s138 = sphi 0, %s122
    %s146 = sphi 0, %s148
    %s149 = sphi 0, %s146
    %s150 = sphi 0, %s149
    %s166 = sphi 0, %s150
  $region4: #{famenet_forward.18} parent=0 // loop_header_branch
    %13 = sbr.rel (%p11) target = $region8
  $region5: #{famenet_forward.18} parent=0 // loop_body
    %s15 = ssub.s32 %s10, 1
    %s16 = ssub.s32 %s10, 2
    %s26 = sadd.s32 1, %s19
    %p27 = scmp.ge.s32.totalorder %s26, 3
    %s28 = scalar_select %p27, 0, %s26
    %s29 = sadd.s32 1, %s18
    %s30 = scalar_select %p27, %s29, %s18
    %p31 = scmp.ge.s32.totalorder %s30, 8
    %s32 = scalar_select %p31, 0, %s30
    %s33 = sadd.s32 1, %s17
    %s34 = scalar_select %p31, %s33, %s17
    %p35 = scmp.ge.s32.totalorder %s34, 2
    %s36 = scalar_select %p35, 0, %s34
    %s37 = sadd.s32 %s18, %s19
    %s38 = sadd.s32 %s32, %s28
    %s39 = ssub.s32 %s17, %s36
    %s40 = ssub.s32 %s37, %s38
    %s41 = sor.u32 %s39, %s40
    %p42 = scmp.eq.s32.totalorder %s41, 0
    %s44 = sadd.s32 %s43, 1
    %s45 = scalar_select %p42, %s43, %s44
    %p48 = pneg %p42
    %p49 = scmp.eq.s32.totalorder %s10, 47
    %p50 = por %p48, %p49
    %p51 = scmp.ne.s32.totalorder %s43, %s46
    %p52 = scmp.eq.s32.totalorder %s10, 0
    %p53 = por %p51, %p52
    %p54 = scmp.ne.s32.totalorder %s43, %s46
    %p55 = scmp.eq.s32.totalorder %s15, 47
    %p56 = por %p54, %p55
    %p57 = scmp.ne.s32.totalorder %s46, %s47
    %p58 = scmp.eq.s32.totalorder %s15, 0
    %p59 = por %p57, %p58
    %p60 = scmp.ne.s32.totalorder %s46, %s47
    %p61 = scmp.eq.s32.totalorder %s16, 47
    %p62 = por %p60, %p61
    %p64 = scmp.ne.s32.totalorder %s47, %s63
    %p65 = scmp.eq.s32.totalorder %s16, 0
    %p66 = por %p64, %p65
    %s67 = ssub.s32 %s19, %s28
    %p68 = scmp.eq.s32.totalorder %s67, 0
    %s70 = sadd.s32 %s69, 1
    %s71 = scalar_select %p68, %s69, %s70
    %p74 = pneg %p68
    %p75 = scmp.eq.s32.totalorder %s10, 47
    %p76 = por %p74, %p75
    %p77 = scmp.ne.s32.totalorder %s69, %s72
    %p78 = scmp.eq.s32.totalorder %s10, 0
    %p79 = por %p77, %p78
    %p80 = scmp.ne.s32.totalorder %s69, %s72
    %p81 = scmp.eq.s32.totalorder %s15, 47
    %p82 = por %p80, %p81
    %p83 = scmp.ne.s32.totalorder %s72, %s73
    %p84 = scmp.eq.s32.totalorder %s15, 0
    %p85 = por %p83, %p84
    %p86 = scmp.ne.s32.totalorder %s72, %s73
    %p87 = scmp.eq.s32.totalorder %s16, 47
    %p88 = por %p86, %p87
    %p90 = scmp.ne.s32.totalorder %s73, %s89
    %p91 = scmp.eq.s32.totalorder %s16, 0
    %p92 = por %p90, %p91
    %s94 = sadd.s32 %s93, 1
    %p97 = scmp.eq.s32.totalorder %s10, 47
    %p98 = scmp.ne.s32.totalorder %s93, %s95
    %p99 = scmp.eq.s32.totalorder %s10, 0
    %p100 = por %p98, %p99
    %p101 = scmp.ne.s32.totalorder %s93, %s95
    %p102 = scmp.eq.s32.totalorder %s15, 47
    %p103 = por %p101, %p102
    %p104 = scmp.ne.s32.totalorder %s95, %s96
    %p105 = scmp.eq.s32.totalorder %s15, 0
    %p106 = por %p104, %p105
    %p107 = scmp.ne.s32.totalorder %s95, %s96
    %p108 = scmp.eq.s32.totalorder %s16, 47
    %p109 = por %p107, %p108
    %p111 = scmp.ne.s32.totalorder %s96, %s110
    %p112 = scmp.eq.s32.totalorder %s16, 0
    %p113 = por %p111, %p112
    %s114 = ssub.s32 %s17, %s36
    %s115 = ssub.s32 %s18, %s32
    %s116 = sor.u32 %s114, %s115
    %p117 = scmp.eq.s32.totalorder %s116, 0
    %s119 = sadd.s32 %s118, 1
    %s120 = scalar_select %p117, %s118, %s119
    %p123 = pneg %p117
    %p124 = scmp.eq.s32.totalorder %s10, 47
    %p125 = por %p123, %p124
    %p126 = scmp.ne.s32.totalorder %s118, %s121
    %p127 = scmp.eq.s32.totalorder %s10, 0
    %p128 = por %p126, %p127
    %p129 = scmp.ne.s32.totalorder %s118, %s121
    %p130 = scmp.eq.s32.totalorder %s15, 47
    %p131 = por %p129, %p130
    %p132 = scmp.ne.s32.totalorder %s121, %s122
    %p133 = scmp.eq.s32.totalorder %s15, 0
    %p134 = por %p132, %p133
    %p135 = scmp.ne.s32.totalorder %s121, %s122
    %p136 = scmp.eq.s32.totalorder %s16, 47
    %p137 = por %p135, %p136
    %p139 = scmp.ne.s32.totalorder %s122, %s138
    %p140 = scmp.eq.s32.totalorder %s16, 0
    %p141 = por %p139, %p140
    %s142 = ssub.s32 %s17, %s36
    %s143 = ssub.s32 %s18, %s32
    %s144 = sor.u32 %s142, %s143
    %p145 = scmp.eq.s32.totalorder %s144, 0
    %s147 = sadd.s32 %s146, 1
    %s148 = scalar_select %p145, %s146, %s147
    %p151 = pneg %p145
    %p152 = scmp.eq.s32.totalorder %s10, 47
    %p153 = por %p151, %p152
    %p154 = scmp.ne.s32.totalorder %s146, %s149
    %p155 = scmp.eq.s32.totalorder %s10, 0
    %p156 = por %p154, %p155
    %p157 = scmp.ne.s32.totalorder %s146, %s149
    %p158 = scmp.eq.s32.totalorder %s15, 47
    %p159 = por %p157, %p158
    %p160 = scmp.ne.s32.totalorder %s149, %s150
    %p161 = scmp.eq.s32.totalorder %s15, 0
    %p162 = por %p160, %p161
    %p163 = scmp.ne.s32.totalorder %s149, %s150
    %p164 = scmp.eq.s32.totalorder %s16, 47
    %p165 = por %p163, %p164
    %p167 = scmp.ne.s32.totalorder %s150, %s166
    %p168 = scmp.eq.s32.totalorder %s16, 0
    %p169 = por %p167, %p168
    %p170 = scmp.le.s32.totalorder 1, %s10
    %p171 = scmp.lt.s32.totalorder %s10, 49
    %p172 = pnand %p170, %p171
    %p173 = pneg %p172
    // Predicated region
    $region9: #{famenet_forward.18} parent=5 // pred_check
      _
    $region10: #{famenet_forward.18} parent=5 // pred_check_branch
      %175 = sbr.rel (%p172) target = $region12
    $region11: #{famenet_forward.18} parent=5 // pred_region
      %s176 = ssub.s32 %s10, 1
      // Predicated region
      $region13: #{famenet_forward.18} parent=11 // pred_check
        %p177 = pneg %p106
      $region14: #{famenet_forward.18} parent=11 // pred_check_branch
        %179 = sbr.rel (%p177) target = $region16
      $region15: #{famenet_forward.18} parent=11 // pred_region
        _
      $region16: #{famenet_forward.18} parent=11 // pred_fallthru
        _
    $region12: #{famenet_forward.18} parent=5 // pred_fallthru
      _
    %p180 = scmp.lt.s32.totalorder %s10, 48
    // Predicated region
    $region17: #{famenet_forward.18} parent=5 // pred_check
      %p181 = pneg %p180
    $region18: #{famenet_forward.18} parent=5 // pred_check_branch
      %183 = sbr.rel (%p181) target = $region20
    $region19: #{famenet_forward.18} parent=5 // pred_region
      // Predicated region
      $region21: #{famenet_forward.18} parent=19 // pred_check
        %p184 = pneg %p53
      $region22: #{famenet_forward.18} parent=19 // pred_check_branch
        %186 = sbr.rel (%p184) target = $region24
      $region23: #{famenet_forward.18} parent=19 // pred_region
        %s187 = sadd.s32 %s18, %s19
        %p188 = scmp.lt.s32.totalorder %s17, 1
        %s189 = scalar_select %p188, %s17, 1
        %p190 = scmp.lt.s32.totalorder %s187, 9
        %s191 = scalar_select %p190, %s187, 9
        %s192 = smul.addr %s191, 2
        %s193 = smul.addr %s189, 20
        %s194 = sadd.s32 %s192, %s193
        %s195 = smul.addr %s194, 8
        %s196 = scalar_lea.vmem %s0, %s195
        %s197 = sadd.s32 %s18, %s19
      $region24: #{famenet_forward.18} parent=19 // pred_fallthru
        _
      // Predicated region
      $region25: #{famenet_forward.18} parent=19 // pred_check
        %p198 = pneg %p79
      $region26: #{famenet_forward.18} parent=19 // pred_check_branch
        %200 = sbr.rel (%p198) target = $region28
      $region27: #{famenet_forward.18} parent=19 // pred_region
        %p201 = scmp.lt.s32.totalorder %s19, 2
        %s202 = scalar_select %p201, %s19, 2
        %s203 = smul.addr %s202, 6
        %s204 = smul.addr %s203, 8
        %s205 = scalar_lea.vmem %s1, %s204
      $region28: #{famenet_forward.18} parent=19 // pred_fallthru
        _
      // Predicated region
      $region29: #{famenet_forward.18} parent=19 // pred_check
        %p206 = pneg %p128
      $region30: #{famenet_forward.18} parent=19 // pred_check_branch
        %208 = sbr.rel (%p206) target = $region32
      $region31: #{famenet_forward.18} parent=19 // pred_region
        %p209 = scmp.lt.s32.totalorder %s17, 1
        %s210 = scalar_select %p209, %s17, 1
        %p211 = scmp.lt.s32.totalorder %s18, 7
        %s212 = scalar_select %p211, %s18, 7
        %s213 = smul.addr %s210, 8
        %s214 = sadd.s32 %s212, %s213
        %s215 = smul.addr %s214, 8
        %s216 = scalar_lea.vmem %s3, %s215
      $region32: #{famenet_forward.18} parent=19 // pred_fallthru
        _
    $region20: #{famenet_forward.18} parent=5 // pred_fallthru
      _
    %p217 = scmp.le.s32.totalorder 1, %s10
    %p218 = scmp.lt.s32.totalorder %s10, 49
    %p219 = pnand %p217, %p218
    %p220 = pneg %p219
    // Predicated region
    $region33: #{famenet_forward.18} parent=5 // pred_check
      _
    $region34: #{famenet_forward.18} parent=5 // pred_check_branch
      %222 = sbr.rel (%p219) target = $region36
    $region35: #{famenet_forward.18} parent=5 // pred_region
      %s223 = ssub.s32 %s10, 1
      %s224 = sadd.s32 %s21, %s22
      %p225 = scmp.lt.s32.totalorder %s20, 1
      %s226 = scalar_select %p225, %s20, 1
      %p227 = scmp.lt.s32.totalorder %s224, 9
      %s228 = scalar_select %p227, %s224, 9
      %s229 = smul.addr %s228, 2
      %s230 = smul.addr %s226, 20
      %s231 = sadd.s32 %s229, %s230
      %s232 = smul.addr %s231, 8
      %s233 = scalar_lea.vmem %s0, %s232
      %p234 = pneg %p59
      %p235 = pneg %p56
      %p236 = scmp.lt.s32.totalorder %s22, 2
      %s237 = scalar_select %p236, %s22, 2
      %s238 = smul.addr %s237, 6
      %s239 = smul.addr %s238, 8
      %s240 = scalar_lea.vmem %s1, %s239
      %p241 = pneg %p85
      %p242 = pneg %p82
      %p243 = pneg %p106
      %p244 = pneg %p103
      %p245 = scmp.lt.s32.totalorder %s20, 1
      %s246 = scalar_select %p245, %s20, 1
      %p247 = scmp.lt.s32.totalorder %s21, 7
      %s248 = scalar_select %p247, %s21, 7
      %s249 = smul.addr %s246, 8
      %s250 = sadd.s32 %s248, %s249
      %s251 = smul.addr %s250, 8
      %s252 = scalar_lea.vmem %s3, %s251
      %p253 = pneg %p134
      %p254 = pneg %p131
      %p255 = pneg %p162
      %p256 = pneg %p159
      %p257 = scmp.lt.s32.totalorder %s20, 1
      %s258 = scalar_select %p257, %s20, 1
      %p259 = scmp.lt.s32.totalorder %s21, 7
      %s260 = scalar_select %p259, %s21, 7
      %s261 = smul.addr %s258, 8
      %s262 = sadd.s32 %s260, %s261
      %s263 = smul.addr %s262, 8
      %s264 = scalar_lea.vmem %s4, %s263
      %s265 = sadd.s32 %s21, %s22
      %p266 = scmp.lt.s32.totalorder %s20, 1
      %s267 = scalar_select %p266, %s20, 1
      %p268 = scmp.lt.s32.totalorder %s265, 9
      %s269 = scalar_select %p268, %s265, 9
      %s270 = smul.addr %s269, 2
      %s271 = smul.addr %s267, 20
      %s272 = sadd.s32 %s270, %s271
      %s273 = smul.addr %s272, 8
      %s274 = scalar_lea.vmem %s0, %s273
      %s275 = sadd.s32 %s21, %s22
      %p276 = scmp.lt.s32.totalorder %s22, 2
      %s277 = scalar_select %p276, %s22, 2
      %s278 = smul.addr %s277, 6
      %s279 = smul.addr %s278, 8
      %s280 = scalar_lea.vmem %s1, %s279
      %p281 = scmp.lt.s32.totalorder %s20, 1
      %s282 = scalar_select %p281, %s20, 1
      %p283 = scmp.lt.s32.totalorder %s21, 7
      %s284 = scalar_select %p283, %s21, 7
      %s285 = smul.addr %s282, 8
      %s286 = sadd.s32 %s284, %s285
      %s287 = smul.addr %s286, 8
      %s288 = scalar_lea.vmem %s3, %s287
      %p289 = scmp.lt.s32.totalorder %s20, 1
      %s290 = scalar_select %p289, %s20, 1
      %p291 = scmp.lt.s32.totalorder %s21, 7
      %s292 = scalar_select %p291, %s21, 7
      %s293 = smul.addr %s290, 8
      %s294 = sadd.s32 %s292, %s293
      %s295 = smul.addr %s294, 8
      %s296 = scalar_lea.vmem %s4, %s295
      %p297 = scmp.eq.s32.totalorder %s22, 0
      // Predicated region
      $region37: #{famenet_forward.18} parent=35 // pred_check
        %p298 = pneg %p297
      $region38: #{famenet_forward.18} parent=35 // pred_check_branch
        %300 = sbr.rel (%p298) target = $region40
      $region39: #{famenet_forward.18} parent=35 // pred_region
        %vm301 = vcmask 130048
        %302 = vst.msk [vmem:[#allocation2] sm:$0xff] %vm301, 0.0
      $region40: #{famenet_forward.18} parent=35 // pred_fallthru
        _
      %v303 = vld [vmem:[%s274] sm:$0xff]
      %v304 = vld [vmem:[%s274 + $0x8] sm:$0x3]
      %v305 = vld [vmem:[#allocation2] sm:$0xff]
      %v306 = vld [vmem:[%s280] sm:$0xff]
      %v307 = vld [vmem:[%s280 + $0x8] sm:$0xff]
      %vm308 = vcmask 130048
      %v310 = vsel %vm308, %v303, 0
      %312 = vmatprep.subr.mxu0 0.0
      %313 = vmatpush1.msra.mxu0 0.0
      %314 = vmatprep.subr.mxu0 0.0
      %315 = vmatpush1.msra.mxu0 0.0
      %316 = vmatprep.subr.mxu0 0.0
      %317 = vmatpush1.msra.mxu0 0.0
      %318 = vmatprep.subr.mxu0 0.0
      %319 = vmatpush1.msra.mxu0 0.0
      %320 = vmatprep.subr.mxu0 0.0
      %321 = vmatpush1.msra.mxu0 0.0
      %322 = vmatprep.subr.mxu0 0.0
      %323 = vmatpush1.msra.mxu0 0.0
      %324 = vmatprep.subr.mxu0 0.0
      %325 = vmatpush1.msra.mxu0 0.0
      %326 = vmatprep.subr.mxu0 0.0
      %327 = vmatpush1.msra.mxu0 0.0
      %328 = vmatprep.subr.mxu0 0.0
      %329 = vmatpush1.msra.mxu0 0.0
      %330 = vmatprep.subr.mxu0 0.0
      %331 = vmatpush1.msra.mxu0 0.0
      %332 = vmatprep.subr.mxu0 0.0
      %333 = vmatpush1.msra.mxu0 0.0
      %334 = vmatprep.subr.mxu0 0.0
      %335 = vmatpush1.msra.mxu0 0.0
      %336 = vmatprep.subr.mxu0 0.0
      %337 = vmatpush1.msra.mxu0 0.0
      %338 = vmatprep.subr.mxu0 0.0
      %339 = vmatpush1.msra.mxu0 0.0
      %340 = vmatprep.subr.mxu0 0.0
      %341 = vmatpush1.msra.mxu0 %v307
      %342 = vmatprep.subr.mxu0 0.0
      %343 = vmatpush1.msra.mxu0 %v306
      %344 = vmatprep.subr.mxu0 0.0
      %345 = vmatpush2.msra.mxu0 0.0
      %346 = vmatprep.subr.mxu0 0.0
      %347 = vmatpush2.msra.mxu0 0.0
      %348 = vmatprep.subr.mxu0 0.0
      %349 = vmatpush2.msra.mxu0 0.0
      %350 = vmatprep.subr.mxu0 0.0
      %351 = vmatpush2.msra.mxu0 0.0
      %352 = vmatprep.subr.mxu0 0.0
      %353 = vmatpush2.msra.mxu0 0.0
      %354 = vmatprep.subr.mxu0 0.0
      %355 = vmatpush2.msra.mxu0 0.0
      %356 = vmatprep.subr.mxu0 0.0
      %357 = vmatpush2.msra.mxu0 0.0
      %358 = vmatprep.subr.mxu0 0.0
      %359 = vmatpush2.msra.mxu0 0.0
      %360 = vmatprep.subr.mxu0 0.0
      %361 = vmatpush2.msra.mxu0 0.0
      %362 = vmatprep.subr.mxu0 0.0
      %363 = vmatpush2.msra.mxu0 0.0
      %364 = vmatprep.subr.mxu0 0.0
      %365 = vmatpush2.msra.mxu0 0.0
      %366 = vmatprep.subr.mxu0 0.0
      %367 = vmatpush2.msra.mxu0 0.0
      %368 = vmatprep.subr.mxu0 0.0
      %369 = vmatpush2.msra.mxu0 0.0
      %370 = vmatprep.subr.mxu0 0.0
      %371 = vmatpush2.msra.mxu0 0.0
      %372 = vmatprep.subr.mxu0 0.0
      %373 = vmatpush2.msra.mxu0 0.0
      %374 = vmatprep.subr.mxu0 0.0
      %375 = vmatpush2.msra.mxu0 0.0
      %376 = vmatprep.mubr.f32.mxu0 0.0
      %377 = vmatmul.mubr.f32.gmra.mxu0 %v310
      %v378 = vpop.f32.mrf.mxu0
      %v379 = vadd.f32 0.0, %v378
      %v380 = vpop.f32.mrf.mxu0
      %381 = vdwg.mxu0
      %v382 = vadd.f32 %v305, %v379
      %s383 = scalar_lea.vmem %s280, 16
      %v384 = vld [vmem:[%s383] sm:$0xff]
      %v385 = vld [vmem:[%s383 + $0x8] sm:$0xff]
      %vm387 = vcmask 1046528
      %v388 = vrot.slane %v303, 1
      %v389 = vrot.slane %v304, 1
      %v390 = vsel %vm387, %v388, %v389
      %v391 = vsel %vm308, %v390, 0
      %393 = vmatprep.subr.mxu0 0.0
      %394 = vmatpush1.msra.mxu0 0.0
      %395 = vmatprep.subr.mxu0 0.0
      %396 = vmatpush1.msra.mxu0 0.0
      %397 = vmatprep.subr.mxu0 0.0
      %398 = vmatpush1.msra.mxu0 0.0
      %399 = vmatprep.subr.mxu0 0.0
      %400 = vmatpush1.msra.mxu0 0.0
      %401 = vmatprep.subr.mxu0 0.0
      %402 = vmatpush1.msra.mxu0 0.0
      %403 = vmatprep.subr.mxu0 0.0
      %404 = vmatpush1.msra.mxu0 0.0
      %405 = vmatprep.subr.mxu0 0.0
      %406 = vmatpush1.msra.mxu0 0.0
      %407 = vmatprep.subr.mxu0 0.0
      %408 = vmatpush1.msra.mxu0 0.0
      %409 = vmatprep.subr.mxu0 0.0
      %410 = vmatpush1.msra.mxu0 0.0
      %411 = vmatprep.subr.mxu0 0.0
      %412 = vmatpush1.msra.mxu0 0.0
      %413 = vmatprep.subr.mxu0 0.0
      %414 = vmatpush1.msra.mxu0 0.0
      %415 = vmatprep.subr.mxu0 0.0
      %416 = vmatpush1.msra.mxu0 0.0
      %417 = vmatprep.subr.mxu0 0.0
      %418 = vmatpush1.msra.mxu0 0.0
      %419 = vmatprep.subr.mxu0 0.0
      %420 = vmatpush1.msra.mxu0 0.0
      %421 = vmatprep.subr.mxu0 0.0
      %422 = vmatpush1.msra.mxu0 %v385
      %423 = vmatprep.subr.mxu0 0.0
      %424 = vmatpush1.msra.mxu0 %v384
      %425 = vmatprep.subr.mxu0 0.0
      %426 = vmatpush2.msra.mxu0 0.0
      %427 = vmatprep.subr.mxu0 0.0
      %428 = vmatpush2.msra.mxu0 0.0
      %429 = vmatprep.subr.mxu0 0.0
      %430 = vmatpush2.msra.mxu0 0.0
      %431 = vmatprep.subr.mxu0 0.0
      %432 = vmatpush2.msra.mxu0 0.0
      %433 = vmatprep.subr.mxu0 0.0
      %434 = vmatpush2.msra.mxu0 0.0
      %435 = vmatprep.subr.mxu0 0.0
      %436 = vmatpush2.msra.mxu0 0.0
      %437 = vmatprep.subr.mxu0 0.0
      %438 = vmatpush2.msra.mxu0 0.0
      %439 = vmatprep.subr.mxu0 0.0
      %440 = vmatpush2.msra.mxu0 0.0
      %441 = vmatprep.subr.mxu0 0.0
      %442 = vmatpush2.msra.mxu0 0.0
      %443 = vmatprep.subr.mxu0 0.0
      %444 = vmatpush2.msra.mxu0 0.0
      %445 = vmatprep.subr.mxu0 0.0
      %446 = vmatpush2.msra.mxu0 0.0
      %447 = vmatprep.subr.mxu0 0.0
      %448 = vmatpush2.msra.mxu0 0.0
      %449 = vmatprep.subr.mxu0 0.0
      %450 = vmatpush2.msra.mxu0 0.0
      %451 = vmatprep.subr.mxu0 0.0
      %452 = vmatpush2.msra.mxu0 0.0
      %453 = vmatprep.subr.mxu0 0.0
      %454 = vmatpush2.msra.mxu0 0.0
      %455 = vmatprep.subr.mxu0 0.0
      %456 = vmatpush2.msra.mxu0 0.0
      %457 = vmatprep.mubr.f32.mxu0 0.0
      %458 = vmatmul.mubr.f32.gmra.mxu0 %v391
      %v459 = vpop.f32.mrf.mxu0
      %v460 = vadd.f32 0.0, %v459
      %v461 = vpop.f32.mrf.mxu0
      %462 = vdwg.mxu0
      %v463 = vadd.f32 %v382, %v460
      %s464 = scalar_lea.vmem %s280, 32
      %v465 = vld [vmem:[%s464] sm:$0xff]
      %v466 = vld [vmem:[%s464 + $0x8] sm:$0xff]
      %vm467 = vcmask 1045504
      %v468 = vrot.slane %v303, 2
      %v469 = vrot.slane %v304, 2
      %v470 = vsel %vm467, %v468, %v469
      %v471 = vsel %vm308, %v470, 0
      %473 = vmatprep.subr.mxu0 0.0
      %474 = vmatpush1.msra.mxu0 0.0
      %475 = vmatprep.subr.mxu0 0.0
      %476 = vmatpush1.msra.mxu0 0.0
      %477 = vmatprep.subr.mxu0 0.0
      %478 = vmatpush1.msra.mxu0 0.0
      %479 = vmatprep.subr.mxu0 0.0
      %480 = vmatpush1.msra.mxu0 0.0
      %481 = vmatprep.subr.mxu0 0.0
      %482 = vmatpush1.msra.mxu0 0.0
      %483 = vmatprep.subr.mxu0 0.0
      %484 = vmatpush1.msra.mxu0 0.0
      %485 = vmatprep.subr.mxu0 0.0
      %486 = vmatpush1.msra.mxu0 0.0
      %487 = vmatprep.subr.mxu0 0.0
      %488 = vmatpush1.msra.mxu0 0.0
      %489 = vmatprep.subr.mxu0 0.0
      %490 = vmatpush1.msra.mxu0 0.0
      %491 = vmatprep.subr.mxu0 0.0
      %492 = vmatpush1.msra.mxu0 0.0
      %493 = vmatprep.subr.mxu0 0.0
      %494 = vmatpush1.msra.mxu0 0.0
      %495 = vmatprep.subr.mxu0 0.0
      %496 = vmatpush1.msra.mxu0 0.0
      %497 = vmatprep.subr.mxu0 0.0
      %498 = vmatpush1.msra.mxu0 0.0
      %499 = vmatprep.subr.mxu0 0.0
      %500 = vmatpush1.msra.mxu0 0.0
      %501 = vmatprep.subr.mxu0 0.0
      %502 = vmatpush1.msra.mxu0 %v466
      %503 = vmatprep.subr.mxu0 0.0
      %504 = vmatpush1.msra.mxu0 %v465
      %505 = vmatprep.subr.mxu0 0.0
      %506 = vmatpush2.msra.mxu0 0.0
      %507 = vmatprep.subr.mxu0 0.0
      %508 = vmatpush2.msra.mxu0 0.0
      %509 = vmatprep.subr.mxu0 0.0
      %510 = vmatpush2.msra.mxu0 0.0
      %511 = vmatprep.subr.mxu0 0.0
      %512 = vmatpush2.msra.mxu0 0.0
      %513 = vmatprep.subr.mxu0 0.0
      %514 = vmatpush2.msra.mxu0 0.0
      %515 = vmatprep.subr.mxu0 0.0
      %516 = vmatpush2.msra.mxu0 0.0
      %517 = vmatprep.subr.mxu0 0.0
      %518 = vmatpush2.msra.mxu0 0.0
      %519 = vmatprep.subr.mxu0 0.0
      %520 = vmatpush2.msra.mxu0 0.0
      %521 = vmatprep.subr.mxu0 0.0
      %522 = vmatpush2.msra.mxu0 0.0
      %523 = vmatprep.subr.mxu0 0.0
      %524 = vmatpush2.msra.mxu0 0.0
      %525 = vmatprep.subr.mxu0 0.0
      %526 = vmatpush2.msra.mxu0 0.0
      %527 = vmatprep.subr.mxu0 0.0
      %528 = vmatpush2.msra.mxu0 0.0
      %529 = vmatprep.subr.mxu0 0.0
      %530 = vmatpush2.msra.mxu0 0.0
      %531 = vmatprep.subr.mxu0 0.0
      %532 = vmatpush2.msra.mxu0 0.0
      %533 = vmatprep.subr.mxu0 0.0
      %534 = vmatpush2.msra.mxu0 0.0
      %535 = vmatprep.subr.mxu0 0.0
      %536 = vmatpush2.msra.mxu0 0.0
      %537 = vmatprep.mubr.f32.mxu0 0.0
      %538 = vmatmul.mubr.f32.gmra.mxu0 %v471
      %v539 = vpop.f32.mrf.mxu0
      %v540 = vadd.f32 0.0, %v539
      %v541 = vpop.f32.mrf.mxu0
      %542 = vdwg.mxu0
      %v543 = vadd.f32 %v463, %v540
      %544 = vst.msk [vmem:[#allocation2] sm:$0xff] %vm308, %v543
      %p545 = scmp.eq.s32.totalorder %s22, 2
      // Predicated region
      $region41: #{famenet_forward.18} parent=35 // pred_check
        %p546 = pneg %p545
      $region42: #{famenet_forward.18} parent=35 // pred_check_branch
        %548 = sbr.rel (%p546) target = $region44
      $region43: #{famenet_forward.18} parent=35 // pred_region
        %v549 = vld [vmem:[#allocation2] sm:$0xff]
        %v550 = vld [vmem:[%s2] sm:$0x1]
        %v552 = vlaneseq
        %v553 = vshrl.u32 %v552, 7
        %v554 = vsub.s32 0, %v553
        %v555 = vrot.slane %v550, %v554
        %v557 = vadd.f32 %v549, %v555
        %v558 = vld [vmem:[%s288] sm:$0xff]
        %v559 = vadd.f32 %v557, %v558
        %v560 = vmax.f32 %v559, 0.0
        %561 = vst.msk [vmem:[%s296] sm:$0xff] %vm308, %v560
      $region44: #{famenet_forward.18} parent=35 // pred_fallthru
        _
      %p562 = scmp.lt.s32.totalorder %s20, 1
      %s563 = scalar_select %p562, %s20, 1
      %p564 = scmp.lt.s32.totalorder %s21, 7
      %s565 = scalar_select %p564, %s21, 7
      %s566 = smul.addr %s563, 8
      %s567 = sadd.s32 %s565, %s566
      %s568 = smul.addr %s567, 8
      %s569 = scalar_lea.vmem %s4, %s568
      // Predicated region
      $region45: #{famenet_forward.18} parent=35 // pred_check
        %p570 = pneg %p159
      $region46: #{famenet_forward.18} parent=35 // pred_check_branch
        %572 = sbr.rel (%p570) target = $region48
      $region47: #{famenet_forward.18} parent=35 // pred_region
        _
      $region48: #{famenet_forward.18} parent=35 // pred_fallthru
        _
    $region36: #{famenet_forward.18} parent=5 // pred_fallthru
      _
    %p573 = scmp.le.s32.totalorder 2, %s10
    // Predicated region
    $region49: #{famenet_forward.18} parent=5 // pred_check
      %p574 = pneg %p573
    $region50: #{famenet_forward.18} parent=5 // pred_check_branch
      %576 = sbr.rel (%p574) target = $region52
    $region51: #{famenet_forward.18} parent=5 // pred_region
      %s577 = ssub.s32 %s10, 2
      // Predicated region
      $region53: #{famenet_forward.18} parent=51 // pred_check
        %p578 = pneg %p165
      $region54: #{famenet_forward.18} parent=51 // pred_check_branch
        %580 = sbr.rel (%p578) target = $region56
      $region55: #{famenet_forward.18} parent=51 // pred_region
        %p581 = scmp.lt.s32.totalorder %s23, 1
        %s582 = scalar_select %p581, %s23, 1
        %p583 = scmp.lt.s32.totalorder %s24, 7
        %s584 = scalar_select %p583, %s24, 7
        %s585 = smul.addr %s582, 8
        %s586 = sadd.s32 %s584, %s585
        %s587 = smul.addr %s586, 8
        %s588 = scalar_lea.vmem %s4, %s587
      $region56: #{famenet_forward.18} parent=51 // pred_fallthru
        _
    $region52: #{famenet_forward.18} parent=5 // pred_fallthru
      _
  $region6: #{famenet_forward.18} parent=0 // loop_footer
    %s14 = sadd.s32 1, %s10
  $region7: #{famenet_forward.18} parent=0 // loop_footer_branch
    %9 = sbr.rel target = $region3
  $region8: #{famenet_forward.18} parent=0 // loop_exit
    _

// kernel: famenet_forward.19
$region0: #{famenet_forward.19}
  #allocation0 [shape = 'u32[]', space=smem, size = 0x4, offset = 0x4, fixed_abs, tag = 'smem constant byte address 0x4 - core index']
  #allocation1 [shape = 'u32[144,128]{1,0:T(1,128)}', space=vmem, size = 0x12000, scoped, tag = 'internal scratch']
  %s0 = inlined_call_operand.vmem [shape: f32[32,144], index: 0, kind: input, shape index: {}]
  %s1 = inlined_call_operand.vmem [shape: f32[144,32], index: 1, kind: input, shape index: {}]
  %s2 = inlined_call_operand.vmem [shape: f32[1,32], index: 2, kind: input, shape index: {}]
  %s3 = inlined_call_operand.vmem [shape: f32[32,32], index: 3, kind: output, shape index: {}]
  %s4 = sld [smem:[#allocation0]]
  $region22: #{famenet_forward.19} parent=0
    _
  %s6 = ssub.s32 1, %s4
  %s7 = scalar_select 0, %s6, %s4
  // Predicated region
  $region2: #{famenet_forward.19} parent=0 // pred_check
    _
  $region3: #{famenet_forward.19} parent=0 // pred_check_branch
    %9 = sbr.rel (0) target = $region5
  $region4: #{famenet_forward.19} parent=0 // pred_region
    _
  $region5: #{famenet_forward.19} parent=0 // pred_fallthru
    _
  // Predicated region
  $region6: #{famenet_forward.19} parent=0 // pred_check
    _
  $region7: #{famenet_forward.19} parent=0 // pred_check_branch
    %11 = sbr.rel (0) target = $region9
  $region8: #{famenet_forward.19} parent=0 // pred_region
    _
  $region9: #{famenet_forward.19} parent=0 // pred_fallthru
    _
  // Predicated region
  $region10: #{famenet_forward.19} parent=0 // pred_check
    _
  $region11: #{famenet_forward.19} parent=0 // pred_check_branch
    %13 = sbr.rel (0) target = $region13
  $region12: #{famenet_forward.19} parent=0 // pred_region
    _
  $region13: #{famenet_forward.19} parent=0 // pred_fallthru
    _
  %v14 = vld [vmem:[%s0] sm:$0xff]
  %v15 = vld [vmem:[%s0 + $0x8] sm:$0xff]
  %v16 = vld [vmem:[%s0 + $0x10] sm:$0xff]
  %v17 = vld [vmem:[%s0 + $0x18] sm:$0xff]
  %v18 = vld [vmem:[%s0 + $0x20] sm:$0xff]
  %v19 = vld [vmem:[%s0 + $0x28] sm:$0xff]
  %v20 = vld [vmem:[%s0 + $0x30] sm:$0xff]
  %v21 = vld [vmem:[%s0 + $0x38] sm:$0xff]
  %v22 = vld [vmem:[%s1] sm:$0xff]
  %v23 = vld [vmem:[%s1 + $0x8] sm:$0xff]
  %v24 = vld [vmem:[%s1 + $0x10] sm:$0xff]
  %v25 = vld [vmem:[%s1 + $0x18] sm:$0xff]
  %v26 = vld [vmem:[%s1 + $0x20] sm:$0xff]
  %v27 = vld [vmem:[%s1 + $0x28] sm:$0xff]
  %v28 = vld [vmem:[%s1 + $0x30] sm:$0xff]
  %v29 = vld [vmem:[%s1 + $0x38] sm:$0xff]
  %v30 = vld [vmem:[%s1 + $0x40] sm:$0xff]
  %v31 = vld [vmem:[%s1 + $0x48] sm:$0xff]
  %v32 = vld [vmem:[%s1 + $0x50] sm:$0xff]
  %v33 = vld [vmem:[%s1 + $0x58] sm:$0xff]
  %v34 = vld [vmem:[%s1 + $0x60] sm:$0xff]
  %v35 = vld [vmem:[%s1 + $0x68] sm:$0xff]
  %v36 = vld [vmem:[%s1 + $0x70] sm:$0xff]
  %v37 = vld [vmem:[%s1 + $0x78] sm:$0xff]
  %v38 = vld [vmem:[%s1 + $0x80] sm:$0xff]
  %v39 = vld [vmem:[%s1 + $0x88] sm:$0xff]
  %v40 = vld [vmem:[%s2] sm:$0x1]
  %v42 = vlaneseq
  %v43 = vshrl.u32 %v42, 7
  %v44 = vsub.s32 0, %v43
  %v45 = vrot.slane %v40, %v44
  %vm47 = vcmask 130048
  %v49 = vsel %vm47, %v15, 0
  %v52 = vsel %vm47, %v17, 0
  %v55 = vsel %vm47, %v19, 0
  %v58 = vsel %vm47, %v21, 0
  %60 = vmatprep.subr.mxu0 0.0
  %61 = vmatpush1.msra.mxu0 %v37
  %62 = vmatprep.subr.mxu0 0.0
  %63 = vmatpush1.msra.mxu0 %v36
  %64 = vmatprep.subr.mxu0 0.0
  %65 = vmatpush1.msra.mxu0 %v35
  %66 = vmatprep.subr.mxu0 0.0
  %67 = vmatpush1.msra.mxu0 %v34
  %68 = vmatprep.subr.mxu0 0.0
  %69 = vmatpush1.msra.mxu0 %v33
  %70 = vmatprep.subr.mxu0 0.0
  %71 = vmatpush1.msra.mxu0 %v32
  %72 = vmatprep.subr.mxu0 0.0
  %73 = vmatpush1.msra.mxu0 %v31
  %74 = vmatprep.subr.mxu0 0.0
  %75 = vmatpush1.msra.mxu0 %v30
  %76 = vmatprep.subr.mxu0 0.0
  %77 = vmatpush1.msra.mxu0 %v29
  %78 = vmatprep.subr.mxu0 0.0
  %79 = vmatpush1.msra.mxu0 %v28
  %80 = vmatprep.subr.mxu0 0.0
  %81 = vmatpush1.msra.mxu0 %v27
  %82 = vmatprep.subr.mxu0 0.0
  %83 = vmatpush1.msra.mxu0 %v26
  %84 = vmatprep.subr.mxu0 0.0
  %85 = vmatpush1.msra.mxu0 %v25
  %86 = vmatprep.subr.mxu0 0.0
  %87 = vmatpush1.msra.mxu0 %v24
  %88 = vmatprep.subr.mxu0 0.0
  %89 = vmatpush1.msra.mxu0 %v23
  %90 = vmatprep.subr.mxu0 0.0
  %91 = vmatpush1.msra.mxu0 %v22
  %92 = vmatprep.subr.mxu0 0.0
  %93 = vmatpush2.msra.mxu0 0.0
  %94 = vmatprep.subr.mxu0 0.0
  %95 = vmatpush2.msra.mxu0 0.0
  %96 = vmatprep.subr.mxu0 0.0
  %97 = vmatpush2.msra.mxu0 0.0
  %98 = vmatprep.subr.mxu0 0.0
  %99 = vmatpush2.msra.mxu0 0.0
  %100 = vmatprep.subr.mxu0 0.0
  %101 = vmatpush2.msra.mxu0 0.0
  %102 = vmatprep.subr.mxu0 0.0
  %103 = vmatpush2.msra.mxu0 0.0
  %104 = vmatprep.subr.mxu0 0.0
  %105 = vmatpush2.msra.mxu0 0.0
  %106 = vmatprep.subr.mxu0 0.0
  %107 = vmatpush2.msra.mxu0 0.0
  %108 = vmatprep.subr.mxu0 0.0
  %109 = vmatpush2.msra.mxu0 0.0
  %110 = vmatprep.subr.mxu0 0.0
  %111 = vmatpush2.msra.mxu0 0.0
  %112 = vmatprep.subr.mxu0 0.0
  %113 = vmatpush2.msra.mxu0 0.0
  %114 = vmatprep.subr.mxu0 0.0
  %115 = vmatpush2.msra.mxu0 0.0
  %116 = vmatprep.subr.mxu0 0.0
  %117 = vmatpush2.msra.mxu0 0.0
  %118 = vmatprep.subr.mxu0 0.0
  %119 = vmatpush2.msra.mxu0 0.0
  %120 = vmatprep.subr.mxu0 0.0
  %121 = vmatpush2.msra.mxu0 %v39
  %122 = vmatprep.subr.mxu0 0.0
  %123 = vmatpush2.msra.mxu0 %v38
  %124 = vmatprep.mubr.f32.mxu0 %v49
  %125 = vmatmul.mubr.f32.gmra.mxu0 %v14
  %v126 = vpop.f32.mrf.mxu0
  %v127 = vadd.f32 %v45, %v126
  %v128 = vpop.f32.mrf.mxu0
  %129 = vmatprep.mubr.f32.mxu0 %v52
  %130 = vmatmul.mubr.f32.gmra.mxu0 %v16
  %v131 = vpop.f32.mrf.mxu0
  %v132 = vadd.f32 %v45, %v131
  %v133 = vpop.f32.mrf.mxu0
  %134 = vmatprep.mubr.f32.mxu0 %v55
  %135 = vmatmul.mubr.f32.gmra.mxu0 %v18
  %v136 = vpop.f32.mrf.mxu0
  %v137 = vadd.f32 %v45, %v136
  %v138 = vpop.f32.mrf.mxu0
  %139 = vmatprep.mubr.f32.mxu0 %v58
  %140 = vmatmul.mubr.f32.gmra.mxu0 %v20
  %v141 = vpop.f32.mrf.mxu0
  %v142 = vadd.f32 %v45, %v141
  %v143 = vpop.f32.mrf.mxu0
  %144 = vdwg.mxu0
  %v145 = vmax.f32 %v127, 0.0
  %v146 = vmax.f32 %v132, 0.0
  %v147 = vmax.f32 %v137, 0.0
  %v148 = vmax.f32 %v142, 0.0
  %vm149 = vcmask 261120
  %150 = vst.msk [vmem:[%s3] sm:$0xff] %vm149, %v145
  %151 = vst.msk [vmem:[%s3 + $0x8] sm:$0xff] %vm149, %v146
  %152 = vst.msk [vmem:[%s3 + $0x10] sm:$0xff] %vm149, %v147
  %153 = vst.msk [vmem:[%s3 + $0x18] sm:$0xff] %vm149, %v148
  // Predicated region
  $region14: #{famenet_forward.19} parent=0 // pred_check
    _
  $region15: #{famenet_forward.19} parent=0 // pred_check_branch
    %155 = sbr.rel (0) target = $region17
  $region16: #{famenet_forward.19} parent=0 // pred_region
    _
  $region17: #{famenet_forward.19} parent=0 // pred_fallthru
    _
  // Predicated region
  $region18: #{famenet_forward.19} parent=0 // pred_check
    _
  $region19: #{famenet_forward.19} parent=0 // pred_check_branch
    %157 = sbr.rel (0) target = $region21
  $region20: #{famenet_forward.19} parent=0 // pred_region
    _
  $region21: #{famenet_forward.19} parent=0 // pred_fallthru
    _

// kernel: famenet_forward.20
$region0: #{famenet_forward.20}
  #allocation0 [shape = 'u32[]', space=smem, size = 0x4, offset = 0x4, fixed_abs, tag = 'smem constant byte address 0x4 - core index']
  #allocation1 [shape = 'u32[144,128]{1,0:T(1,128)}', space=vmem, size = 0x12000, scoped, tag = 'internal scratch']
  %s0 = inlined_call_operand.vmem [shape: f32[8,288], index: 0, kind: input, shape index: {}]
  %s1 = inlined_call_operand.vmem [shape: f32[288,64], index: 1, kind: input, shape index: {}]
  %s2 = inlined_call_operand.vmem [shape: f32[1,64], index: 2, kind: input, shape index: {}]
  %s3 = inlined_call_operand.vmem [shape: f32[8,64], index: 3, kind: output, shape index: {}]
  %s4 = sld [smem:[#allocation0]]
  $region22: #{famenet_forward.20} parent=0
    _
  %s6 = ssub.s32 1, %s4
  %s7 = scalar_select 0, %s6, %s4
  // Predicated region
  $region2: #{famenet_forward.20} parent=0 // pred_check
    _
  $region3: #{famenet_forward.20} parent=0 // pred_check_branch
    %9 = sbr.rel (0) target = $region5
  $region4: #{famenet_forward.20} parent=0 // pred_region
    _
  $region5: #{famenet_forward.20} parent=0 // pred_fallthru
    _
  // Predicated region
  $region6: #{famenet_forward.20} parent=0 // pred_check
    _
  $region7: #{famenet_forward.20} parent=0 // pred_check_branch
    %11 = sbr.rel (0) target = $region9
  $region8: #{famenet_forward.20} parent=0 // pred_region
    _
  $region9: #{famenet_forward.20} parent=0 // pred_fallthru
    _
  // Predicated region
  $region10: #{famenet_forward.20} parent=0 // pred_check
    _
  $region11: #{famenet_forward.20} parent=0 // pred_check_branch
    %13 = sbr.rel (0) target = $region13
  $region12: #{famenet_forward.20} parent=0 // pred_region
    _
  $region13: #{famenet_forward.20} parent=0 // pred_fallthru
    _
  %v14 = vld [vmem:[%s0] sm:$0xff]
  %v15 = vld [vmem:[%s0 + $0x8] sm:$0xff]
  %v16 = vld [vmem:[%s0 + $0x10] sm:$0xff]
  %v17 = vld [vmem:[%s1] sm:$0xff]
  %v18 = vld [vmem:[%s1 + $0x8] sm:$0xff]
  %v19 = vld [vmem:[%s1 + $0x10] sm:$0xff]
  %v20 = vld [vmem:[%s1 + $0x18] sm:$0xff]
  %v21 = vld [vmem:[%s1 + $0x20] sm:$0xff]
  %v22 = vld [vmem:[%s1 + $0x28] sm:$0xff]
  %v23 = vld [vmem:[%s1 + $0x30] sm:$0xff]
  %v24 = vld [vmem:[%s1 + $0x38] sm:$0xff]
  %v25 = vld [vmem:[%s1 + $0x40] sm:$0xff]
  %v26 = vld [vmem:[%s1 + $0x48] sm:$0xff]
  %v27 = vld [vmem:[%s1 + $0x50] sm:$0xff]
  %v28 = vld [vmem:[%s1 + $0x58] sm:$0xff]
  %v29 = vld [vmem:[%s1 + $0x60] sm:$0xff]
  %v30 = vld [vmem:[%s1 + $0x68] sm:$0xff]
  %v31 = vld [vmem:[%s1 + $0x70] sm:$0xff]
  %v32 = vld [vmem:[%s1 + $0x78] sm:$0xff]
  %v33 = vld [vmem:[%s1 + $0x80] sm:$0xff]
  %v34 = vld [vmem:[%s1 + $0x88] sm:$0xff]
  %v35 = vld [vmem:[%s1 + $0x90] sm:$0xff]
  %v36 = vld [vmem:[%s1 + $0x98] sm:$0xff]
  %v37 = vld [vmem:[%s1 + $0xa0] sm:$0xff]
  %v38 = vld [vmem:[%s1 + $0xa8] sm:$0xff]
  %v39 = vld [vmem:[%s1 + $0xb0] sm:$0xff]
  %v40 = vld [vmem:[%s1 + $0xb8] sm:$0xff]
  %v41 = vld [vmem:[%s1 + $0xc0] sm:$0xff]
  %v42 = vld [vmem:[%s1 + $0xc8] sm:$0xff]
  %v43 = vld [vmem:[%s1 + $0xd0] sm:$0xff]
  %v44 = vld [vmem:[%s1 + $0xd8] sm:$0xff]
  %v45 = vld [vmem:[%s1 + $0xe0] sm:$0xff]
  %v46 = vld [vmem:[%s1 + $0xe8] sm:$0xff]
  %v47 = vld [vmem:[%s1 + $0xf0] sm:$0xff]
  %v48 = vld [vmem:[%s1 + $0xf8] sm:$0xff]
  %v49 = vld [vmem:[%s1 + $0x100] sm:$0xff]
  %v50 = vld [vmem:[%s1 + $0x108] sm:$0xff]
  %v51 = vld [vmem:[%s1 + $0x110] sm:$0xff]
  %v52 = vld [vmem:[%s1 + $0x118] sm:$0xff]
  %v53 = vld [vmem:[%s2] sm:$0x1]
  %v55 = vlaneseq
  %v56 = vshrl.u32 %v55, 7
  %v57 = vsub.s32 0, %v56
  %v58 = vrot.slane %v53, %v57
  %vm60 = vcmask 261120
  %v62 = vsel %vm60, %v16, 0
  %64 = vmatprep.subr.mxu0 0.0
  %65 = vmatpush1.msra.mxu0 %v32
  %66 = vmatprep.subr.mxu0 0.0
  %67 = vmatpush1.msra.mxu0 %v31
  %68 = vmatprep.subr.mxu0 0.0
  %69 = vmatpush1.msra.mxu0 %v30
  %70 = vmatprep.subr.mxu0 0.0
  %71 = vmatpush1.msra.mxu0 %v29
  %72 = vmatprep.subr.mxu0 0.0
  %73 = vmatpush1.msra.mxu0 %v28
  %74 = vmatprep.subr.mxu0 0.0
  %75 = vmatpush1.msra.mxu0 %v27
  %76 = vmatprep.subr.mxu0 0.0
  %77 = vmatpush1.msra.mxu0 %v26
  %78 = vmatprep.subr.mxu0 0.0
  %79 = vmatpush1.msra.mxu0 %v25
  %80 = vmatprep.subr.mxu0 0.0
  %81 = vmatpush1.msra.mxu0 %v24
  %82 = vmatprep.subr.mxu0 0.0
  %83 = vmatpush1.msra.mxu0 %v23
  %84 = vmatprep.subr.mxu0 0.0
  %85 = vmatpush1.msra.mxu0 %v22
  %86 = vmatprep.subr.mxu0 0.0
  %87 = vmatpush1.msra.mxu0 %v21
  %88 = vmatprep.subr.mxu0 0.0
  %89 = vmatpush1.msra.mxu0 %v20
  %90 = vmatprep.subr.mxu0 0.0
  %91 = vmatpush1.msra.mxu0 %v19
  %92 = vmatprep.subr.mxu0 0.0
  %93 = vmatpush1.msra.mxu0 %v18
  %94 = vmatprep.subr.mxu0 0.0
  %95 = vmatpush1.msra.mxu0 %v17
  %96 = vmatprep.subr.mxu0 0.0
  %97 = vmatpush2.msra.mxu0 %v48
  %98 = vmatprep.subr.mxu0 0.0
  %99 = vmatpush2.msra.mxu0 %v47
  %100 = vmatprep.subr.mxu0 0.0
  %101 = vmatpush2.msra.mxu0 %v46
  %102 = vmatprep.subr.mxu0 0.0
  %103 = vmatpush2.msra.mxu0 %v45
  %104 = vmatprep.subr.mxu0 0.0
  %105 = vmatpush2.msra.mxu0 %v44
  %106 = vmatprep.subr.mxu0 0.0
  %107 = vmatpush2.msra.mxu0 %v43
  %108 = vmatprep.subr.mxu0 0.0
  %109 = vmatpush2.msra.mxu0 %v42
  %110 = vmatprep.subr.mxu0 0.0
  %111 = vmatpush2.msra.mxu0 %v41
  %112 = vmatprep.subr.mxu0 0.0
  %113 = vmatpush2.msra.mxu0 %v40
  %114 = vmatprep.subr.mxu0 0.0
  %115 = vmatpush2.msra.mxu0 %v39
  %116 = vmatprep.subr.mxu0 0.0
  %117 = vmatpush2.msra.mxu0 %v38
  %118 = vmatprep.subr.mxu0 0.0
  %119 = vmatpush2.msra.mxu0 %v37
  %120 = vmatprep.subr.mxu0 0.0
  %121 = vmatpush2.msra.mxu0 %v36
  %122 = vmatprep.subr.mxu0 0.0
  %123 = vmatpush2.msra.mxu0 %v35
  %124 = vmatprep.subr.mxu0 0.0
  %125 = vmatpush2.msra.mxu0 %v34
  %126 = vmatprep.subr.mxu0 0.0
  %127 = vmatpush2.msra.mxu0 %v33
  %128 = vmatprep.mubr.f32.mxu0 %v15
  %129 = vmatmul.mubr.f32.gmra.mxu0 %v14
  %v130 = vpop.f32.mrf.mxu0
  %v131 = vadd.f32 %v58, %v130
  %v132 = vpop.f32.mrf.mxu0
  %133 = vdwg.mxu0
  %134 = vmatprep.subr.mxu0 0.0
  %135 = vmatpush1.msra.mxu0 0.0
  %136 = vmatprep.subr.mxu0 0.0
  %137 = vmatpush1.msra.mxu0 0.0
  %138 = vmatprep.subr.mxu0 0.0
  %139 = vmatpush1.msra.mxu0 0.0
  %140 = vmatprep.subr.mxu0 0.0
  %141 = vmatpush1.msra.mxu0 0.0
  %142 = vmatprep.subr.mxu0 0.0
  %143 = vmatpush1.msra.mxu0 0.0
  %144 = vmatprep.subr.mxu0 0.0
  %145 = vmatpush1.msra.mxu0 0.0
  %146 = vmatprep.subr.mxu0 0.0
  %147 = vmatpush1.msra.mxu0 0.0
  %148 = vmatprep.subr.mxu0 0.0
  %149 = vmatpush1.msra.mxu0 0.0
  %150 = vmatprep.subr.mxu0 0.0
  %151 = vmatpush1.msra.mxu0 0.0
  %152 = vmatprep.subr.mxu0 0.0
  %153 = vmatpush1.msra.mxu0 0.0
  %154 = vmatprep.subr.mxu0 0.0
  %155 = vmatpush1.msra.mxu0 0.0
  %156 = vmatprep.subr.mxu0 0.0
  %157 = vmatpush1.msra.mxu0 0.0
  %158 = vmatprep.subr.mxu0 0.0
  %159 = vmatpush1.msra.mxu0 %v52
  %160 = vmatprep.subr.mxu0 0.0
  %161 = vmatpush1.msra.mxu0 %v51
  %162 = vmatprep.subr.mxu0 0.0
  %163 = vmatpush1.msra.mxu0 %v50
  %164 = vmatprep.subr.mxu0 0.0
  %165 = vmatpush1.msra.mxu0 %v49
  %166 = vmatprep.subr.mxu0 0.0
  %167 = vmatpush2.msra.mxu0 0.0
  %168 = vmatprep.subr.mxu0 0.0
  %169 = vmatpush2.msra.mxu0 0.0
  %170 = vmatprep.subr.mxu0 0.0
  %171 = vmatpush2.msra.mxu0 0.0
  %172 = vmatprep.subr.mxu0 0.0
  %173 = vmatpush2.msra.mxu0 0.0
  %174 = vmatprep.subr.mxu0 0.0
  %175 = vmatpush2.msra.mxu0 0.0
  %176 = vmatprep.subr.mxu0 0.0
  %177 = vmatpush2.msra.mxu0 0.0
  %178 = vmatprep.subr.mxu0 0.0
  %179 = vmatpush2.msra.mxu0 0.0
  %180 = vmatprep.subr.mxu0 0.0
  %181 = vmatpush2.msra.mxu0 0.0
  %182 = vmatprep.subr.mxu0 0.0
  %183 = vmatpush2.msra.mxu0 0.0
  %184 = vmatprep.subr.mxu0 0.0
  %185 = vmatpush2.msra.mxu0 0.0
  %186 = vmatprep.subr.mxu0 0.0
  %187 = vmatpush2.msra.mxu0 0.0
  %188 = vmatprep.subr.mxu0 0.0
  %189 = vmatpush2.msra.mxu0 0.0
  %190 = vmatprep.subr.mxu0 0.0
  %191 = vmatpush2.msra.mxu0 0.0
  %192 = vmatprep.subr.mxu0 0.0
  %193 = vmatpush2.msra.mxu0 0.0
  %194 = vmatprep.subr.mxu0 0.0
  %195 = vmatpush2.msra.mxu0 0.0
  %196 = vmatprep.subr.mxu0 0.0
  %197 = vmatpush2.msra.mxu0 0.0
  %198 = vmatprep.mubr.f32.mxu0 0.0
  %199 = vmatmul.mubr.f32.gmra.mxu0 %v62
  %v200 = vpop.f32.mrf.mxu0
  %v201 = vadd.f32 %v131, %v200
  %v202 = vpop.f32.mrf.mxu0
  %203 = vdwg.mxu0
  %v204 = vmax.f32 %v201, 0.0
  %vm205 = vcmask 523264
  %206 = vst.msk [vmem:[%s3] sm:$0xff] %vm205, %v204
  // Predicated region
  $region14: #{famenet_forward.20} parent=0 // pred_check
    _
  $region15: #{famenet_forward.20} parent=0 // pred_check_branch
    %208 = sbr.rel (0) target = $region17
  $region16: #{famenet_forward.20} parent=0 // pred_region
    _
  $region17: #{famenet_forward.20} parent=0 // pred_fallthru
    _
  // Predicated region
  $region18: #{famenet_forward.20} parent=0 // pred_check
    _
  $region19: #{famenet_forward.20} parent=0 // pred_check_branch
    %210 = sbr.rel (0) target = $region21
  $region20: #{famenet_forward.20} parent=0 // pred_region
    _
  $region21: #{famenet_forward.20} parent=0 // pred_fallthru
    _

// kernel: famenet_forward.21
$region0: #{famenet_forward.21}
  #allocation0 [shape = 'u32[]', space=smem, size = 0x4, offset = 0x4, fixed_abs, tag = 'smem constant byte address 0x4 - core index']
  #allocation1 [shape = 'u32[144,128]{1,0:T(1,128)}', space=vmem, size = 0x12000, scoped, tag = 'internal scratch']
  %s0 = inlined_call_operand.vmem [shape: f32[8,64], index: 0, kind: input, shape index: {}]
  %s1 = inlined_call_operand.vmem [shape: f32[64,32], index: 1, kind: input, shape index: {}]
  %s2 = inlined_call_operand.vmem [shape: f32[1,32], index: 2, kind: input, shape index: {}]
  %s3 = inlined_call_operand.vmem [shape: f32[8,32], index: 3, kind: output, shape index: {}]
  %s4 = sld [smem:[#allocation0]]
  $region22: #{famenet_forward.21} parent=0
    _
  %s6 = ssub.s32 1, %s4
  %s7 = scalar_select 0, %s6, %s4
  // Predicated region
  $region2: #{famenet_forward.21} parent=0 // pred_check
    _
  $region3: #{famenet_forward.21} parent=0 // pred_check_branch
    %9 = sbr.rel (0) target = $region5
  $region4: #{famenet_forward.21} parent=0 // pred_region
    _
  $region5: #{famenet_forward.21} parent=0 // pred_fallthru
    _
  // Predicated region
  $region6: #{famenet_forward.21} parent=0 // pred_check
    _
  $region7: #{famenet_forward.21} parent=0 // pred_check_branch
    %11 = sbr.rel (0) target = $region9
  $region8: #{famenet_forward.21} parent=0 // pred_region
    _
  $region9: #{famenet_forward.21} parent=0 // pred_fallthru
    _
  // Predicated region
  $region10: #{famenet_forward.21} parent=0 // pred_check
    _
  $region11: #{famenet_forward.21} parent=0 // pred_check_branch
    %13 = sbr.rel (0) target = $region13
  $region12: #{famenet_forward.21} parent=0 // pred_region
    _
  $region13: #{famenet_forward.21} parent=0 // pred_fallthru
    _
  %v14 = vld [vmem:[%s0] sm:$0xff]
  %v15 = vld [vmem:[%s1] sm:$0xff]
  %v16 = vld [vmem:[%s1 + $0x8] sm:$0xff]
  %v17 = vld [vmem:[%s1 + $0x10] sm:$0xff]
  %v18 = vld [vmem:[%s1 + $0x18] sm:$0xff]
  %v19 = vld [vmem:[%s1 + $0x20] sm:$0xff]
  %v20 = vld [vmem:[%s1 + $0x28] sm:$0xff]
  %v21 = vld [vmem:[%s1 + $0x30] sm:$0xff]
  %v22 = vld [vmem:[%s1 + $0x38] sm:$0xff]
  %v23 = vld [vmem:[%s2] sm:$0x1]
  %v25 = vlaneseq
  %v26 = vshrl.u32 %v25, 7
  %v27 = vsub.s32 0, %v26
  %v28 = vrot.slane %v23, %v27
  %vm30 = vcmask 523264
  %v32 = vsel %vm30, %v14, 0
  %34 = vmatprep.subr.mxu0 0.0
  %35 = vmatpush1.msra.mxu0 0.0
  %36 = vmatprep.subr.mxu0 0.0
  %37 = vmatpush1.msra.mxu0 0.0
  %38 = vmatprep.subr.mxu0 0.0
  %39 = vmatpush1.msra.mxu0 0.0
  %40 = vmatprep.subr.mxu0 0.0
  %41 = vmatpush1.msra.mxu0 0.0
  %42 = vmatprep.subr.mxu0 0.0
  %43 = vmatpush1.msra.mxu0 0.0
  %44 = vmatprep.subr.mxu0 0.0
  %45 = vmatpush1.msra.mxu0 0.0
  %46 = vmatprep.subr.mxu0 0.0
  %47 = vmatpush1.msra.mxu0 0.0
  %48 = vmatprep.subr.mxu0 0.0
  %49 = vmatpush1.msra.mxu0 0.0
  %50 = vmatprep.subr.mxu0 0.0
  %51 = vmatpush1.msra.mxu0 %v22
  %52 = vmatprep.subr.mxu0 0.0
  %53 = vmatpush1.msra.mxu0 %v21
  %54 = vmatprep.subr.mxu0 0.0
  %55 = vmatpush1.msra.mxu0 %v20
  %56 = vmatprep.subr.mxu0 0.0
  %57 = vmatpush1.msra.mxu0 %v19
  %58 = vmatprep.subr.mxu0 0.0
  %59 = vmatpush1.msra.mxu0 %v18
  %60 = vmatprep.subr.mxu0 0.0
  %61 = vmatpush1.msra.mxu0 %v17
  %62 = vmatprep.subr.mxu0 0.0
  %63 = vmatpush1.msra.mxu0 %v16
  %64 = vmatprep.subr.mxu0 0.0
  %65 = vmatpush1.msra.mxu0 %v15
  %66 = vmatprep.subr.mxu0 0.0
  %67 = vmatpush2.msra.mxu0 0.0
  %68 = vmatprep.subr.mxu0 0.0
  %69 = vmatpush2.msra.mxu0 0.0
  %70 = vmatprep.subr.mxu0 0.0
  %71 = vmatpush2.msra.mxu0 0.0
  %72 = vmatprep.subr.mxu0 0.0
  %73 = vmatpush2.msra.mxu0 0.0
  %74 = vmatprep.subr.mxu0 0.0
  %75 = vmatpush2.msra.mxu0 0.0
  %76 = vmatprep.subr.mxu0 0.0
  %77 = vmatpush2.msra.mxu0 0.0
  %78 = vmatprep.subr.mxu0 0.0
  %79 = vmatpush2.msra.mxu0 0.0
  %80 = vmatprep.subr.mxu0 0.0
  %81 = vmatpush2.msra.mxu0 0.0
  %82 = vmatprep.subr.mxu0 0.0
  %83 = vmatpush2.msra.mxu0 0.0
  %84 = vmatprep.subr.mxu0 0.0
  %85 = vmatpush2.msra.mxu0 0.0
  %86 = vmatprep.subr.mxu0 0.0
  %87 = vmatpush2.msra.mxu0 0.0
  %88 = vmatprep.subr.mxu0 0.0
  %89 = vmatpush2.msra.mxu0 0.0
  %90 = vmatprep.subr.mxu0 0.0
  %91 = vmatpush2.msra.mxu0 0.0
  %92 = vmatprep.subr.mxu0 0.0
  %93 = vmatpush2.msra.mxu0 0.0
  %94 = vmatprep.subr.mxu0 0.0
  %95 = vmatpush2.msra.mxu0 0.0
  %96 = vmatprep.subr.mxu0 0.0
  %97 = vmatpush2.msra.mxu0 0.0
  %98 = vmatprep.mubr.f32.mxu0 0.0
  %99 = vmatmul.mubr.f32.gmra.mxu0 %v32
  %v100 = vpop.f32.mrf.mxu0
  %v101 = vadd.f32 %v28, %v100
  %v102 = vpop.f32.mrf.mxu0
  %103 = vdwg.mxu0
  %vm104 = vcmask 261120
  %105 = vst.msk [vmem:[%s3] sm:$0xff] %vm104, %v101
  // Predicated region
  $region14: #{famenet_forward.21} parent=0 // pred_check
    _
  $region15: #{famenet_forward.21} parent=0 // pred_check_branch
    %107 = sbr.rel (0) target = $region17
  $region16: #{famenet_forward.21} parent=0 // pred_region
    _
  $region17: #{famenet_forward.21} parent=0 // pred_fallthru
    _
  // Predicated region
  $region18: #{famenet_forward.21} parent=0 // pred_check
    _
  $region19: #{famenet_forward.21} parent=0 // pred_check_branch
    %109 = sbr.rel (0) target = $region21
  $region20: #{famenet_forward.21} parent=0 // pred_region
    _
  $region21: #{famenet_forward.21} parent=0 // pred_fallthru
    _

// kernel: famenet_forward.22
$region0: #{famenet_forward.22}
  #allocation0 [shape = 'u32[]', space=smem, size = 0x4, offset = 0x4, fixed_abs, tag = 'smem constant byte address 0x4 - core index']
  #allocation1 [shape = 'u32[144,128]{1,0:T(1,128)}', space=vmem, size = 0x12000, scoped, tag = 'internal scratch']
  %s0 = inlined_call_operand.vmem [shape: f32[32,32], index: 0, kind: input, shape index: {}]
  %s1 = inlined_call_operand.vmem [shape: f32[32,32], index: 1, kind: input, shape index: {}]
  %s2 = inlined_call_operand.vmem [shape: f32[1,32], index: 2, kind: input, shape index: {}]
  %s3 = inlined_call_operand.vmem [shape: f32[32,32], index: 3, kind: input, shape index: {}]
  %s4 = inlined_call_operand.vmem [shape: f32[32,32], index: 4, kind: output, shape index: {}]
  %s5 = sld [smem:[#allocation0]]
  $region26: #{famenet_forward.22} parent=0
    _
  %s7 = ssub.s32 1, %s5
  %s8 = scalar_select 0, %s7, %s5
  // Predicated region
  $region2: #{famenet_forward.22} parent=0 // pred_check
    _
  $region3: #{famenet_forward.22} parent=0 // pred_check_branch
    %10 = sbr.rel (0) target = $region5
  $region4: #{famenet_forward.22} parent=0 // pred_region
    _
  $region5: #{famenet_forward.22} parent=0 // pred_fallthru
    _
  // Predicated region
  $region6: #{famenet_forward.22} parent=0 // pred_check
    _
  $region7: #{famenet_forward.22} parent=0 // pred_check_branch
    %12 = sbr.rel (0) target = $region9
  $region8: #{famenet_forward.22} parent=0 // pred_region
    _
  $region9: #{famenet_forward.22} parent=0 // pred_fallthru
    _
  // Predicated region
  $region10: #{famenet_forward.22} parent=0 // pred_check
    _
  $region11: #{famenet_forward.22} parent=0 // pred_check_branch
    %14 = sbr.rel (0) target = $region13
  $region12: #{famenet_forward.22} parent=0 // pred_region
    _
  $region13: #{famenet_forward.22} parent=0 // pred_fallthru
    _
  // Predicated region
  $region14: #{famenet_forward.22} parent=0 // pred_check
    _
  $region15: #{famenet_forward.22} parent=0 // pred_check_branch
    %16 = sbr.rel (0) target = $region17
  $region16: #{famenet_forward.22} parent=0 // pred_region
    _
  $region17: #{famenet_forward.22} parent=0 // pred_fallthru
    _
  %v17 = vld [vmem:[%s0] sm:$0xff]
  %v18 = vld [vmem:[%s0 + $0x8] sm:$0xff]
  %v19 = vld [vmem:[%s0 + $0x10] sm:$0xff]
  %v20 = vld [vmem:[%s0 + $0x18] sm:$0xff]
  %v21 = vld [vmem:[%s1] sm:$0xff]
  %v22 = vld [vmem:[%s1 + $0x8] sm:$0xff]
  %v23 = vld [vmem:[%s1 + $0x10] sm:$0xff]
  %v24 = vld [vmem:[%s1 + $0x18] sm:$0xff]
  %v25 = vld [vmem:[%s2] sm:$0x1]
  %v27 = vlaneseq
  %v28 = vshrl.u32 %v27, 7
  %v29 = vsub.s32 0, %v28
  %v30 = vrot.slane %v25, %v29
  %vm32 = vcmask 261120
  %v34 = vsel %vm32, %v17, 0
  %v37 = vsel %vm32, %v18, 0
  %v40 = vsel %vm32, %v19, 0
  %v43 = vsel %vm32, %v20, 0
  %45 = vmatprep.subr.mxu0 0.0
  %46 = vmatpush1.msra.mxu0 0.0
  %47 = vmatprep.subr.mxu0 0.0
  %48 = vmatpush1.msra.mxu0 0.0
  %49 = vmatprep.subr.mxu0 0.0
  %50 = vmatpush1.msra.mxu0 0.0
  %51 = vmatprep.subr.mxu0 0.0
  %52 = vmatpush1.msra.mxu0 0.0
  %53 = vmatprep.subr.mxu0 0.0
  %54 = vmatpush1.msra.mxu0 0.0
  %55 = vmatprep.subr.mxu0 0.0
  %56 = vmatpush1.msra.mxu0 0.0
  %57 = vmatprep.subr.mxu0 0.0
  %58 = vmatpush1.msra.mxu0 0.0
  %59 = vmatprep.subr.mxu0 0.0
  %60 = vmatpush1.msra.mxu0 0.0
  %61 = vmatprep.subr.mxu0 0.0
  %62 = vmatpush1.msra.mxu0 0.0
  %63 = vmatprep.subr.mxu0 0.0
  %64 = vmatpush1.msra.mxu0 0.0
  %65 = vmatprep.subr.mxu0 0.0
  %66 = vmatpush1.msra.mxu0 0.0
  %67 = vmatprep.subr.mxu0 0.0
  %68 = vmatpush1.msra.mxu0 0.0
  %69 = vmatprep.subr.mxu0 0.0
  %70 = vmatpush1.msra.mxu0 %v24
  %71 = vmatprep.subr.mxu0 0.0
  %72 = vmatpush1.msra.mxu0 %v23
  %73 = vmatprep.subr.mxu0 0.0
  %74 = vmatpush1.msra.mxu0 %v22
  %75 = vmatprep.subr.mxu0 0.0
  %76 = vmatpush1.msra.mxu0 %v21
  %77 = vmatprep.subr.mxu0 0.0
  %78 = vmatpush2.msra.mxu0 0.0
  %79 = vmatprep.subr.mxu0 0.0
  %80 = vmatpush2.msra.mxu0 0.0
  %81 = vmatprep.subr.mxu0 0.0
  %82 = vmatpush2.msra.mxu0 0.0
  %83 = vmatprep.subr.mxu0 0.0
  %84 = vmatpush2.msra.mxu0 0.0
  %85 = vmatprep.subr.mxu0 0.0
  %86 = vmatpush2.msra.mxu0 0.0
  %87 = vmatprep.subr.mxu0 0.0
  %88 = vmatpush2.msra.mxu0 0.0
  %89 = vmatprep.subr.mxu0 0.0
  %90 = vmatpush2.msra.mxu0 0.0
  %91 = vmatprep.subr.mxu0 0.0
  %92 = vmatpush2.msra.mxu0 0.0
  %93 = vmatprep.subr.mxu0 0.0
  %94 = vmatpush2.msra.mxu0 0.0
  %95 = vmatprep.subr.mxu0 0.0
  %96 = vmatpush2.msra.mxu0 0.0
  %97 = vmatprep.subr.mxu0 0.0
  %98 = vmatpush2.msra.mxu0 0.0
  %99 = vmatprep.subr.mxu0 0.0
  %100 = vmatpush2.msra.mxu0 0.0
  %101 = vmatprep.subr.mxu0 0.0
  %102 = vmatpush2.msra.mxu0 0.0
  %103 = vmatprep.subr.mxu0 0.0
  %104 = vmatpush2.msra.mxu0 0.0
  %105 = vmatprep.subr.mxu0 0.0
  %106 = vmatpush2.msra.mxu0 0.0
  %107 = vmatprep.subr.mxu0 0.0
  %108 = vmatpush2.msra.mxu0 0.0
  %109 = vmatprep.mubr.f32.mxu0 0.0
  %110 = vmatmul.mubr.f32.gmra.mxu0 %v34
  %v111 = vpop.f32.mrf.mxu0
  %v112 = vadd.f32 %v30, %v111
  %v113 = vpop.f32.mrf.mxu0
  %114 = vmatprep.mubr.f32.mxu0 0.0
  %115 = vmatmul.mubr.f32.gmra.mxu0 %v37
  %v116 = vpop.f32.mrf.mxu0
  %v117 = vadd.f32 %v30, %v116
  %v118 = vpop.f32.mrf.mxu0
  %119 = vmatprep.mubr.f32.mxu0 0.0
  %120 = vmatmul.mubr.f32.gmra.mxu0 %v40
  %v121 = vpop.f32.mrf.mxu0
  %v122 = vadd.f32 %v30, %v121
  %v123 = vpop.f32.mrf.mxu0
  %124 = vmatprep.mubr.f32.mxu0 0.0
  %125 = vmatmul.mubr.f32.gmra.mxu0 %v43
  %v126 = vpop.f32.mrf.mxu0
  %v127 = vadd.f32 %v30, %v126
  %v128 = vpop.f32.mrf.mxu0
  %129 = vdwg.mxu0
  %v130 = vld [vmem:[%s3] sm:$0xff]
  %v131 = vld [vmem:[%s3 + $0x8] sm:$0xff]
  %v132 = vld [vmem:[%s3 + $0x10] sm:$0xff]
  %v133 = vld [vmem:[%s3 + $0x18] sm:$0xff]
  %v134 = vadd.f32 %v112, %v130
  %v135 = vadd.f32 %v117, %v131
  %v136 = vadd.f32 %v122, %v132
  %v137 = vadd.f32 %v127, %v133
  %138 = vst.msk [vmem:[%s4] sm:$0xff] %vm32, %v134
  %139 = vst.msk [vmem:[%s4 + $0x8] sm:$0xff] %vm32, %v135
  %140 = vst.msk [vmem:[%s4 + $0x10] sm:$0xff] %vm32, %v136
  %141 = vst.msk [vmem:[%s4 + $0x18] sm:$0xff] %vm32, %v137
  // Predicated region
  $region18: #{famenet_forward.22} parent=0 // pred_check
    _
  $region19: #{famenet_forward.22} parent=0 // pred_check_branch
    %143 = sbr.rel (0) target = $region21
  $region20: #{famenet_forward.22} parent=0 // pred_region
    _
  $region21: #{famenet_forward.22} parent=0 // pred_fallthru
    _
  // Predicated region
  $region22: #{famenet_forward.22} parent=0 // pred_check
    _
  $region23: #{famenet_forward.22} parent=0 // pred_check_branch
    %145 = sbr.rel (0) target = $region25
  $region24: #{famenet_forward.22} parent=0 // pred_region
    _
  $region25: #{famenet_forward.22} parent=0 // pred_fallthru
    _

// kernel: famenet_forward.23
$region0: #{famenet_forward.23}
  #allocation0 [shape = 'u32[]', space=smem, size = 0x4, offset = 0x4, fixed_abs, tag = 'smem constant byte address 0x4 - core index']
  #allocation1 [shape = 'u32[144,128]{1,0:T(1,128)}', space=vmem, size = 0x12000, scoped, tag = 'internal scratch']
  %s0 = inlined_call_operand.vmem [shape: f32[128,16], index: 0, kind: input, shape index: {}]
  %s1 = inlined_call_operand.vmem [shape: f32[16,32], index: 1, kind: input, shape index: {}]
  %s2 = inlined_call_operand.vmem [shape: f32[1,32], index: 2, kind: input, shape index: {}]
  %s3 = inlined_call_operand.vmem [shape: f32[128,32], index: 3, kind: input, shape index: {}]
  %s4 = inlined_call_operand.vmem [shape: f32[128,32], index: 4, kind: output, shape index: {}]
  %s5 = sld [smem:[#allocation0]]
  $region26: #{famenet_forward.23} parent=0
    _
  %s7 = ssub.s32 1, %s5
  %s8 = scalar_select 0, %s7, %s5
  // Predicated region
  $region2: #{famenet_forward.23} parent=0 // pred_check
    _
  $region3: #{famenet_forward.23} parent=0 // pred_check_branch
    %10 = sbr.rel (0) target = $region5
  $region4: #{famenet_forward.23} parent=0 // pred_region
    _
  $region5: #{famenet_forward.23} parent=0 // pred_fallthru
    _
  // Predicated region
  $region6: #{famenet_forward.23} parent=0 // pred_check
    _
  $region7: #{famenet_forward.23} parent=0 // pred_check_branch
    %12 = sbr.rel (0) target = $region9
  $region8: #{famenet_forward.23} parent=0 // pred_region
    _
  $region9: #{famenet_forward.23} parent=0 // pred_fallthru
    _
  // Predicated region
  $region10: #{famenet_forward.23} parent=0 // pred_check
    _
  $region11: #{famenet_forward.23} parent=0 // pred_check_branch
    %14 = sbr.rel (0) target = $region13
  $region12: #{famenet_forward.23} parent=0 // pred_region
    _
  $region13: #{famenet_forward.23} parent=0 // pred_fallthru
    _
  // Predicated region
  $region14: #{famenet_forward.23} parent=0 // pred_check
    _
  $region15: #{famenet_forward.23} parent=0 // pred_check_branch
    %16 = sbr.rel (0) target = $region17
  $region16: #{famenet_forward.23} parent=0 // pred_region
    _
  $region17: #{famenet_forward.23} parent=0 // pred_fallthru
    _
  %v17 = vld [vmem:[%s0] sm:$0xff]
  %v18 = vld [vmem:[%s0 + $0x8] sm:$0xff]
  %v19 = vld [vmem:[%s0 + $0x10] sm:$0xff]
  %v20 = vld [vmem:[%s0 + $0x18] sm:$0xff]
  %v21 = vld [vmem:[%s0 + $0x20] sm:$0xff]
  %v22 = vld [vmem:[%s0 + $0x28] sm:$0xff]
  %v23 = vld [vmem:[%s0 + $0x30] sm:$0xff]
  %v24 = vld [vmem:[%s0 + $0x38] sm:$0xff]
  %v25 = vld [vmem:[%s0 + $0x40] sm:$0xff]
  %v26 = vld [vmem:[%s0 + $0x48] sm:$0xff]
  %v27 = vld [vmem:[%s0 + $0x50] sm:$0xff]
  %v28 = vld [vmem:[%s0 + $0x58] sm:$0xff]
  %v29 = vld [vmem:[%s0 + $0x60] sm:$0xff]
  %v30 = vld [vmem:[%s0 + $0x68] sm:$0xff]
  %v31 = vld [vmem:[%s0 + $0x70] sm:$0xff]
  %v32 = vld [vmem:[%s0 + $0x78] sm:$0xff]
  %v33 = vld [vmem:[%s1] sm:$0xff]
  %v34 = vld [vmem:[%s1 + $0x8] sm:$0xff]
  %v35 = vld [vmem:[%s2] sm:$0x1]
  %v37 = vlaneseq
  %v38 = vshrl.u32 %v37, 7
  %v39 = vsub.s32 0, %v38
  %v40 = vrot.slane %v35, %v39
  %vm42 = vcmask 130048
  %v44 = vsel %vm42, %v17, 0
  %v47 = vsel %vm42, %v18, 0
  %v50 = vsel %vm42, %v19, 0
  %v53 = vsel %vm42, %v20, 0
  %v56 = vsel %vm42, %v21, 0
  %v59 = vsel %vm42, %v22, 0
  %v62 = vsel %vm42, %v23, 0
  %v65 = vsel %vm42, %v24, 0
  %v68 = vsel %vm42, %v25, 0
  %v71 = vsel %vm42, %v26, 0
  %v74 = vsel %vm42, %v27, 0
  %v77 = vsel %vm42, %v28, 0
  %v80 = vsel %vm42, %v29, 0
  %v83 = vsel %vm42, %v30, 0
  %v86 = vsel %vm42, %v31, 0
  %v89 = vsel %vm42, %v32, 0
  %91 = vmatprep.subr.mxu0 0.0
  %92 = vmatpush1.msra.mxu0 0.0
  %93 = vmatprep.subr.mxu0 0.0
  %94 = vmatpush1.msra.mxu0 0.0
  %95 = vmatprep.subr.mxu0 0.0
  %96 = vmatpush1.msra.mxu0 0.0
  %97 = vmatprep.subr.mxu0 0.0
  %98 = vmatpush1.msra.mxu0 0.0
  %99 = vmatprep.subr.mxu0 0.0
  %100 = vmatpush1.msra.mxu0 0.0
  %101 = vmatprep.subr.mxu0 0.0
  %102 = vmatpush1.msra.mxu0 0.0
  %103 = vmatprep.subr.mxu0 0.0
  %104 = vmatpush1.msra.mxu0 0.0
  %105 = vmatprep.subr.mxu0 0.0
  %106 = vmatpush1.msra.mxu0 0.0
  %107 = vmatprep.subr.mxu0 0.0
  %108 = vmatpush1.msra.mxu0 0.0
  %109 = vmatprep.subr.mxu0 0.0
  %110 = vmatpush1.msra.mxu0 0.0
  %111 = vmatprep.subr.mxu0 0.0
  %112 = vmatpush1.msra.mxu0 0.0
  %113 = vmatprep.subr.mxu0 0.0
  %114 = vmatpush1.msra.mxu0 0.0
  %115 = vmatprep.subr.mxu0 0.0
  %116 = vmatpush1.msra.mxu0 0.0
  %117 = vmatprep.subr.mxu0 0.0
  %118 = vmatpush1.msra.mxu0 0.0
  %119 = vmatprep.subr.mxu0 0.0
  %120 = vmatpush1.msra.mxu0 %v34
  %121 = vmatprep.subr.mxu0 0.0
  %122 = vmatpush1.msra.mxu0 %v33
  %123 = vmatprep.subr.mxu0 0.0
  %124 = vmatpush2.msra.mxu0 0.0
  %125 = vmatprep.subr.mxu0 0.0
  %126 = vmatpush2.msra.mxu0 0.0
  %127 = vmatprep.subr.mxu0 0.0
  %128 = vmatpush2.msra.mxu0 0.0
  %129 = vmatprep.subr.mxu0 0.0
  %130 = vmatpush2.msra.mxu0 0.0
  %131 = vmatprep.subr.mxu0 0.0
  %132 = vmatpush2.msra.mxu0 0.0
  %133 = vmatprep.subr.mxu0 0.0
  %134 = vmatpush2.msra.mxu0 0.0
  %135 = vmatprep.subr.mxu0 0.0
  %136 = vmatpush2.msra.mxu0 0.0
  %137 = vmatprep.subr.mxu0 0.0
  %138 = vmatpush2.msra.mxu0 0.0
  %139 = vmatprep.subr.mxu0 0.0
  %140 = vmatpush2.msra.mxu0 0.0
  %141 = vmatprep.subr.mxu0 0.0
  %142 = vmatpush2.msra.mxu0 0.0
  %143 = vmatprep.subr.mxu0 0.0
  %144 = vmatpush2.msra.mxu0 0.0
  %145 = vmatprep.subr.mxu0 0.0
  %146 = vmatpush2.msra.mxu0 0.0
  %147 = vmatprep.subr.mxu0 0.0
  %148 = vmatpush2.msra.mxu0 0.0
  %149 = vmatprep.subr.mxu0 0.0
  %150 = vmatpush2.msra.mxu0 0.0
  %151 = vmatprep.subr.mxu0 0.0
  %152 = vmatpush2.msra.mxu0 0.0
  %153 = vmatprep.subr.mxu0 0.0
  %154 = vmatpush2.msra.mxu0 0.0
  %155 = vmatprep.mubr.f32.mxu0 0.0
  %156 = vmatmul.mubr.f32.gmra.mxu0 %v44
  %v157 = vpop.f32.mrf.mxu0
  %v158 = vadd.f32 %v40, %v157
  %v159 = vpop.f32.mrf.mxu0
  %160 = vmatprep.mubr.f32.mxu0 0.0
  %161 = vmatmul.mubr.f32.gmra.mxu0 %v47
  %v162 = vpop.f32.mrf.mxu0
  %v163 = vadd.f32 %v40, %v162
  %v164 = vpop.f32.mrf.mxu0
  %165 = vmatprep.mubr.f32.mxu0 0.0
  %166 = vmatmul.mubr.f32.gmra.mxu0 %v50
  %v167 = vpop.f32.mrf.mxu0
  %v168 = vadd.f32 %v40, %v167
  %v169 = vpop.f32.mrf.mxu0
  %170 = vmatprep.mubr.f32.mxu0 0.0
  %171 = vmatmul.mubr.f32.gmra.mxu0 %v53
  %v172 = vpop.f32.mrf.mxu0
  %v173 = vadd.f32 %v40, %v172
  %v174 = vpop.f32.mrf.mxu0
  %175 = vmatprep.mubr.f32.mxu0 0.0
  %176 = vmatmul.mubr.f32.gmra.mxu0 %v56
  %v177 = vpop.f32.mrf.mxu0
  %v178 = vadd.f32 %v40, %v177
  %v179 = vpop.f32.mrf.mxu0
  %180 = vmatprep.mubr.f32.mxu0 0.0
  %181 = vmatmul.mubr.f32.gmra.mxu0 %v59
  %v182 = vpop.f32.mrf.mxu0
  %v183 = vadd.f32 %v40, %v182
  %v184 = vpop.f32.mrf.mxu0
  %185 = vmatprep.mubr.f32.mxu0 0.0
  %186 = vmatmul.mubr.f32.gmra.mxu0 %v62
  %v187 = vpop.f32.mrf.mxu0
  %v188 = vadd.f32 %v40, %v187
  %v189 = vpop.f32.mrf.mxu0
  %190 = vmatprep.mubr.f32.mxu0 0.0
  %191 = vmatmul.mubr.f32.gmra.mxu0 %v65
  %v192 = vpop.f32.mrf.mxu0
  %v193 = vadd.f32 %v40, %v192
  %v194 = vpop.f32.mrf.mxu0
  %195 = vmatprep.mubr.f32.mxu0 0.0
  %196 = vmatmul.mubr.f32.gmra.mxu0 %v68
  %v197 = vpop.f32.mrf.mxu0
  %v198 = vadd.f32 %v40, %v197
  %v199 = vpop.f32.mrf.mxu0
  %200 = vmatprep.mubr.f32.mxu0 0.0
  %201 = vmatmul.mubr.f32.gmra.mxu0 %v71
  %v202 = vpop.f32.mrf.mxu0
  %v203 = vadd.f32 %v40, %v202
  %v204 = vpop.f32.mrf.mxu0
  %205 = vmatprep.mubr.f32.mxu0 0.0
  %206 = vmatmul.mubr.f32.gmra.mxu0 %v74
  %v207 = vpop.f32.mrf.mxu0
  %v208 = vadd.f32 %v40, %v207
  %v209 = vpop.f32.mrf.mxu0
  %210 = vmatprep.mubr.f32.mxu0 0.0
  %211 = vmatmul.mubr.f32.gmra.mxu0 %v77
  %v212 = vpop.f32.mrf.mxu0
  %v213 = vadd.f32 %v40, %v212
  %v214 = vpop.f32.mrf.mxu0
  %215 = vmatprep.mubr.f32.mxu0 0.0
  %216 = vmatmul.mubr.f32.gmra.mxu0 %v80
  %v217 = vpop.f32.mrf.mxu0
  %v218 = vadd.f32 %v40, %v217
  %v219 = vpop.f32.mrf.mxu0
  %220 = vmatprep.mubr.f32.mxu0 0.0
  %221 = vmatmul.mubr.f32.gmra.mxu0 %v83
  %v222 = vpop.f32.mrf.mxu0
  %v223 = vadd.f32 %v40, %v222
  %v224 = vpop.f32.mrf.mxu0
  %225 = vmatprep.mubr.f32.mxu0 0.0
  %226 = vmatmul.mubr.f32.gmra.mxu0 %v86
  %v227 = vpop.f32.mrf.mxu0
  %v228 = vadd.f32 %v40, %v227
  %v229 = vpop.f32.mrf.mxu0
  %230 = vmatprep.mubr.f32.mxu0 0.0
  %231 = vmatmul.mubr.f32.gmra.mxu0 %v89
  %v232 = vpop.f32.mrf.mxu0
  %v233 = vadd.f32 %v40, %v232
  %v234 = vpop.f32.mrf.mxu0
  %235 = vdwg.mxu0
  %v236 = vld [vmem:[%s3] sm:$0xff]
  %v237 = vld [vmem:[%s3 + $0x8] sm:$0xff]
  %v238 = vld [vmem:[%s3 + $0x10] sm:$0xff]
  %v239 = vld [vmem:[%s3 + $0x18] sm:$0xff]
  %v240 = vld [vmem:[%s3 + $0x20] sm:$0xff]
  %v241 = vld [vmem:[%s3 + $0x28] sm:$0xff]
  %v242 = vld [vmem:[%s3 + $0x30] sm:$0xff]
  %v243 = vld [vmem:[%s3 + $0x38] sm:$0xff]
  %v244 = vld [vmem:[%s3 + $0x40] sm:$0xff]
  %v245 = vld [vmem:[%s3 + $0x48] sm:$0xff]
  %v246 = vld [vmem:[%s3 + $0x50] sm:$0xff]
  %v247 = vld [vmem:[%s3 + $0x58] sm:$0xff]
  %v248 = vld [vmem:[%s3 + $0x60] sm:$0xff]
  %v249 = vld [vmem:[%s3 + $0x68] sm:$0xff]
  %v250 = vld [vmem:[%s3 + $0x70] sm:$0xff]
  %v251 = vld [vmem:[%s3 + $0x78] sm:$0xff]
  %v252 = vadd.f32 %v158, %v236
  %v253 = vadd.f32 %v163, %v237
  %v254 = vadd.f32 %v168, %v238
  %v255 = vadd.f32 %v173, %v239
  %v256 = vadd.f32 %v178, %v240
  %v257 = vadd.f32 %v183, %v241
  %v258 = vadd.f32 %v188, %v242
  %v259 = vadd.f32 %v193, %v243
  %v260 = vadd.f32 %v198, %v244
  %v261 = vadd.f32 %v203, %v245
  %v262 = vadd.f32 %v208, %v246
  %v263 = vadd.f32 %v213, %v247
  %v264 = vadd.f32 %v218, %v248
  %v265 = vadd.f32 %v223, %v249
  %v266 = vadd.f32 %v228, %v250
  %v267 = vadd.f32 %v233, %v251
  %vm268 = vcmask 261120
  %269 = vst.msk [vmem:[%s4] sm:$0xff] %vm268, %v252
  %270 = vst.msk [vmem:[%s4 + $0x8] sm:$0xff] %vm268, %v253
  %271 = vst.msk [vmem:[%s4 + $0x10] sm:$0xff] %vm268, %v254
  %272 = vst.msk [vmem:[%s4 + $0x18] sm:$0xff] %vm268, %v255
  %273 = vst.msk [vmem:[%s4 + $0x20] sm:$0xff] %vm268, %v256
  %274 = vst.msk [vmem:[%s4 + $0x28] sm:$0xff] %vm268, %v257
  %275 = vst.msk [vmem:[%s4 + $0x30] sm:$0xff] %vm268, %v258
  %276 = vst.msk [vmem:[%s4 + $0x38] sm:$0xff] %vm268, %v259
  %277 = vst.msk [vmem:[%s4 + $0x40] sm:$0xff] %vm268, %v260
  %278 = vst.msk [vmem:[%s4 + $0x48] sm:$0xff] %vm268, %v261
  %279 = vst.msk [vmem:[%s4 + $0x50] sm:$0xff] %vm268, %v262
  %280 = vst.msk [vmem:[%s4 + $0x58] sm:$0xff] %vm268, %v263
  %281 = vst.msk [vmem:[%s4 + $0x60] sm:$0xff] %vm268, %v264
  %282 = vst.msk [vmem:[%s4 + $0x68] sm:$0xff] %vm268, %v265
  %283 = vst.msk [vmem:[%s4 + $0x70] sm:$0xff] %vm268, %v266
  %284 = vst.msk [vmem:[%s4 + $0x78] sm:$0xff] %vm268, %v267
  // Predicated region
  $region18: #{famenet_forward.23} parent=0 // pred_check
    _
  $region19: #{famenet_forward.23} parent=0 // pred_check_branch
    %286 = sbr.rel (0) target = $region21
  $region20: #{famenet_forward.23} parent=0 // pred_region
    _
  $region21: #{famenet_forward.23} parent=0 // pred_fallthru
    _
  // Predicated region
  $region22: #{famenet_forward.23} parent=0 // pred_check
    _
  $region23: #{famenet_forward.23} parent=0 // pred_check_branch
    %288 = sbr.rel (0) target = $region25
  $region24: #{famenet_forward.23} parent=0 // pred_region
    _
  $region25: #{famenet_forward.23} parent=0 // pred_fallthru
    _

// kernel: famenet_forward.24
$region0: #{famenet_forward.24}
  #allocation0 [shape = 'u32[]', space=smem, size = 0x4, offset = 0x4, fixed_abs, tag = 'smem constant byte address 0x4 - core index']
  #allocation1 [shape = 'u32[144,128]{1,0:T(1,128)}', space=vmem, size = 0x12000, scoped, tag = 'internal scratch']
  #allocation2 [shape = 'f32[8,32]{1,0:T(8,128)}', space=vmem, size = 0x1000, scoped, tag = 'scratch operand']
  %s0 = inlined_call_operand.vmem [shape: f32[2,10,10,32], index: 0, kind: input, shape index: {}]
  %s1 = inlined_call_operand.vmem [shape: f32[3,3,32,32], index: 1, kind: input, shape index: {}]
  %s2 = inlined_call_operand.vmem [shape: f32[1,32], index: 2, kind: input, shape index: {}]
  %s3 = inlined_call_operand.vmem [shape: f32[2,8,8,32], index: 3, kind: output, shape index: {}]
  %s4 = sld [smem:[#allocation0]]
  $region53: #{famenet_forward.24} parent=0
    _
  %s6 = ssub.s32 1, %s4
  %s7 = scalar_select 0, %s6, %s4
  loop: start=0, step=1, limit=50
  $region2: #{famenet_forward.24} parent=0 // loop_pre_header
    _
  $region3: #{famenet_forward.24} parent=0 // loop_header
    %s9 = sphi 0, %s13
    %p10 = scmp.ge.s32.totalorder %s9, 50
    %s16 = sphi 0, %s35
    %s17 = sphi 0, %s31
    %s18 = sphi 0, %s27
    %s19 = sphi 0, %s16
    %s20 = sphi 0, %s17
    %s21 = sphi 0, %s18
    %s22 = sphi 0, %s19
    %s23 = sphi 0, %s20
    %s24 = sphi 0, %s21
    %s42 = sphi 0, %s44
    %s45 = sphi 0, %s42
    %s46 = sphi 0, %s45
    %s62 = sphi 0, %s46
    %s68 = sphi 0, %s70
    %s71 = sphi 0, %s68
    %s72 = sphi 0, %s71
    %s88 = sphi 0, %s72
    %s92 = sphi 0, %s92
    %s94 = sphi 0, %s92
    %s95 = sphi 0, %s94
    %s109 = sphi 0, %s95
    %s117 = sphi 0, %s119
    %s120 = sphi 0, %s117
    %s121 = sphi 0, %s120
    %s137 = sphi 0, %s121
  $region4: #{famenet_forward.24} parent=0 // loop_header_branch
    %12 = sbr.rel (%p10) target = $region8
  $region5: #{famenet_forward.24} parent=0 // loop_body
    %s14 = ssub.s32 %s9, 1
    %s15 = ssub.s32 %s9, 2
    %s25 = sadd.s32 1, %s18
    %p26 = scmp.ge.s32.totalorder %s25, 3
    %s27 = scalar_select %p26, 0, %s25
    %s28 = sadd.s32 1, %s17
    %s29 = scalar_select %p26, %s28, %s17
    %p30 = scmp.ge.s32.totalorder %s29, 8
    %s31 = scalar_select %p30, 0, %s29
    %s32 = sadd.s32 1, %s16
    %s33 = scalar_select %p30, %s32, %s16
    %p34 = scmp.ge.s32.totalorder %s33, 2
    %s35 = scalar_select %p34, 0, %s33
    %s36 = sadd.s32 %s17, %s18
    %s37 = sadd.s32 %s31, %s27
    %s38 = ssub.s32 %s16, %s35
    %s39 = ssub.s32 %s36, %s37
    %s40 = sor.u32 %s38, %s39
    %p41 = scmp.eq.s32.totalorder %s40, 0
    %s43 = sadd.s32 %s42, 1
    %s44 = scalar_select %p41, %s42, %s43
    %p47 = pneg %p41
    %p48 = scmp.eq.s32.totalorder %s9, 47
    %p49 = por %p47, %p48
    %p50 = scmp.ne.s32.totalorder %s42, %s45
    %p51 = scmp.eq.s32.totalorder %s9, 0
    %p52 = por %p50, %p51
    %p53 = scmp.ne.s32.totalorder %s42, %s45
    %p54 = scmp.eq.s32.totalorder %s14, 47
    %p55 = por %p53, %p54
    %p56 = scmp.ne.s32.totalorder %s45, %s46
    %p57 = scmp.eq.s32.totalorder %s14, 0
    %p58 = por %p56, %p57
    %p59 = scmp.ne.s32.totalorder %s45, %s46
    %p60 = scmp.eq.s32.totalorder %s15, 47
    %p61 = por %p59, %p60
    %p63 = scmp.ne.s32.totalorder %s46, %s62
    %p64 = scmp.eq.s32.totalorder %s15, 0
    %p65 = por %p63, %p64
    %s66 = ssub.s32 %s18, %s27
    %p67 = scmp.eq.s32.totalorder %s66, 0
    %s69 = sadd.s32 %s68, 1
    %s70 = scalar_select %p67, %s68, %s69
    %p73 = pneg %p67
    %p74 = scmp.eq.s32.totalorder %s9, 47
    %p75 = por %p73, %p74
    %p76 = scmp.ne.s32.totalorder %s68, %s71
    %p77 = scmp.eq.s32.totalorder %s9, 0
    %p78 = por %p76, %p77
    %p79 = scmp.ne.s32.totalorder %s68, %s71
    %p80 = scmp.eq.s32.totalorder %s14, 47
    %p81 = por %p79, %p80
    %p82 = scmp.ne.s32.totalorder %s71, %s72
    %p83 = scmp.eq.s32.totalorder %s14, 0
    %p84 = por %p82, %p83
    %p85 = scmp.ne.s32.totalorder %s71, %s72
    %p86 = scmp.eq.s32.totalorder %s15, 47
    %p87 = por %p85, %p86
    %p89 = scmp.ne.s32.totalorder %s72, %s88
    %p90 = scmp.eq.s32.totalorder %s15, 0
    %p91 = por %p89, %p90
    %s93 = sadd.s32 %s92, 1
    %p96 = scmp.eq.s32.totalorder %s9, 47
    %p97 = scmp.ne.s32.totalorder %s92, %s94
    %p98 = scmp.eq.s32.totalorder %s9, 0
    %p99 = por %p97, %p98
    %p100 = scmp.ne.s32.totalorder %s92, %s94
    %p101 = scmp.eq.s32.totalorder %s14, 47
    %p102 = por %p100, %p101
    %p103 = scmp.ne.s32.totalorder %s94, %s95
    %p104 = scmp.eq.s32.totalorder %s14, 0
    %p105 = por %p103, %p104
    %p106 = scmp.ne.s32.totalorder %s94, %s95
    %p107 = scmp.eq.s32.totalorder %s15, 47
    %p108 = por %p106, %p107
    %p110 = scmp.ne.s32.totalorder %s95, %s109
    %p111 = scmp.eq.s32.totalorder %s15, 0
    %p112 = por %p110, %p111
    %s113 = ssub.s32 %s16, %s35
    %s114 = ssub.s32 %s17, %s31
    %s115 = sor.u32 %s113, %s114
    %p116 = scmp.eq.s32.totalorder %s115, 0
    %s118 = sadd.s32 %s117, 1
    %s119 = scalar_select %p116, %s117, %s118
    %p122 = pneg %p116
    %p123 = scmp.eq.s32.totalorder %s9, 47
    %p124 = por %p122, %p123
    %p125 = scmp.ne.s32.totalorder %s117, %s120
    %p126 = scmp.eq.s32.totalorder %s9, 0
    %p127 = por %p125, %p126
    %p128 = scmp.ne.s32.totalorder %s117, %s120
    %p129 = scmp.eq.s32.totalorder %s14, 47
    %p130 = por %p128, %p129
    %p131 = scmp.ne.s32.totalorder %s120, %s121
    %p132 = scmp.eq.s32.totalorder %s14, 0
    %p133 = por %p131, %p132
    %p134 = scmp.ne.s32.totalorder %s120, %s121
    %p135 = scmp.eq.s32.totalorder %s15, 47
    %p136 = por %p134, %p135
    %p138 = scmp.ne.s32.totalorder %s121, %s137
    %p139 = scmp.eq.s32.totalorder %s15, 0
    %p140 = por %p138, %p139
    %p141 = scmp.le.s32.totalorder 1, %s9
    %p142 = scmp.lt.s32.totalorder %s9, 49
    %p143 = pnand %p141, %p142
    %p144 = pneg %p143
    // Predicated region
    $region9: #{famenet_forward.24} parent=5 // pred_check
      _
    $region10: #{famenet_forward.24} parent=5 // pred_check_branch
      %146 = sbr.rel (%p143) target = $region12
    $region11: #{famenet_forward.24} parent=5 // pred_region
      %s147 = ssub.s32 %s9, 1
      // Predicated region
      $region13: #{famenet_forward.24} parent=11 // pred_check
        %p148 = pneg %p105
      $region14: #{famenet_forward.24} parent=11 // pred_check_branch
        %150 = sbr.rel (%p148) target = $region16
      $region15: #{famenet_forward.24} parent=11 // pred_region
        _
      $region16: #{famenet_forward.24} parent=11 // pred_fallthru
        _
    $region12: #{famenet_forward.24} parent=5 // pred_fallthru
      _
    %p151 = scmp.lt.s32.totalorder %s9, 48
    // Predicated region
    $region17: #{famenet_forward.24} parent=5 // pred_check
      %p152 = pneg %p151
    $region18: #{famenet_forward.24} parent=5 // pred_check_branch
      %154 = sbr.rel (%p152) target = $region20
    $region19: #{famenet_forward.24} parent=5 // pred_region
      // Predicated region
      $region21: #{famenet_forward.24} parent=19 // pred_check
        %p155 = pneg %p52
      $region22: #{famenet_forward.24} parent=19 // pred_check_branch
        %157 = sbr.rel (%p155) target = $region24
      $region23: #{famenet_forward.24} parent=19 // pred_region
        %s158 = sadd.s32 %s17, %s18
        %p159 = scmp.lt.s32.totalorder %s16, 1
        %s160 = scalar_select %p159, %s16, 1
        %p161 = scmp.lt.s32.totalorder %s158, 9
        %s162 = scalar_select %p161, %s158, 9
        %s163 = smul.addr %s162, 2
        %s164 = smul.addr %s160, 20
        %s165 = sadd.s32 %s163, %s164
        %s166 = smul.addr %s165, 8
        %s167 = scalar_lea.vmem %s0, %s166
        %s168 = sadd.s32 %s17, %s18
      $region24: #{famenet_forward.24} parent=19 // pred_fallthru
        _
      // Predicated region
      $region25: #{famenet_forward.24} parent=19 // pred_check
        %p169 = pneg %p78
      $region26: #{famenet_forward.24} parent=19 // pred_check_branch
        %171 = sbr.rel (%p169) target = $region28
      $region27: #{famenet_forward.24} parent=19 // pred_region
        %p172 = scmp.lt.s32.totalorder %s18, 2
        %s173 = scalar_select %p172, %s18, 2
        %s174 = smul.addr %s173, 12
        %s175 = smul.addr %s174, 8
        %s176 = scalar_lea.vmem %s1, %s175
      $region28: #{famenet_forward.24} parent=19 // pred_fallthru
        _
    $region20: #{famenet_forward.24} parent=5 // pred_fallthru
      _
    %p177 = scmp.le.s32.totalorder 1, %s9
    %p178 = scmp.lt.s32.totalorder %s9, 49
    %p179 = pnand %p177, %p178
    %p180 = pneg %p179
    // Predicated region
    $region29: #{famenet_forward.24} parent=5 // pred_check
      _
    $region30: #{famenet_forward.24} parent=5 // pred_check_branch
      %182 = sbr.rel (%p179) target = $region32
    $region31: #{famenet_forward.24} parent=5 // pred_region
      %s183 = ssub.s32 %s9, 1
      %s184 = sadd.s32 %s20, %s21
      %p185 = scmp.lt.s32.totalorder %s19, 1
      %s186 = scalar_select %p185, %s19, 1
      %p187 = scmp.lt.s32.totalorder %s184, 9
      %s188 = scalar_select %p187, %s184, 9
      %s189 = smul.addr %s188, 2
      %s190 = smul.addr %s186, 20
      %s191 = sadd.s32 %s189, %s190
      %s192 = smul.addr %s191, 8
      %s193 = scalar_lea.vmem %s0, %s192
      %p194 = pneg %p58
      %p195 = pneg %p55
      %p196 = scmp.lt.s32.totalorder %s21, 2
      %s197 = scalar_select %p196, %s21, 2
      %s198 = smul.addr %s197, 12
      %s199 = smul.addr %s198, 8
      %s200 = scalar_lea.vmem %s1, %s199
      %p201 = pneg %p84
      %p202 = pneg %p81
      %p203 = pneg %p105
      %p204 = pneg %p102
      %p205 = pneg %p133
      %p206 = pneg %p130
      %p207 = scmp.lt.s32.totalorder %s19, 1
      %s208 = scalar_select %p207, %s19, 1
      %p209 = scmp.lt.s32.totalorder %s20, 7
      %s210 = scalar_select %p209, %s20, 7
      %s211 = smul.addr %s208, 8
      %s212 = sadd.s32 %s210, %s211
      %s213 = smul.addr %s212, 8
      %s214 = scalar_lea.vmem %s3, %s213
      %s215 = sadd.s32 %s20, %s21
      %p216 = scmp.lt.s32.totalorder %s19, 1
      %s217 = scalar_select %p216, %s19, 1
      %p218 = scmp.lt.s32.totalorder %s215, 9
      %s219 = scalar_select %p218, %s215, 9
      %s220 = smul.addr %s219, 2
      %s221 = smul.addr %s217, 20
      %s222 = sadd.s32 %s220, %s221
      %s223 = smul.addr %s222, 8
      %s224 = scalar_lea.vmem %s0, %s223
      %s225 = sadd.s32 %s20, %s21
      %p226 = scmp.lt.s32.totalorder %s21, 2
      %s227 = scalar_select %p226, %s21, 2
      %s228 = smul.addr %s227, 12
      %s229 = smul.addr %s228, 8
      %s230 = scalar_lea.vmem %s1, %s229
      %p231 = scmp.lt.s32.totalorder %s19, 1
      %s232 = scalar_select %p231, %s19, 1
      %p233 = scmp.lt.s32.totalorder %s20, 7
      %s234 = scalar_select %p233, %s20, 7
      %s235 = smul.addr %s232, 8
      %s236 = sadd.s32 %s234, %s235
      %s237 = smul.addr %s236, 8
      %s238 = scalar_lea.vmem %s3, %s237
      %p239 = scmp.eq.s32.totalorder %s21, 0
      // Predicated region
      $region33: #{famenet_forward.24} parent=31 // pred_check
        %p240 = pneg %p239
      $region34: #{famenet_forward.24} parent=31 // pred_check_branch
        %242 = sbr.rel (%p240) target = $region36
      $region35: #{famenet_forward.24} parent=31 // pred_region
        %vm243 = vcmask 261120
        %244 = vst.msk [vmem:[#allocation2] sm:$0xff] %vm243, 0.0
      $region36: #{famenet_forward.24} parent=31 // pred_fallthru
        _
      %v245 = vld [vmem:[%s224] sm:$0xff]
      %v246 = vld [vmem:[%s224 + $0x8] sm:$0x3]
      %v247 = vld [vmem:[#allocation2] sm:$0xff]
      %v248 = vld [vmem:[%s230] sm:$0xff]
      %v249 = vld [vmem:[%s230 + $0x8] sm:$0xff]
      %v250 = vld [vmem:[%s230 + $0x10] sm:$0xff]
      %v251 = vld [vmem:[%s230 + $0x18] sm:$0xff]
      %vm252 = vcmask 261120
      %v254 = vsel %vm252, %v245, 0
      %256 = vmatprep.subr.mxu0 0.0
      %257 = vmatpush1.msra.mxu0 0.0
      %258 = vmatprep.subr.mxu0 0.0
      %259 = vmatpush1.msra.mxu0 0.0
      %260 = vmatprep.subr.mxu0 0.0
      %261 = vmatpush1.msra.mxu0 0.0
      %262 = vmatprep.subr.mxu0 0.0
      %263 = vmatpush1.msra.mxu0 0.0
      %264 = vmatprep.subr.mxu0 0.0
      %265 = vmatpush1.msra.mxu0 0.0
      %266 = vmatprep.subr.mxu0 0.0
      %267 = vmatpush1.msra.mxu0 0.0
      %268 = vmatprep.subr.mxu0 0.0
      %269 = vmatpush1.msra.mxu0 0.0
      %270 = vmatprep.subr.mxu0 0.0
      %271 = vmatpush1.msra.mxu0 0.0
      %272 = vmatprep.subr.mxu0 0.0
      %273 = vmatpush1.msra.mxu0 0.0
      %274 = vmatprep.subr.mxu0 0.0
      %275 = vmatpush1.msra.mxu0 0.0
      %276 = vmatprep.subr.mxu0 0.0
      %277 = vmatpush1.msra.mxu0 0.0
      %278 = vmatprep.subr.mxu0 0.0
      %279 = vmatpush1.msra.mxu0 0.0
      %280 = vmatprep.subr.mxu0 0.0
      %281 = vmatpush1.msra.mxu0 %v251
      %282 = vmatprep.subr.mxu0 0.0
      %283 = vmatpush1.msra.mxu0 %v250
      %284 = vmatprep.subr.mxu0 0.0
      %285 = vmatpush1.msra.mxu0 %v249
      %286 = vmatprep.subr.mxu0 0.0
      %287 = vmatpush1.msra.mxu0 %v248
      %288 = vmatprep.subr.mxu0 0.0
      %289 = vmatpush2.msra.mxu0 0.0
      %290 = vmatprep.subr.mxu0 0.0
      %291 = vmatpush2.msra.mxu0 0.0
      %292 = vmatprep.subr.mxu0 0.0
      %293 = vmatpush2.msra.mxu0 0.0
      %294 = vmatprep.subr.mxu0 0.0
      %295 = vmatpush2.msra.mxu0 0.0
      %296 = vmatprep.subr.mxu0 0.0
      %297 = vmatpush2.msra.mxu0 0.0
      %298 = vmatprep.subr.mxu0 0.0
      %299 = vmatpush2.msra.mxu0 0.0
      %300 = vmatprep.subr.mxu0 0.0
      %301 = vmatpush2.msra.mxu0 0.0
      %302 = vmatprep.subr.mxu0 0.0
      %303 = vmatpush2.msra.mxu0 0.0
      %304 = vmatprep.subr.mxu0 0.0
      %305 = vmatpush2.msra.mxu0 0.0
      %306 = vmatprep.subr.mxu0 0.0
      %307 = vmatpush2.msra.mxu0 0.0
      %308 = vmatprep.subr.mxu0 0.0
      %309 = vmatpush2.msra.mxu0 0.0
      %310 = vmatprep.subr.mxu0 0.0
      %311 = vmatpush2.msra.mxu0 0.0
      %312 = vmatprep.subr.mxu0 0.0
      %313 = vmatpush2.msra.mxu0 0.0
      %314 = vmatprep.subr.mxu0 0.0
      %315 = vmatpush2.msra.mxu0 0.0
      %316 = vmatprep.subr.mxu0 0.0
      %317 = vmatpush2.msra.mxu0 0.0
      %318 = vmatprep.subr.mxu0 0.0
      %319 = vmatpush2.msra.mxu0 0.0
      %320 = vmatprep.mubr.f32.mxu0 0.0
      %321 = vmatmul.mubr.f32.gmra.mxu0 %v254
      %v322 = vpop.f32.mrf.mxu0
      %v323 = vadd.f32 0.0, %v322
      %v324 = vpop.f32.mrf.mxu0
      %325 = vdwg.mxu0
      %v326 = vadd.f32 %v247, %v323
      %s327 = scalar_lea.vmem %s230, 32
      %v328 = vld [vmem:[%s327] sm:$0xff]
      %v329 = vld [vmem:[%s327 + $0x8] sm:$0xff]
      %v330 = vld [vmem:[%s327 + $0x10] sm:$0xff]
      %v331 = vld [vmem:[%s327 + $0x18] sm:$0xff]
      %vm333 = vcmask 1046528
      %v334 = vrot.slane %v245, 1
      %v335 = vrot.slane %v246, 1
      %v336 = vsel %vm333, %v334, %v335
      %v337 = vsel %vm252, %v336, 0
      %339 = vmatprep.subr.mxu0 0.0
      %340 = vmatpush1.msra.mxu0 0.0
      %341 = vmatprep.subr.mxu0 0.0
      %342 = vmatpush1.msra.mxu0 0.0
      %343 = vmatprep.subr.mxu0 0.0
      %344 = vmatpush1.msra.mxu0 0.0
      %345 = vmatprep.subr.mxu0 0.0
      %346 = vmatpush1.msra.mxu0 0.0
      %347 = vmatprep.subr.mxu0 0.0
      %348 = vmatpush1.msra.mxu0 0.0
      %349 = vmatprep.subr.mxu0 0.0
      %350 = vmatpush1.msra.mxu0 0.0
      %351 = vmatprep.subr.mxu0 0.0
      %352 = vmatpush1.msra.mxu0 0.0
      %353 = vmatprep.subr.mxu0 0.0
      %354 = vmatpush1.msra.mxu0 0.0
      %355 = vmatprep.subr.mxu0 0.0
      %356 = vmatpush1.msra.mxu0 0.0
      %357 = vmatprep.subr.mxu0 0.0
      %358 = vmatpush1.msra.mxu0 0.0
      %359 = vmatprep.subr.mxu0 0.0
      %360 = vmatpush1.msra.mxu0 0.0
      %361 = vmatprep.subr.mxu0 0.0
      %362 = vmatpush1.msra.mxu0 0.0
      %363 = vmatprep.subr.mxu0 0.0
      %364 = vmatpush1.msra.mxu0 %v331
      %365 = vmatprep.subr.mxu0 0.0
      %366 = vmatpush1.msra.mxu0 %v330
      %367 = vmatprep.subr.mxu0 0.0
      %368 = vmatpush1.msra.mxu0 %v329
      %369 = vmatprep.subr.mxu0 0.0
      %370 = vmatpush1.msra.mxu0 %v328
      %371 = vmatprep.subr.mxu0 0.0
      %372 = vmatpush2.msra.mxu0 0.0
      %373 = vmatprep.subr.mxu0 0.0
      %374 = vmatpush2.msra.mxu0 0.0
      %375 = vmatprep.subr.mxu0 0.0
      %376 = vmatpush2.msra.mxu0 0.0
      %377 = vmatprep.subr.mxu0 0.0
      %378 = vmatpush2.msra.mxu0 0.0
      %379 = vmatprep.subr.mxu0 0.0
      %380 = vmatpush2.msra.mxu0 0.0
      %381 = vmatprep.subr.mxu0 0.0
      %382 = vmatpush2.msra.mxu0 0.0
      %383 = vmatprep.subr.mxu0 0.0
      %384 = vmatpush2.msra.mxu0 0.0
      %385 = vmatprep.subr.mxu0 0.0
      %386 = vmatpush2.msra.mxu0 0.0
      %387 = vmatprep.subr.mxu0 0.0
      %388 = vmatpush2.msra.mxu0 0.0
      %389 = vmatprep.subr.mxu0 0.0
      %390 = vmatpush2.msra.mxu0 0.0
      %391 = vmatprep.subr.mxu0 0.0
      %392 = vmatpush2.msra.mxu0 0.0
      %393 = vmatprep.subr.mxu0 0.0
      %394 = vmatpush2.msra.mxu0 0.0
      %395 = vmatprep.subr.mxu0 0.0
      %396 = vmatpush2.msra.mxu0 0.0
      %397 = vmatprep.subr.mxu0 0.0
      %398 = vmatpush2.msra.mxu0 0.0
      %399 = vmatprep.subr.mxu0 0.0
      %400 = vmatpush2.msra.mxu0 0.0
      %401 = vmatprep.subr.mxu0 0.0
      %402 = vmatpush2.msra.mxu0 0.0
      %403 = vmatprep.mubr.f32.mxu0 0.0
      %404 = vmatmul.mubr.f32.gmra.mxu0 %v337
      %v405 = vpop.f32.mrf.mxu0
      %v406 = vadd.f32 0.0, %v405
      %v407 = vpop.f32.mrf.mxu0
      %408 = vdwg.mxu0
      %v409 = vadd.f32 %v326, %v406
      %s410 = scalar_lea.vmem %s230, 64
      %v411 = vld [vmem:[%s410] sm:$0xff]
      %v412 = vld [vmem:[%s410 + $0x8] sm:$0xff]
      %v413 = vld [vmem:[%s410 + $0x10] sm:$0xff]
      %v414 = vld [vmem:[%s410 + $0x18] sm:$0xff]
      %vm415 = vcmask 1045504
      %v416 = vrot.slane %v245, 2
      %v417 = vrot.slane %v246, 2
      %v418 = vsel %vm415, %v416, %v417
      %v419 = vsel %vm252, %v418, 0
      %421 = vmatprep.subr.mxu0 0.0
      %422 = vmatpush1.msra.mxu0 0.0
      %423 = vmatprep.subr.mxu0 0.0
      %424 = vmatpush1.msra.mxu0 0.0
      %425 = vmatprep.subr.mxu0 0.0
      %426 = vmatpush1.msra.mxu0 0.0
      %427 = vmatprep.subr.mxu0 0.0
      %428 = vmatpush1.msra.mxu0 0.0
      %429 = vmatprep.subr.mxu0 0.0
      %430 = vmatpush1.msra.mxu0 0.0
      %431 = vmatprep.subr.mxu0 0.0
      %432 = vmatpush1.msra.mxu0 0.0
      %433 = vmatprep.subr.mxu0 0.0
      %434 = vmatpush1.msra.mxu0 0.0
      %435 = vmatprep.subr.mxu0 0.0
      %436 = vmatpush1.msra.mxu0 0.0
      %437 = vmatprep.subr.mxu0 0.0
      %438 = vmatpush1.msra.mxu0 0.0
      %439 = vmatprep.subr.mxu0 0.0
      %440 = vmatpush1.msra.mxu0 0.0
      %441 = vmatprep.subr.mxu0 0.0
      %442 = vmatpush1.msra.mxu0 0.0
      %443 = vmatprep.subr.mxu0 0.0
      %444 = vmatpush1.msra.mxu0 0.0
      %445 = vmatprep.subr.mxu0 0.0
      %446 = vmatpush1.msra.mxu0 %v414
      %447 = vmatprep.subr.mxu0 0.0
      %448 = vmatpush1.msra.mxu0 %v413
      %449 = vmatprep.subr.mxu0 0.0
      %450 = vmatpush1.msra.mxu0 %v412
      %451 = vmatprep.subr.mxu0 0.0
      %452 = vmatpush1.msra.mxu0 %v411
      %453 = vmatprep.subr.mxu0 0.0
      %454 = vmatpush2.msra.mxu0 0.0
      %455 = vmatprep.subr.mxu0 0.0
      %456 = vmatpush2.msra.mxu0 0.0
      %457 = vmatprep.subr.mxu0 0.0
      %458 = vmatpush2.msra.mxu0 0.0
      %459 = vmatprep.subr.mxu0 0.0
      %460 = vmatpush2.msra.mxu0 0.0
      %461 = vmatprep.subr.mxu0 0.0
      %462 = vmatpush2.msra.mxu0 0.0
      %463 = vmatprep.subr.mxu0 0.0
      %464 = vmatpush2.msra.mxu0 0.0
      %465 = vmatprep.subr.mxu0 0.0
      %466 = vmatpush2.msra.mxu0 0.0
      %467 = vmatprep.subr.mxu0 0.0
      %468 = vmatpush2.msra.mxu0 0.0
      %469 = vmatprep.subr.mxu0 0.0
      %470 = vmatpush2.msra.mxu0 0.0
      %471 = vmatprep.subr.mxu0 0.0
      %472 = vmatpush2.msra.mxu0 0.0
      %473 = vmatprep.subr.mxu0 0.0
      %474 = vmatpush2.msra.mxu0 0.0
      %475 = vmatprep.subr.mxu0 0.0
      %476 = vmatpush2.msra.mxu0 0.0
      %477 = vmatprep.subr.mxu0 0.0
      %478 = vmatpush2.msra.mxu0 0.0
      %479 = vmatprep.subr.mxu0 0.0
      %480 = vmatpush2.msra.mxu0 0.0
      %481 = vmatprep.subr.mxu0 0.0
      %482 = vmatpush2.msra.mxu0 0.0
      %483 = vmatprep.subr.mxu0 0.0
      %484 = vmatpush2.msra.mxu0 0.0
      %485 = vmatprep.mubr.f32.mxu0 0.0
      %486 = vmatmul.mubr.f32.gmra.mxu0 %v419
      %v487 = vpop.f32.mrf.mxu0
      %v488 = vadd.f32 0.0, %v487
      %v489 = vpop.f32.mrf.mxu0
      %490 = vdwg.mxu0
      %v491 = vadd.f32 %v409, %v488
      %492 = vst.msk [vmem:[#allocation2] sm:$0xff] %vm252, %v491
      %p493 = scmp.eq.s32.totalorder %s21, 2
      // Predicated region
      $region37: #{famenet_forward.24} parent=31 // pred_check
        %p494 = pneg %p493
      $region38: #{famenet_forward.24} parent=31 // pred_check_branch
        %496 = sbr.rel (%p494) target = $region40
      $region39: #{famenet_forward.24} parent=31 // pred_region
        %v497 = vld [vmem:[#allocation2] sm:$0xff]
        %v498 = vld [vmem:[%s2] sm:$0x1]
        %v500 = vlaneseq
        %v501 = vshrl.u32 %v500, 7
        %v502 = vsub.s32 0, %v501
        %v503 = vrot.slane %v498, %v502
        %v505 = vadd.f32 %v497, %v503
        %v506 = vmax.f32 %v505, 0.0
        %507 = vst.msk [vmem:[%s238] sm:$0xff] %vm252, %v506
      $region40: #{famenet_forward.24} parent=31 // pred_fallthru
        _
      %p508 = scmp.lt.s32.totalorder %s19, 1
      %s509 = scalar_select %p508, %s19, 1
      %p510 = scmp.lt.s32.totalorder %s20, 7
      %s511 = scalar_select %p510, %s20, 7
      %s512 = smul.addr %s509, 8
      %s513 = sadd.s32 %s511, %s512
      %s514 = smul.addr %s513, 8
      %s515 = scalar_lea.vmem %s3, %s514
      // Predicated region
      $region41: #{famenet_forward.24} parent=31 // pred_check
        %p516 = pneg %p130
      $region42: #{famenet_forward.24} parent=31 // pred_check_branch
        %518 = sbr.rel (%p516) target = $region44
      $region43: #{famenet_forward.24} parent=31 // pred_region
        _
      $region44: #{famenet_forward.24} parent=31 // pred_fallthru
        _
    $region32: #{famenet_forward.24} parent=5 // pred_fallthru
      _
    %p519 = scmp.le.s32.totalorder 2, %s9
    // Predicated region
    $region45: #{famenet_forward.24} parent=5 // pred_check
      %p520 = pneg %p519
    $region46: #{famenet_forward.24} parent=5 // pred_check_branch
      %522 = sbr.rel (%p520) target = $region48
    $region47: #{famenet_forward.24} parent=5 // pred_region
      %s523 = ssub.s32 %s9, 2
      // Predicated region
      $region49: #{famenet_forward.24} parent=47 // pred_check
        %p524 = pneg %p136
      $region50: #{famenet_forward.24} parent=47 // pred_check_branch
        %526 = sbr.rel (%p524) target = $region52
      $region51: #{famenet_forward.24} parent=47 // pred_region
        %p527 = scmp.lt.s32.totalorder %s22, 1
        %s528 = scalar_select %p527, %s22, 1
        %p529 = scmp.lt.s32.totalorder %s23, 7
        %s530 = scalar_select %p529, %s23, 7
        %s531 = smul.addr %s528, 8
        %s532 = sadd.s32 %s530, %s531
        %s533 = smul.addr %s532, 8
        %s534 = scalar_lea.vmem %s3, %s533
      $region52: #{famenet_forward.24} parent=47 // pred_fallthru
        _
    $region48: #{famenet_forward.24} parent=5 // pred_fallthru
      _
  $region6: #{famenet_forward.24} parent=0 // loop_footer
    %s13 = sadd.s32 1, %s9
  $region7: #{famenet_forward.24} parent=0 // loop_footer_branch
    %8 = sbr.rel target = $region3
  $region8: #{famenet_forward.24} parent=0 // loop_exit
    _

// kernel: famenet_forward.14
$region0: #{famenet_forward.14}
  #allocation0 [shape = 'u32[]', space=smem, size = 0x4, offset = 0x4, fixed_abs, tag = 'smem constant byte address 0x4 - core index']
  #allocation1 [shape = 'u32[144,128]{1,0:T(1,128)}', space=vmem, size = 0x12000, scoped, tag = 'internal scratch']
  %s0 = inlined_call_operand.vmem [shape: f32[128,36], index: 0, kind: input, shape index: {}]
  %s1 = inlined_call_operand.vmem [shape: f32[36,32], index: 1, kind: input, shape index: {}]
  %s2 = inlined_call_operand.vmem [shape: f32[1,32], index: 2, kind: input, shape index: {}]
  %s3 = inlined_call_operand.vmem [shape: f32[128,32], index: 3, kind: output, shape index: {}]
  %s4 = sld [smem:[#allocation0]]
  $region22: #{famenet_forward.14} parent=0
    _
  %s6 = ssub.s32 1, %s4
  %s7 = scalar_select 0, %s6, %s4
  // Predicated region
  $region2: #{famenet_forward.14} parent=0 // pred_check
    _
  $region3: #{famenet_forward.14} parent=0 // pred_check_branch
    %9 = sbr.rel (0) target = $region5
  $region4: #{famenet_forward.14} parent=0 // pred_region
    _
  $region5: #{famenet_forward.14} parent=0 // pred_fallthru
    _
  // Predicated region
  $region6: #{famenet_forward.14} parent=0 // pred_check
    _
  $region7: #{famenet_forward.14} parent=0 // pred_check_branch
    %11 = sbr.rel (0) target = $region9
  $region8: #{famenet_forward.14} parent=0 // pred_region
    _
  $region9: #{famenet_forward.14} parent=0 // pred_fallthru
    _
  // Predicated region
  $region10: #{famenet_forward.14} parent=0 // pred_check
    _
  $region11: #{famenet_forward.14} parent=0 // pred_check_branch
    %13 = sbr.rel (0) target = $region13
  $region12: #{famenet_forward.14} parent=0 // pred_region
    _
  $region13: #{famenet_forward.14} parent=0 // pred_fallthru
    _
  %v14 = vld [vmem:[%s0] sm:$0xff]
  %v15 = vld [vmem:[%s0 + $0x8] sm:$0xff]
  %v16 = vld [vmem:[%s0 + $0x10] sm:$0xff]
  %v17 = vld [vmem:[%s0 + $0x18] sm:$0xff]
  %v18 = vld [vmem:[%s0 + $0x20] sm:$0xff]
  %v19 = vld [vmem:[%s0 + $0x28] sm:$0xff]
  %v20 = vld [vmem:[%s0 + $0x30] sm:$0xff]
  %v21 = vld [vmem:[%s0 + $0x38] sm:$0xff]
  %v22 = vld [vmem:[%s0 + $0x40] sm:$0xff]
  %v23 = vld [vmem:[%s0 + $0x48] sm:$0xff]
  %v24 = vld [vmem:[%s0 + $0x50] sm:$0xff]
  %v25 = vld [vmem:[%s0 + $0x58] sm:$0xff]
  %v26 = vld [vmem:[%s0 + $0x60] sm:$0xff]
  %v27 = vld [vmem:[%s0 + $0x68] sm:$0xff]
  %v28 = vld [vmem:[%s0 + $0x70] sm:$0xff]
  %v29 = vld [vmem:[%s0 + $0x78] sm:$0xff]
  %v30 = vld [vmem:[%s1] sm:$0xff]
  %v31 = vld [vmem:[%s1 + $0x8] sm:$0xff]
  %v32 = vld [vmem:[%s1 + $0x10] sm:$0xff]
  %v33 = vld [vmem:[%s1 + $0x18] sm:$0xff]
  %v34 = vld [vmem:[%s1 + $0x20] sm:$0xf]
  %v35 = vld [vmem:[%s2] sm:$0x1]
  %v37 = vlaneseq
  %v38 = vshrl.u32 %v37, 7
  %v39 = vsub.s32 0, %v38
  %v40 = vrot.slane %v35, %v39
  %vm42 = vcmask 293888
  %v44 = vsel %vm42, %v14, 0
  %v47 = vsel %vm42, %v15, 0
  %v50 = vsel %vm42, %v16, 0
  %v53 = vsel %vm42, %v17, 0
  %v56 = vsel %vm42, %v18, 0
  %v59 = vsel %vm42, %v19, 0
  %v62 = vsel %vm42, %v20, 0
  %v65 = vsel %vm42, %v21, 0
  %v68 = vsel %vm42, %v22, 0
  %v71 = vsel %vm42, %v23, 0
  %v74 = vsel %vm42, %v24, 0
  %v77 = vsel %vm42, %v25, 0
  %v80 = vsel %vm42, %v26, 0
  %v83 = vsel %vm42, %v27, 0
  %v86 = vsel %vm42, %v28, 0
  %v89 = vsel %vm42, %v29, 0
  %vm91 = vcmask 1043456
  %v93 = vsel %vm91, %v34, 0
  %95 = vmatprep.subr.mxu0 0.0
  %96 = vmatpush1.msra.mxu0 0.0
  %97 = vmatprep.subr.mxu0 0.0
  %98 = vmatpush1.msra.mxu0 0.0
  %99 = vmatprep.subr.mxu0 0.0
  %100 = vmatpush1.msra.mxu0 0.0
  %101 = vmatprep.subr.mxu0 0.0
  %102 = vmatpush1.msra.mxu0 0.0
  %103 = vmatprep.subr.mxu0 0.0
  %104 = vmatpush1.msra.mxu0 0.0
  %105 = vmatprep.subr.mxu0 0.0
  %106 = vmatpush1.msra.mxu0 0.0
  %107 = vmatprep.subr.mxu0 0.0
  %108 = vmatpush1.msra.mxu0 0.0
  %109 = vmatprep.subr.mxu0 0.0
  %110 = vmatpush1.msra.mxu0 0.0
  %111 = vmatprep.subr.mxu0 0.0
  %112 = vmatpush1.msra.mxu0 0.0
  %113 = vmatprep.subr.mxu0 0.0
  %114 = vmatpush1.msra.mxu0 0.0
  %115 = vmatprep.subr.mxu0 0.0
  %116 = vmatpush1.msra.mxu0 0.0
  %117 = vmatprep.subr.mxu0 0.0
  %118 = vmatpush1.msra.mxu0 %v93
  %119 = vmatprep.subr.mxu0 0.0
  %120 = vmatpush1.msra.mxu0 %v33
  %121 = vmatprep.subr.mxu0 0.0
  %122 = vmatpush1.msra.mxu0 %v32
  %123 = vmatprep.subr.mxu0 0.0
  %124 = vmatpush1.msra.mxu0 %v31
  %125 = vmatprep.subr.mxu0 0.0
  %126 = vmatpush1.msra.mxu0 %v30
  %127 = vmatprep.subr.mxu0 0.0
  %128 = vmatpush2.msra.mxu0 0.0
  %129 = vmatprep.subr.mxu0 0.0
  %130 = vmatpush2.msra.mxu0 0.0
  %131 = vmatprep.subr.mxu0 0.0
  %132 = vmatpush2.msra.mxu0 0.0
  %133 = vmatprep.subr.mxu0 0.0
  %134 = vmatpush2.msra.mxu0 0.0
  %135 = vmatprep.subr.mxu0 0.0
  %136 = vmatpush2.msra.mxu0 0.0
  %137 = vmatprep.subr.mxu0 0.0
  %138 = vmatpush2.msra.mxu0 0.0
  %139 = vmatprep.subr.mxu0 0.0
  %140 = vmatpush2.msra.mxu0 0.0
  %141 = vmatprep.subr.mxu0 0.0
  %142 = vmatpush2.msra.mxu0 0.0
  %143 = vmatprep.subr.mxu0 0.0
  %144 = vmatpush2.msra.mxu0 0.0
  %145 = vmatprep.subr.mxu0 0.0
  %146 = vmatpush2.msra.mxu0 0.0
  %147 = vmatprep.subr.mxu0 0.0
  %148 = vmatpush2.msra.mxu0 0.0
  %149 = vmatprep.subr.mxu0 0.0
  %150 = vmatpush2.msra.mxu0 0.0
  %151 = vmatprep.subr.mxu0 0.0
  %152 = vmatpush2.msra.mxu0 0.0
  %153 = vmatprep.subr.mxu0 0.0
  %154 = vmatpush2.msra.mxu0 0.0
  %155 = vmatprep.subr.mxu0 0.0
  %156 = vmatpush2.msra.mxu0 0.0
  %157 = vmatprep.subr.mxu0 0.0
  %158 = vmatpush2.msra.mxu0 0.0
  %159 = vmatprep.mubr.f32.mxu0 0.0
  %160 = vmatmul.mubr.f32.gmra.mxu0 %v44
  %v161 = vpop.f32.mrf.mxu0
  %v162 = vadd.f32 %v40, %v161
  %v163 = vpop.f32.mrf.mxu0
  %164 = vmatprep.mubr.f32.mxu0 0.0
  %165 = vmatmul.mubr.f32.gmra.mxu0 %v47
  %v166 = vpop.f32.mrf.mxu0
  %v167 = vadd.f32 %v40, %v166
  %v168 = vpop.f32.mrf.mxu0
  %169 = vmatprep.mubr.f32.mxu0 0.0
  %170 = vmatmul.mubr.f32.gmra.mxu0 %v50
  %v171 = vpop.f32.mrf.mxu0
  %v172 = vadd.f32 %v40, %v171
  %v173 = vpop.f32.mrf.mxu0
  %174 = vmatprep.mubr.f32.mxu0 0.0
  %175 = vmatmul.mubr.f32.gmra.mxu0 %v53
  %v176 = vpop.f32.mrf.mxu0
  %v177 = vadd.f32 %v40, %v176
  %v178 = vpop.f32.mrf.mxu0
  %179 = vmatprep.mubr.f32.mxu0 0.0
  %180 = vmatmul.mubr.f32.gmra.mxu0 %v56
  %v181 = vpop.f32.mrf.mxu0
  %v182 = vadd.f32 %v40, %v181
  %v183 = vpop.f32.mrf.mxu0
  %184 = vmatprep.mubr.f32.mxu0 0.0
  %185 = vmatmul.mubr.f32.gmra.mxu0 %v59
  %v186 = vpop.f32.mrf.mxu0
  %v187 = vadd.f32 %v40, %v186
  %v188 = vpop.f32.mrf.mxu0
  %189 = vmatprep.mubr.f32.mxu0 0.0
  %190 = vmatmul.mubr.f32.gmra.mxu0 %v62
  %v191 = vpop.f32.mrf.mxu0
  %v192 = vadd.f32 %v40, %v191
  %v193 = vpop.f32.mrf.mxu0
  %194 = vmatprep.mubr.f32.mxu0 0.0
  %195 = vmatmul.mubr.f32.gmra.mxu0 %v65
  %v196 = vpop.f32.mrf.mxu0
  %v197 = vadd.f32 %v40, %v196
  %v198 = vpop.f32.mrf.mxu0
  %199 = vmatprep.mubr.f32.mxu0 0.0
  %200 = vmatmul.mubr.f32.gmra.mxu0 %v68
  %v201 = vpop.f32.mrf.mxu0
  %v202 = vadd.f32 %v40, %v201
  %v203 = vpop.f32.mrf.mxu0
  %204 = vmatprep.mubr.f32.mxu0 0.0
  %205 = vmatmul.mubr.f32.gmra.mxu0 %v71
  %v206 = vpop.f32.mrf.mxu0
  %v207 = vadd.f32 %v40, %v206
  %v208 = vpop.f32.mrf.mxu0
  %209 = vmatprep.mubr.f32.mxu0 0.0
  %210 = vmatmul.mubr.f32.gmra.mxu0 %v74
  %v211 = vpop.f32.mrf.mxu0
  %v212 = vadd.f32 %v40, %v211
  %v213 = vpop.f32.mrf.mxu0
  %214 = vmatprep.mubr.f32.mxu0 0.0
  %215 = vmatmul.mubr.f32.gmra.mxu0 %v77
  %v216 = vpop.f32.mrf.mxu0
  %v217 = vadd.f32 %v40, %v216
  %v218 = vpop.f32.mrf.mxu0
  %219 = vmatprep.mubr.f32.mxu0 0.0
  %220 = vmatmul.mubr.f32.gmra.mxu0 %v80
  %v221 = vpop.f32.mrf.mxu0
  %v222 = vadd.f32 %v40, %v221
  %v223 = vpop.f32.mrf.mxu0
  %224 = vmatprep.mubr.f32.mxu0 0.0
  %225 = vmatmul.mubr.f32.gmra.mxu0 %v83
  %v226 = vpop.f32.mrf.mxu0
  %v227 = vadd.f32 %v40, %v226
  %v228 = vpop.f32.mrf.mxu0
  %229 = vmatprep.mubr.f32.mxu0 0.0
  %230 = vmatmul.mubr.f32.gmra.mxu0 %v86
  %v231 = vpop.f32.mrf.mxu0
  %v232 = vadd.f32 %v40, %v231
  %v233 = vpop.f32.mrf.mxu0
  %234 = vmatprep.mubr.f32.mxu0 0.0
  %235 = vmatmul.mubr.f32.gmra.mxu0 %v89
  %v236 = vpop.f32.mrf.mxu0
  %v237 = vadd.f32 %v40, %v236
  %v238 = vpop.f32.mrf.mxu0
  %239 = vdwg.mxu0
  %v240 = vmax.f32 %v162, 0.0
  %v241 = vmax.f32 %v167, 0.0
  %v242 = vmax.f32 %v172, 0.0
  %v243 = vmax.f32 %v177, 0.0
  %v244 = vmax.f32 %v182, 0.0
  %v245 = vmax.f32 %v187, 0.0
  %v246 = vmax.f32 %v192, 0.0
  %v247 = vmax.f32 %v197, 0.0
  %v248 = vmax.f32 %v202, 0.0
  %v249 = vmax.f32 %v207, 0.0
  %v250 = vmax.f32 %v212, 0.0
  %v251 = vmax.f32 %v217, 0.0
  %v252 = vmax.f32 %v222, 0.0
  %v253 = vmax.f32 %v227, 0.0
  %v254 = vmax.f32 %v232, 0.0
  %v255 = vmax.f32 %v237, 0.0
  %vm256 = vcmask 261120
  %257 = vst.msk [vmem:[%s3] sm:$0xff] %vm256, %v240
  %258 = vst.msk [vmem:[%s3 + $0x8] sm:$0xff] %vm256, %v241
  %259 = vst.msk [vmem:[%s3 + $0x10] sm:$0xff] %vm256, %v242
  %260 = vst.msk [vmem:[%s3 + $0x18] sm:$0xff] %vm256, %v243
  %261 = vst.msk [vmem:[%s3 + $0x20] sm:$0xff] %vm256, %v244
  %262 = vst.msk [vmem:[%s3 + $0x28] sm:$0xff] %vm256, %v245
  %263 = vst.msk [vmem:[%s3 + $0x30] sm:$0xff] %vm256, %v246
  %264 = vst.msk [vmem:[%s3 + $0x38] sm:$0xff] %vm256, %v247
  %265 = vst.msk [vmem:[%s3 + $0x40] sm:$0xff] %vm256, %v248
  %266 = vst.msk [vmem:[%s3 + $0x48] sm:$0xff] %vm256, %v249
  %267 = vst.msk [vmem:[%s3 + $0x50] sm:$0xff] %vm256, %v250
  %268 = vst.msk [vmem:[%s3 + $0x58] sm:$0xff] %vm256, %v251
  %269 = vst.msk [vmem:[%s3 + $0x60] sm:$0xff] %vm256, %v252
  %270 = vst.msk [vmem:[%s3 + $0x68] sm:$0xff] %vm256, %v253
  %271 = vst.msk [vmem:[%s3 + $0x70] sm:$0xff] %vm256, %v254
  %272 = vst.msk [vmem:[%s3 + $0x78] sm:$0xff] %vm256, %v255
  // Predicated region
  $region14: #{famenet_forward.14} parent=0 // pred_check
    _
  $region15: #{famenet_forward.14} parent=0 // pred_check_branch
    %274 = sbr.rel (0) target = $region17
  $region16: #{famenet_forward.14} parent=0 // pred_region
    _
  $region17: #{famenet_forward.14} parent=0 // pred_fallthru
    _
  // Predicated region
  $region18: #{famenet_forward.14} parent=0 // pred_check
    _
  $region19: #{famenet_forward.14} parent=0 // pred_check_branch
    %276 = sbr.rel (0) target = $region21
  $region20: #{famenet_forward.14} parent=0 // pred_region
    _
  $region21: #{famenet_forward.14} parent=0 // pred_fallthru
    _

// kernel: famenet_forward.25
$region0: #{famenet_forward.25}
  #allocation0 [shape = 'u32[]', space=smem, size = 0x4, offset = 0x4, fixed_abs, tag = 'smem constant byte address 0x4 - core index']
  #allocation1 [shape = 'u32[144,128]{1,0:T(1,128)}', space=vmem, size = 0x12000, scoped, tag = 'internal scratch']
  #allocation2 [shape = 'f32[8,64]{1,0:T(8,128)}', space=vmem, size = 0x1000, scoped, tag = 'scratch operand']
  %s0 = inlined_call_operand.vmem [shape: f32[2,10,10,64], index: 0, kind: input, shape index: {}]
  %s1 = inlined_call_operand.vmem [shape: f32[3,3,64,64], index: 1, kind: input, shape index: {}]
  %s2 = inlined_call_operand.vmem [shape: f32[1,64], index: 2, kind: input, shape index: {}]
  %s3 = inlined_call_operand.vmem [shape: f32[2,8,8,64], index: 3, kind: output, shape index: {}]
  %s4 = sld [smem:[#allocation0]]
  $region53: #{famenet_forward.25} parent=0
    _
  %s6 = ssub.s32 1, %s4
  %s7 = scalar_select 0, %s6, %s4
  loop: start=0, step=1, limit=50
  $region2: #{famenet_forward.25} parent=0 // loop_pre_header
    _
  $region3: #{famenet_forward.25} parent=0 // loop_header
    %s9 = sphi 0, %s13
    %p10 = scmp.ge.s32.totalorder %s9, 50
    %s16 = sphi 0, %s35
    %s17 = sphi 0, %s31
    %s18 = sphi 0, %s27
    %s19 = sphi 0, %s16
    %s20 = sphi 0, %s17
    %s21 = sphi 0, %s18
    %s22 = sphi 0, %s19
    %s23 = sphi 0, %s20
    %s24 = sphi 0, %s21
    %s42 = sphi 0, %s44
    %s45 = sphi 0, %s42
    %s46 = sphi 0, %s45
    %s62 = sphi 0, %s46
    %s68 = sphi 0, %s70
    %s71 = sphi 0, %s68
    %s72 = sphi 0, %s71
    %s88 = sphi 0, %s72
    %s92 = sphi 0, %s92
    %s94 = sphi 0, %s92
    %s95 = sphi 0, %s94
    %s109 = sphi 0, %s95
    %s117 = sphi 0, %s119
    %s120 = sphi 0, %s117
    %s121 = sphi 0, %s120
    %s137 = sphi 0, %s121
  $region4: #{famenet_forward.25} parent=0 // loop_header_branch
    %12 = sbr.rel (%p10) target = $region8
  $region5: #{famenet_forward.25} parent=0 // loop_body
    %s14 = ssub.s32 %s9, 1
    %s15 = ssub.s32 %s9, 2
    %s25 = sadd.s32 1, %s18
    %p26 = scmp.ge.s32.totalorder %s25, 3
    %s27 = scalar_select %p26, 0, %s25
    %s28 = sadd.s32 1, %s17
    %s29 = scalar_select %p26, %s28, %s17
    %p30 = scmp.ge.s32.totalorder %s29, 8
    %s31 = scalar_select %p30, 0, %s29
    %s32 = sadd.s32 1, %s16
    %s33 = scalar_select %p30, %s32, %s16
    %p34 = scmp.ge.s32.totalorder %s33, 2
    %s35 = scalar_select %p34, 0, %s33
    %s36 = sadd.s32 %s17, %s18
    %s37 = sadd.s32 %s31, %s27
    %s38 = ssub.s32 %s16, %s35
    %s39 = ssub.s32 %s36, %s37
    %s40 = sor.u32 %s38, %s39
    %p41 = scmp.eq.s32.totalorder %s40, 0
    %s43 = sadd.s32 %s42, 1
    %s44 = scalar_select %p41, %s42, %s43
    %p47 = pneg %p41
    %p48 = scmp.eq.s32.totalorder %s9, 47
    %p49 = por %p47, %p48
    %p50 = scmp.ne.s32.totalorder %s42, %s45
    %p51 = scmp.eq.s32.totalorder %s9, 0
    %p52 = por %p50, %p51
    %p53 = scmp.ne.s32.totalorder %s42, %s45
    %p54 = scmp.eq.s32.totalorder %s14, 47
    %p55 = por %p53, %p54
    %p56 = scmp.ne.s32.totalorder %s45, %s46
    %p57 = scmp.eq.s32.totalorder %s14, 0
    %p58 = por %p56, %p57
    %p59 = scmp.ne.s32.totalorder %s45, %s46
    %p60 = scmp.eq.s32.totalorder %s15, 47
    %p61 = por %p59, %p60
    %p63 = scmp.ne.s32.totalorder %s46, %s62
    %p64 = scmp.eq.s32.totalorder %s15, 0
    %p65 = por %p63, %p64
    %s66 = ssub.s32 %s18, %s27
    %p67 = scmp.eq.s32.totalorder %s66, 0
    %s69 = sadd.s32 %s68, 1
    %s70 = scalar_select %p67, %s68, %s69
    %p73 = pneg %p67
    %p74 = scmp.eq.s32.totalorder %s9, 47
    %p75 = por %p73, %p74
    %p76 = scmp.ne.s32.totalorder %s68, %s71
    %p77 = scmp.eq.s32.totalorder %s9, 0
    %p78 = por %p76, %p77
    %p79 = scmp.ne.s32.totalorder %s68, %s71
    %p80 = scmp.eq.s32.totalorder %s14, 47
    %p81 = por %p79, %p80
    %p82 = scmp.ne.s32.totalorder %s71, %s72
    %p83 = scmp.eq.s32.totalorder %s14, 0
    %p84 = por %p82, %p83
    %p85 = scmp.ne.s32.totalorder %s71, %s72
    %p86 = scmp.eq.s32.totalorder %s15, 47
    %p87 = por %p85, %p86
    %p89 = scmp.ne.s32.totalorder %s72, %s88
    %p90 = scmp.eq.s32.totalorder %s15, 0
    %p91 = por %p89, %p90
    %s93 = sadd.s32 %s92, 1
    %p96 = scmp.eq.s32.totalorder %s9, 47
    %p97 = scmp.ne.s32.totalorder %s92, %s94
    %p98 = scmp.eq.s32.totalorder %s9, 0
    %p99 = por %p97, %p98
    %p100 = scmp.ne.s32.totalorder %s92, %s94
    %p101 = scmp.eq.s32.totalorder %s14, 47
    %p102 = por %p100, %p101
    %p103 = scmp.ne.s32.totalorder %s94, %s95
    %p104 = scmp.eq.s32.totalorder %s14, 0
    %p105 = por %p103, %p104
    %p106 = scmp.ne.s32.totalorder %s94, %s95
    %p107 = scmp.eq.s32.totalorder %s15, 47
    %p108 = por %p106, %p107
    %p110 = scmp.ne.s32.totalorder %s95, %s109
    %p111 = scmp.eq.s32.totalorder %s15, 0
    %p112 = por %p110, %p111
    %s113 = ssub.s32 %s16, %s35
    %s114 = ssub.s32 %s17, %s31
    %s115 = sor.u32 %s113, %s114
    %p116 = scmp.eq.s32.totalorder %s115, 0
    %s118 = sadd.s32 %s117, 1
    %s119 = scalar_select %p116, %s117, %s118
    %p122 = pneg %p116
    %p123 = scmp.eq.s32.totalorder %s9, 47
    %p124 = por %p122, %p123
    %p125 = scmp.ne.s32.totalorder %s117, %s120
    %p126 = scmp.eq.s32.totalorder %s9, 0
    %p127 = por %p125, %p126
    %p128 = scmp.ne.s32.totalorder %s117, %s120
    %p129 = scmp.eq.s32.totalorder %s14, 47
    %p130 = por %p128, %p129
    %p131 = scmp.ne.s32.totalorder %s120, %s121
    %p132 = scmp.eq.s32.totalorder %s14, 0
    %p133 = por %p131, %p132
    %p134 = scmp.ne.s32.totalorder %s120, %s121
    %p135 = scmp.eq.s32.totalorder %s15, 47
    %p136 = por %p134, %p135
    %p138 = scmp.ne.s32.totalorder %s121, %s137
    %p139 = scmp.eq.s32.totalorder %s15, 0
    %p140 = por %p138, %p139
    %p141 = scmp.le.s32.totalorder 1, %s9
    %p142 = scmp.lt.s32.totalorder %s9, 49
    %p143 = pnand %p141, %p142
    %p144 = pneg %p143
    // Predicated region
    $region9: #{famenet_forward.25} parent=5 // pred_check
      _
    $region10: #{famenet_forward.25} parent=5 // pred_check_branch
      %146 = sbr.rel (%p143) target = $region12
    $region11: #{famenet_forward.25} parent=5 // pred_region
      %s147 = ssub.s32 %s9, 1
      // Predicated region
      $region13: #{famenet_forward.25} parent=11 // pred_check
        %p148 = pneg %p105
      $region14: #{famenet_forward.25} parent=11 // pred_check_branch
        %150 = sbr.rel (%p148) target = $region16
      $region15: #{famenet_forward.25} parent=11 // pred_region
        _
      $region16: #{famenet_forward.25} parent=11 // pred_fallthru
        _
    $region12: #{famenet_forward.25} parent=5 // pred_fallthru
      _
    %p151 = scmp.lt.s32.totalorder %s9, 48
    // Predicated region
    $region17: #{famenet_forward.25} parent=5 // pred_check
      %p152 = pneg %p151
    $region18: #{famenet_forward.25} parent=5 // pred_check_branch
      %154 = sbr.rel (%p152) target = $region20
    $region19: #{famenet_forward.25} parent=5 // pred_region
      // Predicated region
      $region21: #{famenet_forward.25} parent=19 // pred_check
        %p155 = pneg %p52
      $region22: #{famenet_forward.25} parent=19 // pred_check_branch
        %157 = sbr.rel (%p155) target = $region24
      $region23: #{famenet_forward.25} parent=19 // pred_region
        %s158 = sadd.s32 %s17, %s18
        %p159 = scmp.lt.s32.totalorder %s16, 1
        %s160 = scalar_select %p159, %s16, 1
        %p161 = scmp.lt.s32.totalorder %s158, 9
        %s162 = scalar_select %p161, %s158, 9
        %s163 = smul.addr %s162, 2
        %s164 = smul.addr %s160, 20
        %s165 = sadd.s32 %s163, %s164
        %s166 = smul.addr %s165, 8
        %s167 = scalar_lea.vmem %s0, %s166
        %s168 = sadd.s32 %s17, %s18
      $region24: #{famenet_forward.25} parent=19 // pred_fallthru
        _
      // Predicated region
      $region25: #{famenet_forward.25} parent=19 // pred_check
        %p169 = pneg %p78
      $region26: #{famenet_forward.25} parent=19 // pred_check_branch
        %171 = sbr.rel (%p169) target = $region28
      $region27: #{famenet_forward.25} parent=19 // pred_region
        %p172 = scmp.lt.s32.totalorder %s18, 2
        %s173 = scalar_select %p172, %s18, 2
        %s174 = smul.addr %s173, 24
        %s175 = smul.addr %s174, 8
        %s176 = scalar_lea.vmem %s1, %s175
      $region28: #{famenet_forward.25} parent=19 // pred_fallthru
        _
    $region20: #{famenet_forward.25} parent=5 // pred_fallthru
      _
    %p177 = scmp.le.s32.totalorder 1, %s9
    %p178 = scmp.lt.s32.totalorder %s9, 49
    %p179 = pnand %p177, %p178
    %p180 = pneg %p179
    // Predicated region
    $region29: #{famenet_forward.25} parent=5 // pred_check
      _
    $region30: #{famenet_forward.25} parent=5 // pred_check_branch
      %182 = sbr.rel (%p179) target = $region32
    $region31: #{famenet_forward.25} parent=5 // pred_region
      %s183 = ssub.s32 %s9, 1
      %s184 = sadd.s32 %s20, %s21
      %p185 = scmp.lt.s32.totalorder %s19, 1
      %s186 = scalar_select %p185, %s19, 1
      %p187 = scmp.lt.s32.totalorder %s184, 9
      %s188 = scalar_select %p187, %s184, 9
      %s189 = smul.addr %s188, 2
      %s190 = smul.addr %s186, 20
      %s191 = sadd.s32 %s189, %s190
      %s192 = smul.addr %s191, 8
      %s193 = scalar_lea.vmem %s0, %s192
      %p194 = pneg %p58
      %p195 = pneg %p55
      %p196 = scmp.lt.s32.totalorder %s21, 2
      %s197 = scalar_select %p196, %s21, 2
      %s198 = smul.addr %s197, 24
      %s199 = smul.addr %s198, 8
      %s200 = scalar_lea.vmem %s1, %s199
      %p201 = pneg %p84
      %p202 = pneg %p81
      %p203 = pneg %p105
      %p204 = pneg %p102
      %p205 = pneg %p133
      %p206 = pneg %p130
      %p207 = scmp.lt.s32.totalorder %s19, 1
      %s208 = scalar_select %p207, %s19, 1
      %p209 = scmp.lt.s32.totalorder %s20, 7
      %s210 = scalar_select %p209, %s20, 7
      %s211 = smul.addr %s208, 8
      %s212 = sadd.s32 %s210, %s211
      %s213 = smul.addr %s212, 8
      %s214 = scalar_lea.vmem %s3, %s213
      %s215 = sadd.s32 %s20, %s21
      %p216 = scmp.lt.s32.totalorder %s19, 1
      %s217 = scalar_select %p216, %s19, 1
      %p218 = scmp.lt.s32.totalorder %s215, 9
      %s219 = scalar_select %p218, %s215, 9
      %s220 = smul.addr %s219, 2
      %s221 = smul.addr %s217, 20
      %s222 = sadd.s32 %s220, %s221
      %s223 = smul.addr %s222, 8
      %s224 = scalar_lea.vmem %s0, %s223
      %s225 = sadd.s32 %s20, %s21
      %p226 = scmp.lt.s32.totalorder %s21, 2
      %s227 = scalar_select %p226, %s21, 2
      %s228 = smul.addr %s227, 24
      %s229 = smul.addr %s228, 8
      %s230 = scalar_lea.vmem %s1, %s229
      %p231 = scmp.lt.s32.totalorder %s19, 1
      %s232 = scalar_select %p231, %s19, 1
      %p233 = scmp.lt.s32.totalorder %s20, 7
      %s234 = scalar_select %p233, %s20, 7
      %s235 = smul.addr %s232, 8
      %s236 = sadd.s32 %s234, %s235
      %s237 = smul.addr %s236, 8
      %s238 = scalar_lea.vmem %s3, %s237
      %p239 = scmp.eq.s32.totalorder %s21, 0
      // Predicated region
      $region33: #{famenet_forward.25} parent=31 // pred_check
        %p240 = pneg %p239
      $region34: #{famenet_forward.25} parent=31 // pred_check_branch
        %242 = sbr.rel (%p240) target = $region36
      $region35: #{famenet_forward.25} parent=31 // pred_region
        %vm243 = vcmask 523264
        %244 = vst.msk [vmem:[#allocation2] sm:$0xff] %vm243, 0.0
      $region36: #{famenet_forward.25} parent=31 // pred_fallthru
        _
      %v245 = vld [vmem:[%s224] sm:$0xff]
      %v246 = vld [vmem:[%s224 + $0x8] sm:$0x3]
      %v247 = vld [vmem:[#allocation2] sm:$0xff]
      %v248 = vld [vmem:[%s230] sm:$0xff]
      %v249 = vld [vmem:[%s230 + $0x8] sm:$0xff]
      %v250 = vld [vmem:[%s230 + $0x10] sm:$0xff]
      %v251 = vld [vmem:[%s230 + $0x18] sm:$0xff]
      %v252 = vld [vmem:[%s230 + $0x20] sm:$0xff]
      %v253 = vld [vmem:[%s230 + $0x28] sm:$0xff]
      %v254 = vld [vmem:[%s230 + $0x30] sm:$0xff]
      %v255 = vld [vmem:[%s230 + $0x38] sm:$0xff]
      %vm256 = vcmask 523264
      %v258 = vsel %vm256, %v245, 0
      %260 = vmatprep.subr.mxu0 0.0
      %261 = vmatpush1.msra.mxu0 0.0
      %262 = vmatprep.subr.mxu0 0.0
      %263 = vmatpush1.msra.mxu0 0.0
      %264 = vmatprep.subr.mxu0 0.0
      %265 = vmatpush1.msra.mxu0 0.0
      %266 = vmatprep.subr.mxu0 0.0
      %267 = vmatpush1.msra.mxu0 0.0
      %268 = vmatprep.subr.mxu0 0.0
      %269 = vmatpush1.msra.mxu0 0.0
      %270 = vmatprep.subr.mxu0 0.0
      %271 = vmatpush1.msra.mxu0 0.0
      %272 = vmatprep.subr.mxu0 0.0
      %273 = vmatpush1.msra.mxu0 0.0
      %274 = vmatprep.subr.mxu0 0.0
      %275 = vmatpush1.msra.mxu0 0.0
      %276 = vmatprep.subr.mxu0 0.0
      %277 = vmatpush1.msra.mxu0 %v255
      %278 = vmatprep.subr.mxu0 0.0
      %279 = vmatpush1.msra.mxu0 %v254
      %280 = vmatprep.subr.mxu0 0.0
      %281 = vmatpush1.msra.mxu0 %v253
      %282 = vmatprep.subr.mxu0 0.0
      %283 = vmatpush1.msra.mxu0 %v252
      %284 = vmatprep.subr.mxu0 0.0
      %285 = vmatpush1.msra.mxu0 %v251
      %286 = vmatprep.subr.mxu0 0.0
      %287 = vmatpush1.msra.mxu0 %v250
      %288 = vmatprep.subr.mxu0 0.0
      %289 = vmatpush1.msra.mxu0 %v249
      %290 = vmatprep.subr.mxu0 0.0
      %291 = vmatpush1.msra.mxu0 %v248
      %292 = vmatprep.subr.mxu0 0.0
      %293 = vmatpush2.msra.mxu0 0.0
      %294 = vmatprep.subr.mxu0 0.0
      %295 = vmatpush2.msra.mxu0 0.0
      %296 = vmatprep.subr.mxu0 0.0
      %297 = vmatpush2.msra.mxu0 0.0
      %298 = vmatprep.subr.mxu0 0.0
      %299 = vmatpush2.msra.mxu0 0.0
      %300 = vmatprep.subr.mxu0 0.0
      %301 = vmatpush2.msra.mxu0 0.0
      %302 = vmatprep.subr.mxu0 0.0
      %303 = vmatpush2.msra.mxu0 0.0
      %304 = vmatprep.subr.mxu0 0.0
      %305 = vmatpush2.msra.mxu0 0.0
      %306 = vmatprep.subr.mxu0 0.0
      %307 = vmatpush2.msra.mxu0 0.0
      %308 = vmatprep.subr.mxu0 0.0
      %309 = vmatpush2.msra.mxu0 0.0
      %310 = vmatprep.subr.mxu0 0.0
      %311 = vmatpush2.msra.mxu0 0.0
      %312 = vmatprep.subr.mxu0 0.0
      %313 = vmatpush2.msra.mxu0 0.0
      %314 = vmatprep.subr.mxu0 0.0
      %315 = vmatpush2.msra.mxu0 0.0
      %316 = vmatprep.subr.mxu0 0.0
      %317 = vmatpush2.msra.mxu0 0.0
      %318 = vmatprep.subr.mxu0 0.0
      %319 = vmatpush2.msra.mxu0 0.0
      %320 = vmatprep.subr.mxu0 0.0
      %321 = vmatpush2.msra.mxu0 0.0
      %322 = vmatprep.subr.mxu0 0.0
      %323 = vmatpush2.msra.mxu0 0.0
      %324 = vmatprep.mubr.f32.mxu0 0.0
      %325 = vmatmul.mubr.f32.gmra.mxu0 %v258
      %v326 = vpop.f32.mrf.mxu0
      %v327 = vadd.f32 0.0, %v326
      %v328 = vpop.f32.mrf.mxu0
      %329 = vdwg.mxu0
      %v330 = vadd.f32 %v247, %v327
      %s331 = scalar_lea.vmem %s230, 64
      %v332 = vld [vmem:[%s331] sm:$0xff]
      %v333 = vld [vmem:[%s331 + $0x8] sm:$0xff]
      %v334 = vld [vmem:[%s331 + $0x10] sm:$0xff]
      %v335 = vld [vmem:[%s331 + $0x18] sm:$0xff]
      %v336 = vld [vmem:[%s331 + $0x20] sm:$0xff]
      %v337 = vld [vmem:[%s331 + $0x28] sm:$0xff]
      %v338 = vld [vmem:[%s331 + $0x30] sm:$0xff]
      %v339 = vld [vmem:[%s331 + $0x38] sm:$0xff]
      %vm341 = vcmask 1046528
      %v342 = vrot.slane %v245, 1
      %v343 = vrot.slane %v246, 1
      %v344 = vsel %vm341, %v342, %v343
      %v345 = vsel %vm256, %v344, 0
      %347 = vmatprep.subr.mxu0 0.0
      %348 = vmatpush1.msra.mxu0 0.0
      %349 = vmatprep.subr.mxu0 0.0
      %350 = vmatpush1.msra.mxu0 0.0
      %351 = vmatprep.subr.mxu0 0.0
      %352 = vmatpush1.msra.mxu0 0.0
      %353 = vmatprep.subr.mxu0 0.0
      %354 = vmatpush1.msra.mxu0 0.0
      %355 = vmatprep.subr.mxu0 0.0
      %356 = vmatpush1.msra.mxu0 0.0
      %357 = vmatprep.subr.mxu0 0.0
      %358 = vmatpush1.msra.mxu0 0.0
      %359 = vmatprep.subr.mxu0 0.0
      %360 = vmatpush1.msra.mxu0 0.0
      %361 = vmatprep.subr.mxu0 0.0
      %362 = vmatpush1.msra.mxu0 0.0
      %363 = vmatprep.subr.mxu0 0.0
      %364 = vmatpush1.msra.mxu0 %v339
      %365 = vmatprep.subr.mxu0 0.0
      %366 = vmatpush1.msra.mxu0 %v338
      %367 = vmatprep.subr.mxu0 0.0
      %368 = vmatpush1.msra.mxu0 %v337
      %369 = vmatprep.subr.mxu0 0.0
      %370 = vmatpush1.msra.mxu0 %v336
      %371 = vmatprep.subr.mxu0 0.0
      %372 = vmatpush1.msra.mxu0 %v335
      %373 = vmatprep.subr.mxu0 0.0
      %374 = vmatpush1.msra.mxu0 %v334
      %375 = vmatprep.subr.mxu0 0.0
      %376 = vmatpush1.msra.mxu0 %v333
      %377 = vmatprep.subr.mxu0 0.0
      %378 = vmatpush1.msra.mxu0 %v332
      %379 = vmatprep.subr.mxu0 0.0
      %380 = vmatpush2.msra.mxu0 0.0
      %381 = vmatprep.subr.mxu0 0.0
      %382 = vmatpush2.msra.mxu0 0.0
      %383 = vmatprep.subr.mxu0 0.0
      %384 = vmatpush2.msra.mxu0 0.0
      %385 = vmatprep.subr.mxu0 0.0
      %386 = vmatpush2.msra.mxu0 0.0
      %387 = vmatprep.subr.mxu0 0.0
      %388 = vmatpush2.msra.mxu0 0.0
      %389 = vmatprep.subr.mxu0 0.0
      %390 = vmatpush2.msra.mxu0 0.0
      %391 = vmatprep.subr.mxu0 0.0
      %392 = vmatpush2.msra.mxu0 0.0
      %393 = vmatprep.subr.mxu0 0.0
      %394 = vmatpush2.msra.mxu0 0.0
      %395 = vmatprep.subr.mxu0 0.0
      %396 = vmatpush2.msra.mxu0 0.0
      %397 = vmatprep.subr.mxu0 0.0
      %398 = vmatpush2.msra.mxu0 0.0
      %399 = vmatprep.subr.mxu0 0.0
      %400 = vmatpush2.msra.mxu0 0.0
      %401 = vmatprep.subr.mxu0 0.0
      %402 = vmatpush2.msra.mxu0 0.0
      %403 = vmatprep.subr.mxu0 0.0
      %404 = vmatpush2.msra.mxu0 0.0
      %405 = vmatprep.subr.mxu0 0.0
      %406 = vmatpush2.msra.mxu0 0.0
      %407 = vmatprep.subr.mxu0 0.0
      %408 = vmatpush2.msra.mxu0 0.0
      %409 = vmatprep.subr.mxu0 0.0
      %410 = vmatpush2.msra.mxu0 0.0
      %411 = vmatprep.mubr.f32.mxu0 0.0
      %412 = vmatmul.mubr.f32.gmra.mxu0 %v345
      %v413 = vpop.f32.mrf.mxu0
      %v414 = vadd.f32 0.0, %v413
      %v415 = vpop.f32.mrf.mxu0
      %416 = vdwg.mxu0
      %v417 = vadd.f32 %v330, %v414
      %s418 = scalar_lea.vmem %s230, 128
      %v419 = vld [vmem:[%s418] sm:$0xff]
      %v420 = vld [vmem:[%s418 + $0x8] sm:$0xff]
      %v421 = vld [vmem:[%s418 + $0x10] sm:$0xff]
      %v422 = vld [vmem:[%s418 + $0x18] sm:$0xff]
      %v423 = vld [vmem:[%s418 + $0x20] sm:$0xff]
      %v424 = vld [vmem:[%s418 + $0x28] sm:$0xff]
      %v425 = vld [vmem:[%s418 + $0x30] sm:$0xff]
      %v426 = vld [vmem:[%s418 + $0x38] sm:$0xff]
      %vm427 = vcmask 1045504
      %v428 = vrot.slane %v245, 2
      %v429 = vrot.slane %v246, 2
      %v430 = vsel %vm427, %v428, %v429
      %v431 = vsel %vm256, %v430, 0
      %433 = vmatprep.subr.mxu0 0.0
      %434 = vmatpush1.msra.mxu0 0.0
      %435 = vmatprep.subr.mxu0 0.0
      %436 = vmatpush1.msra.mxu0 0.0
      %437 = vmatprep.subr.mxu0 0.0
      %438 = vmatpush1.msra.mxu0 0.0
      %439 = vmatprep.subr.mxu0 0.0
      %440 = vmatpush1.msra.mxu0 0.0
      %441 = vmatprep.subr.mxu0 0.0
      %442 = vmatpush1.msra.mxu0 0.0
      %443 = vmatprep.subr.mxu0 0.0
      %444 = vmatpush1.msra.mxu0 0.0
      %445 = vmatprep.subr.mxu0 0.0
      %446 = vmatpush1.msra.mxu0 0.0
      %447 = vmatprep.subr.mxu0 0.0
      %448 = vmatpush1.msra.mxu0 0.0
      %449 = vmatprep.subr.mxu0 0.0
      %450 = vmatpush1.msra.mxu0 %v426
      %451 = vmatprep.subr.mxu0 0.0
      %452 = vmatpush1.msra.mxu0 %v425
      %453 = vmatprep.subr.mxu0 0.0
      %454 = vmatpush1.msra.mxu0 %v424
      %455 = vmatprep.subr.mxu0 0.0
      %456 = vmatpush1.msra.mxu0 %v423
      %457 = vmatprep.subr.mxu0 0.0
      %458 = vmatpush1.msra.mxu0 %v422
      %459 = vmatprep.subr.mxu0 0.0
      %460 = vmatpush1.msra.mxu0 %v421
      %461 = vmatprep.subr.mxu0 0.0
      %462 = vmatpush1.msra.mxu0 %v420
      %463 = vmatprep.subr.mxu0 0.0
      %464 = vmatpush1.msra.mxu0 %v419
      %465 = vmatprep.subr.mxu0 0.0
      %466 = vmatpush2.msra.mxu0 0.0
      %467 = vmatprep.subr.mxu0 0.0
      %468 = vmatpush2.msra.mxu0 0.0
      %469 = vmatprep.subr.mxu0 0.0
      %470 = vmatpush2.msra.mxu0 0.0
      %471 = vmatprep.subr.mxu0 0.0
      %472 = vmatpush2.msra.mxu0 0.0
      %473 = vmatprep.subr.mxu0 0.0
      %474 = vmatpush2.msra.mxu0 0.0
      %475 = vmatprep.subr.mxu0 0.0
      %476 = vmatpush2.msra.mxu0 0.0
      %477 = vmatprep.subr.mxu0 0.0
      %478 = vmatpush2.msra.mxu0 0.0
      %479 = vmatprep.subr.mxu0 0.0
      %480 = vmatpush2.msra.mxu0 0.0
      %481 = vmatprep.subr.mxu0 0.0
      %482 = vmatpush2.msra.mxu0 0.0
      %483 = vmatprep.subr.mxu0 0.0
      %484 = vmatpush2.msra.mxu0 0.0
      %485 = vmatprep.subr.mxu0 0.0
      %486 = vmatpush2.msra.mxu0 0.0
      %487 = vmatprep.subr.mxu0 0.0
      %488 = vmatpush2.msra.mxu0 0.0
      %489 = vmatprep.subr.mxu0 0.0
      %490 = vmatpush2.msra.mxu0 0.0
      %491 = vmatprep.subr.mxu0 0.0
      %492 = vmatpush2.msra.mxu0 0.0
      %493 = vmatprep.subr.mxu0 0.0
      %494 = vmatpush2.msra.mxu0 0.0
      %495 = vmatprep.subr.mxu0 0.0
      %496 = vmatpush2.msra.mxu0 0.0
      %497 = vmatprep.mubr.f32.mxu0 0.0
      %498 = vmatmul.mubr.f32.gmra.mxu0 %v431
      %v499 = vpop.f32.mrf.mxu0
      %v500 = vadd.f32 0.0, %v499
      %v501 = vpop.f32.mrf.mxu0
      %502 = vdwg.mxu0
      %v503 = vadd.f32 %v417, %v500
      %504 = vst.msk [vmem:[#allocation2] sm:$0xff] %vm256, %v503
      %p505 = scmp.eq.s32.totalorder %s21, 2
      // Predicated region
      $region37: #{famenet_forward.25} parent=31 // pred_check
        %p506 = pneg %p505
      $region38: #{famenet_forward.25} parent=31 // pred_check_branch
        %508 = sbr.rel (%p506) target = $region40
      $region39: #{famenet_forward.25} parent=31 // pred_region
        %v509 = vld [vmem:[#allocation2] sm:$0xff]
        %v510 = vld [vmem:[%s2] sm:$0x1]
        %v512 = vlaneseq
        %v513 = vshrl.u32 %v512, 7
        %v514 = vsub.s32 0, %v513
        %v515 = vrot.slane %v510, %v514
        %v517 = vadd.f32 %v509, %v515
        %v518 = vmax.f32 %v517, 0.0
        %519 = vst.msk [vmem:[%s238] sm:$0xff] %vm256, %v518
      $region40: #{famenet_forward.25} parent=31 // pred_fallthru
        _
      %p520 = scmp.lt.s32.totalorder %s19, 1
      %s521 = scalar_select %p520, %s19, 1
      %p522 = scmp.lt.s32.totalorder %s20, 7
      %s523 = scalar_select %p522, %s20, 7
      %s524 = smul.addr %s521, 8
      %s525 = sadd.s32 %s523, %s524
      %s526 = smul.addr %s525, 8
      %s527 = scalar_lea.vmem %s3, %s526
      // Predicated region
      $region41: #{famenet_forward.25} parent=31 // pred_check
        %p528 = pneg %p130
      $region42: #{famenet_forward.25} parent=31 // pred_check_branch
        %530 = sbr.rel (%p528) target = $region44
      $region43: #{famenet_forward.25} parent=31 // pred_region
        _
      $region44: #{famenet_forward.25} parent=31 // pred_fallthru
        _
    $region32: #{famenet_forward.25} parent=5 // pred_fallthru
      _
    %p531 = scmp.le.s32.totalorder 2, %s9
    // Predicated region
    $region45: #{famenet_forward.25} parent=5 // pred_check
      %p532 = pneg %p531
    $region46: #{famenet_forward.25} parent=5 // pred_check_branch
      %534 = sbr.rel (%p532) target = $region48
    $region47: #{famenet_forward.25} parent=5 // pred_region
      %s535 = ssub.s32 %s9, 2
      // Predicated region
      $region49: #{famenet_forward.25} parent=47 // pred_check
        %p536 = pneg %p136
      $region50: #{famenet_forward.25} parent=47 // pred_check_branch
        %538 = sbr.rel (%p536) target = $region52
      $region51: #{famenet_forward.25} parent=47 // pred_region
        %p539 = scmp.lt.s32.totalorder %s22, 1
        %s540 = scalar_select %p539, %s22, 1
        %p541 = scmp.lt.s32.totalorder %s23, 7
        %s542 = scalar_select %p541, %s23, 7
        %s543 = smul.addr %s540, 8
        %s544 = sadd.s32 %s542, %s543
        %s545 = smul.addr %s544, 8
        %s546 = scalar_lea.vmem %s3, %s545
      $region52: #{famenet_forward.25} parent=47 // pred_fallthru
        _
    $region48: #{famenet_forward.25} parent=5 // pred_fallthru
      _
  $region6: #{famenet_forward.25} parent=0 // loop_footer
    %s13 = sadd.s32 1, %s9
  $region7: #{famenet_forward.25} parent=0 // loop_footer_branch
    %8 = sbr.rel target = $region3
  $region8: #{famenet_forward.25} parent=0 // loop_exit
    _

// kernel: famenet_forward.26
$region0: #{famenet_forward.26}
  #allocation0 [shape = 'u32[]', space=smem, size = 0x4, offset = 0x4, fixed_abs, tag = 'smem constant byte address 0x4 - core index']
  #allocation1 [shape = 'u32[144,128]{1,0:T(1,128)}', space=vmem, size = 0x12000, scoped, tag = 'internal scratch']
  #allocation2 [shape = 'f32[8,19]{1,0:T(8,128)}', space=vmem, size = 0x1000, scoped, tag = 'scratch operand']
  %s0 = inlined_call_operand.vmem [shape: f32[2,10,10,64], index: 0, kind: input, shape index: {}]
  %s1 = inlined_call_operand.vmem [shape: f32[3,3,64,19], index: 1, kind: input, shape index: {}]
  %s2 = inlined_call_operand.vmem [shape: f32[1,19], index: 2, kind: input, shape index: {}]
  %s3 = inlined_call_operand.vmem [shape: f32[2,8,8,19], index: 3, kind: output, shape index: {}]
  %s4 = sld [smem:[#allocation0]]
  $region53: #{famenet_forward.26} parent=0
    _
  %s6 = ssub.s32 1, %s4
  %s7 = scalar_select 0, %s6, %s4
  loop: start=0, step=1, limit=50
  $region2: #{famenet_forward.26} parent=0 // loop_pre_header
    _
  $region3: #{famenet_forward.26} parent=0 // loop_header
    %s9 = sphi 0, %s13
    %p10 = scmp.ge.s32.totalorder %s9, 50
    %s16 = sphi 0, %s35
    %s17 = sphi 0, %s31
    %s18 = sphi 0, %s27
    %s19 = sphi 0, %s16
    %s20 = sphi 0, %s17
    %s21 = sphi 0, %s18
    %s22 = sphi 0, %s19
    %s23 = sphi 0, %s20
    %s24 = sphi 0, %s21
    %s42 = sphi 0, %s44
    %s45 = sphi 0, %s42
    %s46 = sphi 0, %s45
    %s62 = sphi 0, %s46
    %s68 = sphi 0, %s70
    %s71 = sphi 0, %s68
    %s72 = sphi 0, %s71
    %s88 = sphi 0, %s72
    %s92 = sphi 0, %s92
    %s94 = sphi 0, %s92
    %s95 = sphi 0, %s94
    %s109 = sphi 0, %s95
    %s117 = sphi 0, %s119
    %s120 = sphi 0, %s117
    %s121 = sphi 0, %s120
    %s137 = sphi 0, %s121
  $region4: #{famenet_forward.26} parent=0 // loop_header_branch
    %12 = sbr.rel (%p10) target = $region8
  $region5: #{famenet_forward.26} parent=0 // loop_body
    %s14 = ssub.s32 %s9, 1
    %s15 = ssub.s32 %s9, 2
    %s25 = sadd.s32 1, %s18
    %p26 = scmp.ge.s32.totalorder %s25, 3
    %s27 = scalar_select %p26, 0, %s25
    %s28 = sadd.s32 1, %s17
    %s29 = scalar_select %p26, %s28, %s17
    %p30 = scmp.ge.s32.totalorder %s29, 8
    %s31 = scalar_select %p30, 0, %s29
    %s32 = sadd.s32 1, %s16
    %s33 = scalar_select %p30, %s32, %s16
    %p34 = scmp.ge.s32.totalorder %s33, 2
    %s35 = scalar_select %p34, 0, %s33
    %s36 = sadd.s32 %s17, %s18
    %s37 = sadd.s32 %s31, %s27
    %s38 = ssub.s32 %s16, %s35
    %s39 = ssub.s32 %s36, %s37
    %s40 = sor.u32 %s38, %s39
    %p41 = scmp.eq.s32.totalorder %s40, 0
    %s43 = sadd.s32 %s42, 1
    %s44 = scalar_select %p41, %s42, %s43
    %p47 = pneg %p41
    %p48 = scmp.eq.s32.totalorder %s9, 47
    %p49 = por %p47, %p48
    %p50 = scmp.ne.s32.totalorder %s42, %s45
    %p51 = scmp.eq.s32.totalorder %s9, 0
    %p52 = por %p50, %p51
    %p53 = scmp.ne.s32.totalorder %s42, %s45
    %p54 = scmp.eq.s32.totalorder %s14, 47
    %p55 = por %p53, %p54
    %p56 = scmp.ne.s32.totalorder %s45, %s46
    %p57 = scmp.eq.s32.totalorder %s14, 0
    %p58 = por %p56, %p57
    %p59 = scmp.ne.s32.totalorder %s45, %s46
    %p60 = scmp.eq.s32.totalorder %s15, 47
    %p61 = por %p59, %p60
    %p63 = scmp.ne.s32.totalorder %s46, %s62
    %p64 = scmp.eq.s32.totalorder %s15, 0
    %p65 = por %p63, %p64
    %s66 = ssub.s32 %s18, %s27
    %p67 = scmp.eq.s32.totalorder %s66, 0
    %s69 = sadd.s32 %s68, 1
    %s70 = scalar_select %p67, %s68, %s69
    %p73 = pneg %p67
    %p74 = scmp.eq.s32.totalorder %s9, 47
    %p75 = por %p73, %p74
    %p76 = scmp.ne.s32.totalorder %s68, %s71
    %p77 = scmp.eq.s32.totalorder %s9, 0
    %p78 = por %p76, %p77
    %p79 = scmp.ne.s32.totalorder %s68, %s71
    %p80 = scmp.eq.s32.totalorder %s14, 47
    %p81 = por %p79, %p80
    %p82 = scmp.ne.s32.totalorder %s71, %s72
    %p83 = scmp.eq.s32.totalorder %s14, 0
    %p84 = por %p82, %p83
    %p85 = scmp.ne.s32.totalorder %s71, %s72
    %p86 = scmp.eq.s32.totalorder %s15, 47
    %p87 = por %p85, %p86
    %p89 = scmp.ne.s32.totalorder %s72, %s88
    %p90 = scmp.eq.s32.totalorder %s15, 0
    %p91 = por %p89, %p90
    %s93 = sadd.s32 %s92, 1
    %p96 = scmp.eq.s32.totalorder %s9, 47
    %p97 = scmp.ne.s32.totalorder %s92, %s94
    %p98 = scmp.eq.s32.totalorder %s9, 0
    %p99 = por %p97, %p98
    %p100 = scmp.ne.s32.totalorder %s92, %s94
    %p101 = scmp.eq.s32.totalorder %s14, 47
    %p102 = por %p100, %p101
    %p103 = scmp.ne.s32.totalorder %s94, %s95
    %p104 = scmp.eq.s32.totalorder %s14, 0
    %p105 = por %p103, %p104
    %p106 = scmp.ne.s32.totalorder %s94, %s95
    %p107 = scmp.eq.s32.totalorder %s15, 47
    %p108 = por %p106, %p107
    %p110 = scmp.ne.s32.totalorder %s95, %s109
    %p111 = scmp.eq.s32.totalorder %s15, 0
    %p112 = por %p110, %p111
    %s113 = ssub.s32 %s16, %s35
    %s114 = ssub.s32 %s17, %s31
    %s115 = sor.u32 %s113, %s114
    %p116 = scmp.eq.s32.totalorder %s115, 0
    %s118 = sadd.s32 %s117, 1
    %s119 = scalar_select %p116, %s117, %s118
    %p122 = pneg %p116
    %p123 = scmp.eq.s32.totalorder %s9, 47
    %p124 = por %p122, %p123
    %p125 = scmp.ne.s32.totalorder %s117, %s120
    %p126 = scmp.eq.s32.totalorder %s9, 0
    %p127 = por %p125, %p126
    %p128 = scmp.ne.s32.totalorder %s117, %s120
    %p129 = scmp.eq.s32.totalorder %s14, 47
    %p130 = por %p128, %p129
    %p131 = scmp.ne.s32.totalorder %s120, %s121
    %p132 = scmp.eq.s32.totalorder %s14, 0
    %p133 = por %p131, %p132
    %p134 = scmp.ne.s32.totalorder %s120, %s121
    %p135 = scmp.eq.s32.totalorder %s15, 47
    %p136 = por %p134, %p135
    %p138 = scmp.ne.s32.totalorder %s121, %s137
    %p139 = scmp.eq.s32.totalorder %s15, 0
    %p140 = por %p138, %p139
    %p141 = scmp.le.s32.totalorder 1, %s9
    %p142 = scmp.lt.s32.totalorder %s9, 49
    %p143 = pnand %p141, %p142
    %p144 = pneg %p143
    // Predicated region
    $region9: #{famenet_forward.26} parent=5 // pred_check
      _
    $region10: #{famenet_forward.26} parent=5 // pred_check_branch
      %146 = sbr.rel (%p143) target = $region12
    $region11: #{famenet_forward.26} parent=5 // pred_region
      %s147 = ssub.s32 %s9, 1
      // Predicated region
      $region13: #{famenet_forward.26} parent=11 // pred_check
        %p148 = pneg %p105
      $region14: #{famenet_forward.26} parent=11 // pred_check_branch
        %150 = sbr.rel (%p148) target = $region16
      $region15: #{famenet_forward.26} parent=11 // pred_region
        _
      $region16: #{famenet_forward.26} parent=11 // pred_fallthru
        _
    $region12: #{famenet_forward.26} parent=5 // pred_fallthru
      _
    %p151 = scmp.lt.s32.totalorder %s9, 48
    // Predicated region
    $region17: #{famenet_forward.26} parent=5 // pred_check
      %p152 = pneg %p151
    $region18: #{famenet_forward.26} parent=5 // pred_check_branch
      %154 = sbr.rel (%p152) target = $region20
    $region19: #{famenet_forward.26} parent=5 // pred_region
      // Predicated region
      $region21: #{famenet_forward.26} parent=19 // pred_check
        %p155 = pneg %p52
      $region22: #{famenet_forward.26} parent=19 // pred_check_branch
        %157 = sbr.rel (%p155) target = $region24
      $region23: #{famenet_forward.26} parent=19 // pred_region
        %s158 = sadd.s32 %s17, %s18
        %p159 = scmp.lt.s32.totalorder %s16, 1
        %s160 = scalar_select %p159, %s16, 1
        %p161 = scmp.lt.s32.totalorder %s158, 9
        %s162 = scalar_select %p161, %s158, 9
        %s163 = smul.addr %s162, 2
        %s164 = smul.addr %s160, 20
        %s165 = sadd.s32 %s163, %s164
        %s166 = smul.addr %s165, 8
        %s167 = scalar_lea.vmem %s0, %s166
        %s168 = sadd.s32 %s17, %s18
      $region24: #{famenet_forward.26} parent=19 // pred_fallthru
        _
      // Predicated region
      $region25: #{famenet_forward.26} parent=19 // pred_check
        %p169 = pneg %p78
      $region26: #{famenet_forward.26} parent=19 // pred_check_branch
        %171 = sbr.rel (%p169) target = $region28
      $region27: #{famenet_forward.26} parent=19 // pred_region
        %p172 = scmp.lt.s32.totalorder %s18, 2
        %s173 = scalar_select %p172, %s18, 2
        %s174 = smul.addr %s173, 24
        %s175 = smul.addr %s174, 8
        %s176 = scalar_lea.vmem %s1, %s175
      $region28: #{famenet_forward.26} parent=19 // pred_fallthru
        _
    $region20: #{famenet_forward.26} parent=5 // pred_fallthru
      _
    %p177 = scmp.le.s32.totalorder 1, %s9
    %p178 = scmp.lt.s32.totalorder %s9, 49
    %p179 = pnand %p177, %p178
    %p180 = pneg %p179
    // Predicated region
    $region29: #{famenet_forward.26} parent=5 // pred_check
      _
    $region30: #{famenet_forward.26} parent=5 // pred_check_branch
      %182 = sbr.rel (%p179) target = $region32
    $region31: #{famenet_forward.26} parent=5 // pred_region
      %s183 = ssub.s32 %s9, 1
      %s184 = sadd.s32 %s20, %s21
      %p185 = scmp.lt.s32.totalorder %s19, 1
      %s186 = scalar_select %p185, %s19, 1
      %p187 = scmp.lt.s32.totalorder %s184, 9
      %s188 = scalar_select %p187, %s184, 9
      %s189 = smul.addr %s188, 2
      %s190 = smul.addr %s186, 20
      %s191 = sadd.s32 %s189, %s190
      %s192 = smul.addr %s191, 8
      %s193 = scalar_lea.vmem %s0, %s192
      %p194 = pneg %p58
      %p195 = pneg %p55
      %p196 = scmp.lt.s32.totalorder %s21, 2
      %s197 = scalar_select %p196, %s21, 2
      %s198 = smul.addr %s197, 24
      %s199 = smul.addr %s198, 8
      %s200 = scalar_lea.vmem %s1, %s199
      %p201 = pneg %p84
      %p202 = pneg %p81
      %p203 = pneg %p105
      %p204 = pneg %p102
      %p205 = pneg %p133
      %p206 = pneg %p130
      %p207 = scmp.lt.s32.totalorder %s19, 1
      %s208 = scalar_select %p207, %s19, 1
      %p209 = scmp.lt.s32.totalorder %s20, 7
      %s210 = scalar_select %p209, %s20, 7
      %s211 = smul.addr %s208, 8
      %s212 = sadd.s32 %s210, %s211
      %s213 = smul.addr %s212, 8
      %s214 = scalar_lea.vmem %s3, %s213
      %s215 = sadd.s32 %s20, %s21
      %p216 = scmp.lt.s32.totalorder %s19, 1
      %s217 = scalar_select %p216, %s19, 1
      %p218 = scmp.lt.s32.totalorder %s215, 9
      %s219 = scalar_select %p218, %s215, 9
      %s220 = smul.addr %s219, 2
      %s221 = smul.addr %s217, 20
      %s222 = sadd.s32 %s220, %s221
      %s223 = smul.addr %s222, 8
      %s224 = scalar_lea.vmem %s0, %s223
      %s225 = sadd.s32 %s20, %s21
      %p226 = scmp.lt.s32.totalorder %s21, 2
      %s227 = scalar_select %p226, %s21, 2
      %s228 = smul.addr %s227, 24
      %s229 = smul.addr %s228, 8
      %s230 = scalar_lea.vmem %s1, %s229
      %p231 = scmp.lt.s32.totalorder %s19, 1
      %s232 = scalar_select %p231, %s19, 1
      %p233 = scmp.lt.s32.totalorder %s20, 7
      %s234 = scalar_select %p233, %s20, 7
      %s235 = smul.addr %s232, 8
      %s236 = sadd.s32 %s234, %s235
      %s237 = smul.addr %s236, 8
      %s238 = scalar_lea.vmem %s3, %s237
      %p239 = scmp.eq.s32.totalorder %s21, 0
      // Predicated region
      $region33: #{famenet_forward.26} parent=31 // pred_check
        %p240 = pneg %p239
      $region34: #{famenet_forward.26} parent=31 // pred_check_branch
        %242 = sbr.rel (%p240) target = $region36
      $region35: #{famenet_forward.26} parent=31 // pred_region
        %vm243 = vcmask 154624
        %244 = vst.msk [vmem:[#allocation2] sm:$0xff] %vm243, 0.0
      $region36: #{famenet_forward.26} parent=31 // pred_fallthru
        _
      %v245 = vld [vmem:[%s224] sm:$0xff]
      %v246 = vld [vmem:[%s224 + $0x8] sm:$0x3]
      %v247 = vld [vmem:[#allocation2] sm:$0xff]
      %v248 = vld [vmem:[%s230] sm:$0xff]
      %v249 = vld [vmem:[%s230 + $0x8] sm:$0xff]
      %v250 = vld [vmem:[%s230 + $0x10] sm:$0xff]
      %v251 = vld [vmem:[%s230 + $0x18] sm:$0xff]
      %v252 = vld [vmem:[%s230 + $0x20] sm:$0xff]
      %v253 = vld [vmem:[%s230 + $0x28] sm:$0xff]
      %v254 = vld [vmem:[%s230 + $0x30] sm:$0xff]
      %v255 = vld [vmem:[%s230 + $0x38] sm:$0xff]
      %vm256 = vcmask 523264
      %v258 = vsel %vm256, %v245, 0
      %260 = vmatprep.subr.mxu0 0.0
      %261 = vmatpush1.msra.mxu0 0.0
      %262 = vmatprep.subr.mxu0 0.0
      %263 = vmatpush1.msra.mxu0 0.0
      %264 = vmatprep.subr.mxu0 0.0
      %265 = vmatpush1.msra.mxu0 0.0
      %266 = vmatprep.subr.mxu0 0.0
      %267 = vmatpush1.msra.mxu0 0.0
      %268 = vmatprep.subr.mxu0 0.0
      %269 = vmatpush1.msra.mxu0 0.0
      %270 = vmatprep.subr.mxu0 0.0
      %271 = vmatpush1.msra.mxu0 0.0
      %272 = vmatprep.subr.mxu0 0.0
      %273 = vmatpush1.msra.mxu0 0.0
      %274 = vmatprep.subr.mxu0 0.0
      %275 = vmatpush1.msra.mxu0 0.0
      %276 = vmatprep.subr.mxu0 0.0
      %277 = vmatpush1.msra.mxu0 %v255
      %278 = vmatprep.subr.mxu0 0.0
      %279 = vmatpush1.msra.mxu0 %v254
      %280 = vmatprep.subr.mxu0 0.0
      %281 = vmatpush1.msra.mxu0 %v253
      %282 = vmatprep.subr.mxu0 0.0
      %283 = vmatpush1.msra.mxu0 %v252
      %284 = vmatprep.subr.mxu0 0.0
      %285 = vmatpush1.msra.mxu0 %v251
      %286 = vmatprep.subr.mxu0 0.0
      %287 = vmatpush1.msra.mxu0 %v250
      %288 = vmatprep.subr.mxu0 0.0
      %289 = vmatpush1.msra.mxu0 %v249
      %290 = vmatprep.subr.mxu0 0.0
      %291 = vmatpush1.msra.mxu0 %v248
      %292 = vmatprep.subr.mxu0 0.0
      %293 = vmatpush2.msra.mxu0 0.0
      %294 = vmatprep.subr.mxu0 0.0
      %295 = vmatpush2.msra.mxu0 0.0
      %296 = vmatprep.subr.mxu0 0.0
      %297 = vmatpush2.msra.mxu0 0.0
      %298 = vmatprep.subr.mxu0 0.0
      %299 = vmatpush2.msra.mxu0 0.0
      %300 = vmatprep.subr.mxu0 0.0
      %301 = vmatpush2.msra.mxu0 0.0
      %302 = vmatprep.subr.mxu0 0.0
      %303 = vmatpush2.msra.mxu0 0.0
      %304 = vmatprep.subr.mxu0 0.0
      %305 = vmatpush2.msra.mxu0 0.0
      %306 = vmatprep.subr.mxu0 0.0
      %307 = vmatpush2.msra.mxu0 0.0
      %308 = vmatprep.subr.mxu0 0.0
      %309 = vmatpush2.msra.mxu0 0.0
      %310 = vmatprep.subr.mxu0 0.0
      %311 = vmatpush2.msra.mxu0 0.0
      %312 = vmatprep.subr.mxu0 0.0
      %313 = vmatpush2.msra.mxu0 0.0
      %314 = vmatprep.subr.mxu0 0.0
      %315 = vmatpush2.msra.mxu0 0.0
      %316 = vmatprep.subr.mxu0 0.0
      %317 = vmatpush2.msra.mxu0 0.0
      %318 = vmatprep.subr.mxu0 0.0
      %319 = vmatpush2.msra.mxu0 0.0
      %320 = vmatprep.subr.mxu0 0.0
      %321 = vmatpush2.msra.mxu0 0.0
      %322 = vmatprep.subr.mxu0 0.0
      %323 = vmatpush2.msra.mxu0 0.0
      %324 = vmatprep.mubr.f32.mxu0 0.0
      %325 = vmatmul.mubr.f32.gmra.mxu0 %v258
      %v326 = vpop.f32.mrf.mxu0
      %v327 = vadd.f32 0.0, %v326
      %v328 = vpop.f32.mrf.mxu0
      %329 = vdwg.mxu0
      %v330 = vadd.f32 %v247, %v327
      %s331 = scalar_lea.vmem %s230, 64
      %v332 = vld [vmem:[%s331] sm:$0xff]
      %v333 = vld [vmem:[%s331 + $0x8] sm:$0xff]
      %v334 = vld [vmem:[%s331 + $0x10] sm:$0xff]
      %v335 = vld [vmem:[%s331 + $0x18] sm:$0xff]
      %v336 = vld [vmem:[%s331 + $0x20] sm:$0xff]
      %v337 = vld [vmem:[%s331 + $0x28] sm:$0xff]
      %v338 = vld [vmem:[%s331 + $0x30] sm:$0xff]
      %v339 = vld [vmem:[%s331 + $0x38] sm:$0xff]
      %vm341 = vcmask 1046528
      %v342 = vrot.slane %v245, 1
      %v343 = vrot.slane %v246, 1
      %v344 = vsel %vm341, %v342, %v343
      %v345 = vsel %vm256, %v344, 0
      %347 = vmatprep.subr.mxu0 0.0
      %348 = vmatpush1.msra.mxu0 0.0
      %349 = vmatprep.subr.mxu0 0.0
      %350 = vmatpush1.msra.mxu0 0.0
      %351 = vmatprep.subr.mxu0 0.0
      %352 = vmatpush1.msra.mxu0 0.0
      %353 = vmatprep.subr.mxu0 0.0
      %354 = vmatpush1.msra.mxu0 0.0
      %355 = vmatprep.subr.mxu0 0.0
      %356 = vmatpush1.msra.mxu0 0.0
      %357 = vmatprep.subr.mxu0 0.0
      %358 = vmatpush1.msra.mxu0 0.0
      %359 = vmatprep.subr.mxu0 0.0
      %360 = vmatpush1.msra.mxu0 0.0
      %361 = vmatprep.subr.mxu0 0.0
      %362 = vmatpush1.msra.mxu0 0.0
      %363 = vmatprep.subr.mxu0 0.0
      %364 = vmatpush1.msra.mxu0 %v339
      %365 = vmatprep.subr.mxu0 0.0
      %366 = vmatpush1.msra.mxu0 %v338
      %367 = vmatprep.subr.mxu0 0.0
      %368 = vmatpush1.msra.mxu0 %v337
      %369 = vmatprep.subr.mxu0 0.0
      %370 = vmatpush1.msra.mxu0 %v336
      %371 = vmatprep.subr.mxu0 0.0
      %372 = vmatpush1.msra.mxu0 %v335
      %373 = vmatprep.subr.mxu0 0.0
      %374 = vmatpush1.msra.mxu0 %v334
      %375 = vmatprep.subr.mxu0 0.0
      %376 = vmatpush1.msra.mxu0 %v333
      %377 = vmatprep.subr.mxu0 0.0
      %378 = vmatpush1.msra.mxu0 %v332
      %379 = vmatprep.subr.mxu0 0.0
      %380 = vmatpush2.msra.mxu0 0.0
      %381 = vmatprep.subr.mxu0 0.0
      %382 = vmatpush2.msra.mxu0 0.0
      %383 = vmatprep.subr.mxu0 0.0
      %384 = vmatpush2.msra.mxu0 0.0
      %385 = vmatprep.subr.mxu0 0.0
      %386 = vmatpush2.msra.mxu0 0.0
      %387 = vmatprep.subr.mxu0 0.0
      %388 = vmatpush2.msra.mxu0 0.0
      %389 = vmatprep.subr.mxu0 0.0
      %390 = vmatpush2.msra.mxu0 0.0
      %391 = vmatprep.subr.mxu0 0.0
      %392 = vmatpush2.msra.mxu0 0.0
      %393 = vmatprep.subr.mxu0 0.0
      %394 = vmatpush2.msra.mxu0 0.0
      %395 = vmatprep.subr.mxu0 0.0
      %396 = vmatpush2.msra.mxu0 0.0
      %397 = vmatprep.subr.mxu0 0.0
      %398 = vmatpush2.msra.mxu0 0.0
      %399 = vmatprep.subr.mxu0 0.0
      %400 = vmatpush2.msra.mxu0 0.0
      %401 = vmatprep.subr.mxu0 0.0
      %402 = vmatpush2.msra.mxu0 0.0
      %403 = vmatprep.subr.mxu0 0.0
      %404 = vmatpush2.msra.mxu0 0.0
      %405 = vmatprep.subr.mxu0 0.0
      %406 = vmatpush2.msra.mxu0 0.0
      %407 = vmatprep.subr.mxu0 0.0
      %408 = vmatpush2.msra.mxu0 0.0
      %409 = vmatprep.subr.mxu0 0.0
      %410 = vmatpush2.msra.mxu0 0.0
      %411 = vmatprep.mubr.f32.mxu0 0.0
      %412 = vmatmul.mubr.f32.gmra.mxu0 %v345
      %v413 = vpop.f32.mrf.mxu0
      %v414 = vadd.f32 0.0, %v413
      %v415 = vpop.f32.mrf.mxu0
      %416 = vdwg.mxu0
      %v417 = vadd.f32 %v330, %v414
      %s418 = scalar_lea.vmem %s230, 128
      %v419 = vld [vmem:[%s418] sm:$0xff]
      %v420 = vld [vmem:[%s418 + $0x8] sm:$0xff]
      %v421 = vld [vmem:[%s418 + $0x10] sm:$0xff]
      %v422 = vld [vmem:[%s418 + $0x18] sm:$0xff]
      %v423 = vld [vmem:[%s418 + $0x20] sm:$0xff]
      %v424 = vld [vmem:[%s418 + $0x28] sm:$0xff]
      %v425 = vld [vmem:[%s418 + $0x30] sm:$0xff]
      %v426 = vld [vmem:[%s418 + $0x38] sm:$0xff]
      %vm427 = vcmask 1045504
      %v428 = vrot.slane %v245, 2
      %v429 = vrot.slane %v246, 2
      %v430 = vsel %vm427, %v428, %v429
      %v431 = vsel %vm256, %v430, 0
      %433 = vmatprep.subr.mxu0 0.0
      %434 = vmatpush1.msra.mxu0 0.0
      %435 = vmatprep.subr.mxu0 0.0
      %436 = vmatpush1.msra.mxu0 0.0
      %437 = vmatprep.subr.mxu0 0.0
      %438 = vmatpush1.msra.mxu0 0.0
      %439 = vmatprep.subr.mxu0 0.0
      %440 = vmatpush1.msra.mxu0 0.0
      %441 = vmatprep.subr.mxu0 0.0
      %442 = vmatpush1.msra.mxu0 0.0
      %443 = vmatprep.subr.mxu0 0.0
      %444 = vmatpush1.msra.mxu0 0.0
      %445 = vmatprep.subr.mxu0 0.0
      %446 = vmatpush1.msra.mxu0 0.0
      %447 = vmatprep.subr.mxu0 0.0
      %448 = vmatpush1.msra.mxu0 0.0
      %449 = vmatprep.subr.mxu0 0.0
      %450 = vmatpush1.msra.mxu0 %v426
      %451 = vmatprep.subr.mxu0 0.0
      %452 = vmatpush1.msra.mxu0 %v425
      %453 = vmatprep.subr.mxu0 0.0
      %454 = vmatpush1.msra.mxu0 %v424
      %455 = vmatprep.subr.mxu0 0.0
      %456 = vmatpush1.msra.mxu0 %v423
      %457 = vmatprep.subr.mxu0 0.0
      %458 = vmatpush1.msra.mxu0 %v422
      %459 = vmatprep.subr.mxu0 0.0
      %460 = vmatpush1.msra.mxu0 %v421
      %461 = vmatprep.subr.mxu0 0.0
      %462 = vmatpush1.msra.mxu0 %v420
      %463 = vmatprep.subr.mxu0 0.0
      %464 = vmatpush1.msra.mxu0 %v419
      %465 = vmatprep.subr.mxu0 0.0
      %466 = vmatpush2.msra.mxu0 0.0
      %467 = vmatprep.subr.mxu0 0.0
      %468 = vmatpush2.msra.mxu0 0.0
      %469 = vmatprep.subr.mxu0 0.0
      %470 = vmatpush2.msra.mxu0 0.0
      %471 = vmatprep.subr.mxu0 0.0
      %472 = vmatpush2.msra.mxu0 0.0
      %473 = vmatprep.subr.mxu0 0.0
      %474 = vmatpush2.msra.mxu0 0.0
      %475 = vmatprep.subr.mxu0 0.0
      %476 = vmatpush2.msra.mxu0 0.0
      %477 = vmatprep.subr.mxu0 0.0
      %478 = vmatpush2.msra.mxu0 0.0
      %479 = vmatprep.subr.mxu0 0.0
      %480 = vmatpush2.msra.mxu0 0.0
      %481 = vmatprep.subr.mxu0 0.0
      %482 = vmatpush2.msra.mxu0 0.0
      %483 = vmatprep.subr.mxu0 0.0
      %484 = vmatpush2.msra.mxu0 0.0
      %485 = vmatprep.subr.mxu0 0.0
      %486 = vmatpush2.msra.mxu0 0.0
      %487 = vmatprep.subr.mxu0 0.0
      %488 = vmatpush2.msra.mxu0 0.0
      %489 = vmatprep.subr.mxu0 0.0
      %490 = vmatpush2.msra.mxu0 0.0
      %491 = vmatprep.subr.mxu0 0.0
      %492 = vmatpush2.msra.mxu0 0.0
      %493 = vmatprep.subr.mxu0 0.0
      %494 = vmatpush2.msra.mxu0 0.0
      %495 = vmatprep.subr.mxu0 0.0
      %496 = vmatpush2.msra.mxu0 0.0
      %497 = vmatprep.mubr.f32.mxu0 0.0
      %498 = vmatmul.mubr.f32.gmra.mxu0 %v431
      %v499 = vpop.f32.mrf.mxu0
      %v500 = vadd.f32 0.0, %v499
      %v501 = vpop.f32.mrf.mxu0
      %502 = vdwg.mxu0
      %v503 = vadd.f32 %v417, %v500
      %vm504 = vcmask 154624
      %505 = vst.msk [vmem:[#allocation2] sm:$0xff] %vm504, %v503
      %p506 = scmp.eq.s32.totalorder %s21, 2
      // Predicated region
      $region37: #{famenet_forward.26} parent=31 // pred_check
        %p507 = pneg %p506
      $region38: #{famenet_forward.26} parent=31 // pred_check_branch
        %509 = sbr.rel (%p507) target = $region40
      $region39: #{famenet_forward.26} parent=31 // pred_region
        %v510 = vld [vmem:[#allocation2] sm:$0xff]
        %v511 = vld [vmem:[%s2] sm:$0x1]
        %v513 = vlaneseq
        %v514 = vshrl.u32 %v513, 7
        %v515 = vsub.s32 0, %v514
        %v516 = vrot.slane %v511, %v515
        %v518 = vadd.f32 %v510, %v516
        %519 = vst.msk [vmem:[%s238] sm:$0xff] %vm504, %v518
      $region40: #{famenet_forward.26} parent=31 // pred_fallthru
        _
      %p520 = scmp.lt.s32.totalorder %s19, 1
      %s521 = scalar_select %p520, %s19, 1
      %p522 = scmp.lt.s32.totalorder %s20, 7
      %s523 = scalar_select %p522, %s20, 7
      %s524 = smul.addr %s521, 8
      %s525 = sadd.s32 %s523, %s524
      %s526 = smul.addr %s525, 8
      %s527 = scalar_lea.vmem %s3, %s526
      // Predicated region
      $region41: #{famenet_forward.26} parent=31 // pred_check
        %p528 = pneg %p130
      $region42: #{famenet_forward.26} parent=31 // pred_check_branch
        %530 = sbr.rel (%p528) target = $region44
      $region43: #{famenet_forward.26} parent=31 // pred_region
        _
      $region44: #{famenet_forward.26} parent=31 // pred_fallthru
        _
    $region32: #{famenet_forward.26} parent=5 // pred_fallthru
      _
    %p531 = scmp.le.s32.totalorder 2, %s9
    // Predicated region
    $region45: #{famenet_forward.26} parent=5 // pred_check
      %p532 = pneg %p531
    $region46: #{famenet_forward.26} parent=5 // pred_check_branch
      %534 = sbr.rel (%p532) target = $region48
    $region47: #{famenet_forward.26} parent=5 // pred_region
      %s535 = ssub.s32 %s9, 2
      // Predicated region
      $region49: #{famenet_forward.26} parent=47 // pred_check
        %p536 = pneg %p136
      $region50: #{famenet_forward.26} parent=47 // pred_check_branch
        %538 = sbr.rel (%p536) target = $region52
      $region51: #{famenet_forward.26} parent=47 // pred_region
        %p539 = scmp.lt.s32.totalorder %s22, 1
        %s540 = scalar_select %p539, %s22, 1
        %p541 = scmp.lt.s32.totalorder %s23, 7
        %s542 = scalar_select %p541, %s23, 7
        %s543 = smul.addr %s540, 8
        %s544 = sadd.s32 %s542, %s543
        %s545 = smul.addr %s544, 8
        %s546 = scalar_lea.vmem %s3, %s545
      $region52: #{famenet_forward.26} parent=47 // pred_fallthru
        _
    $region48: #{famenet_forward.26} parent=5 // pred_fallthru
      _
  $region6: #{famenet_forward.26} parent=0 // loop_footer
    %s13 = sadd.s32 1, %s9
  $region7: #{famenet_forward.26} parent=0 // loop_footer_branch
    %8 = sbr.rel target = $region3
  $region8: #{famenet_forward.26} parent=0 // loop_exit
    _

// kernel: famenet_forward.27
$region0: #{famenet_forward.27}
  #allocation0 [shape = 'u32[]', space=smem, size = 0x4, offset = 0x4, fixed_abs, tag = 'smem constant byte address 0x4 - core index']
  #allocation1 [shape = 'u32[144,128]{1,0:T(1,128)}', space=vmem, size = 0x12000, scoped, tag = 'internal scratch']
  %s0 = inlined_call_operand.vmem [shape: f32[8,64], index: 0, kind: input, shape index: {}]
  %s1 = inlined_call_operand.vmem [shape: f32[64,50], index: 1, kind: input, shape index: {}]
  %s2 = inlined_call_operand.vmem [shape: f32[1,50], index: 2, kind: input, shape index: {}]
  %s3 = inlined_call_operand.vmem [shape: f32[8,50], index: 3, kind: output, shape index: {}]
  %s4 = sld [smem:[#allocation0]]
  $region22: #{famenet_forward.27} parent=0
    _
  %s6 = ssub.s32 1, %s4
  %s7 = scalar_select 0, %s6, %s4
  // Predicated region
  $region2: #{famenet_forward.27} parent=0 // pred_check
    _
  $region3: #{famenet_forward.27} parent=0 // pred_check_branch
    %9 = sbr.rel (0) target = $region5
  $region4: #{famenet_forward.27} parent=0 // pred_region
    _
  $region5: #{famenet_forward.27} parent=0 // pred_fallthru
    _
  // Predicated region
  $region6: #{famenet_forward.27} parent=0 // pred_check
    _
  $region7: #{famenet_forward.27} parent=0 // pred_check_branch
    %11 = sbr.rel (0) target = $region9
  $region8: #{famenet_forward.27} parent=0 // pred_region
    _
  $region9: #{famenet_forward.27} parent=0 // pred_fallthru
    _
  // Predicated region
  $region10: #{famenet_forward.27} parent=0 // pred_check
    _
  $region11: #{famenet_forward.27} parent=0 // pred_check_branch
    %13 = sbr.rel (0) target = $region13
  $region12: #{famenet_forward.27} parent=0 // pred_region
    _
  $region13: #{famenet_forward.27} parent=0 // pred_fallthru
    _
  %v14 = vld [vmem:[%s0] sm:$0xff]
  %v15 = vld [vmem:[%s1] sm:$0xff]
  %v16 = vld [vmem:[%s1 + $0x8] sm:$0xff]
  %v17 = vld [vmem:[%s1 + $0x10] sm:$0xff]
  %v18 = vld [vmem:[%s1 + $0x18] sm:$0xff]
  %v19 = vld [vmem:[%s1 + $0x20] sm:$0xff]
  %v20 = vld [vmem:[%s1 + $0x28] sm:$0xff]
  %v21 = vld [vmem:[%s1 + $0x30] sm:$0xff]
  %v22 = vld [vmem:[%s1 + $0x38] sm:$0xff]
  %v23 = vld [vmem:[%s2] sm:$0x1]
  %v25 = vlaneseq
  %v26 = vshrl.u32 %v25, 7
  %v27 = vsub.s32 0, %v26
  %v28 = vrot.slane %v23, %v27
  %vm30 = vcmask 523264
  %v32 = vsel %vm30, %v14, 0
  %34 = vmatprep.subr.mxu0 0.0
  %35 = vmatpush1.msra.mxu0 0.0
  %36 = vmatprep.subr.mxu0 0.0
  %37 = vmatpush1.msra.mxu0 0.0
  %38 = vmatprep.subr.mxu0 0.0
  %39 = vmatpush1.msra.mxu0 0.0
  %40 = vmatprep.subr.mxu0 0.0
  %41 = vmatpush1.msra.mxu0 0.0
  %42 = vmatprep.subr.mxu0 0.0
  %43 = vmatpush1.msra.mxu0 0.0
  %44 = vmatprep.subr.mxu0 0.0
  %45 = vmatpush1.msra.mxu0 0.0
  %46 = vmatprep.subr.mxu0 0.0
  %47 = vmatpush1.msra.mxu0 0.0
  %48 = vmatprep.subr.mxu0 0.0
  %49 = vmatpush1.msra.mxu0 0.0
  %50 = vmatprep.subr.mxu0 0.0
  %51 = vmatpush1.msra.mxu0 %v22
  %52 = vmatprep.subr.mxu0 0.0
  %53 = vmatpush1.msra.mxu0 %v21
  %54 = vmatprep.subr.mxu0 0.0
  %55 = vmatpush1.msra.mxu0 %v20
  %56 = vmatprep.subr.mxu0 0.0
  %57 = vmatpush1.msra.mxu0 %v19
  %58 = vmatprep.subr.mxu0 0.0
  %59 = vmatpush1.msra.mxu0 %v18
  %60 = vmatprep.subr.mxu0 0.0
  %61 = vmatpush1.msra.mxu0 %v17
  %62 = vmatprep.subr.mxu0 0.0
  %63 = vmatpush1.msra.mxu0 %v16
  %64 = vmatprep.subr.mxu0 0.0
  %65 = vmatpush1.msra.mxu0 %v15
  %66 = vmatprep.subr.mxu0 0.0
  %67 = vmatpush2.msra.mxu0 0.0
  %68 = vmatprep.subr.mxu0 0.0
  %69 = vmatpush2.msra.mxu0 0.0
  %70 = vmatprep.subr.mxu0 0.0
  %71 = vmatpush2.msra.mxu0 0.0
  %72 = vmatprep.subr.mxu0 0.0
  %73 = vmatpush2.msra.mxu0 0.0
  %74 = vmatprep.subr.mxu0 0.0
  %75 = vmatpush2.msra.mxu0 0.0
  %76 = vmatprep.subr.mxu0 0.0
  %77 = vmatpush2.msra.mxu0 0.0
  %78 = vmatprep.subr.mxu0 0.0
  %79 = vmatpush2.msra.mxu0 0.0
  %80 = vmatprep.subr.mxu0 0.0
  %81 = vmatpush2.msra.mxu0 0.0
  %82 = vmatprep.subr.mxu0 0.0
  %83 = vmatpush2.msra.mxu0 0.0
  %84 = vmatprep.subr.mxu0 0.0
  %85 = vmatpush2.msra.mxu0 0.0
  %86 = vmatprep.subr.mxu0 0.0
  %87 = vmatpush2.msra.mxu0 0.0
  %88 = vmatprep.subr.mxu0 0.0
  %89 = vmatpush2.msra.mxu0 0.0
  %90 = vmatprep.subr.mxu0 0.0
  %91 = vmatpush2.msra.mxu0 0.0
  %92 = vmatprep.subr.mxu0 0.0
  %93 = vmatpush2.msra.mxu0 0.0
  %94 = vmatprep.subr.mxu0 0.0
  %95 = vmatpush2.msra.mxu0 0.0
  %96 = vmatprep.subr.mxu0 0.0
  %97 = vmatpush2.msra.mxu0 0.0
  %98 = vmatprep.mubr.f32.mxu0 0.0
  %99 = vmatmul.mubr.f32.gmra.mxu0 %v32
  %v100 = vpop.f32.mrf.mxu0
  %v101 = vadd.f32 %v28, %v100
  %v102 = vpop.f32.mrf.mxu0
  %103 = vdwg.mxu0
  %vm104 = vcmask 408576
  %105 = vst.msk [vmem:[%s3] sm:$0xff] %vm104, %v101
  // Predicated region
  $region14: #{famenet_forward.27} parent=0 // pred_check
    _
  $region15: #{famenet_forward.27} parent=0 // pred_check_branch
    %107 = sbr.rel (0) target = $region17
  $region16: #{famenet_forward.27} parent=0 // pred_region
    _
  $region17: #{famenet_forward.27} parent=0 // pred_fallthru
    _
  // Predicated region
  $region18: #{famenet_forward.27} parent=0 // pred_check
    _
  $region19: #{famenet_forward.27} parent=0 // pred_check_branch
    %109 = sbr.rel (0) target = $region21
  $region20: #{famenet_forward.27} parent=0 // pred_region
    _
  $region21: #{famenet_forward.27} parent=0 // pred_fallthru
    _

</llo_original>
